<compile_context>
chip_gen: v7x
topology: tpu7x:2x2x1
jax: 0.10.0
libtpu: 0.0.40
codegen_flags: <defaults>
</compile_context>

<pallas_src>
import functools

import jax
import jax.numpy as jnp
import numpy as np
from jax import lax
from jax.experimental import pallas as pl
from jax.experimental.pallas import tpu as pltpu


def _gated_conv_kernel(x_ref, top_ref, bot_ref, w_ref, b_ref, o_ref):
    # x_ref  : (Cin, TH, W)   current row strip                      (VMEM)
    # top_ref: (Cin, HB, W)   rows above the strip; last row = halo  (VMEM)
    # bot_ref: (Cin, HB, W)   rows below the strip; first row = halo (VMEM)
    # w_ref  : (Cout+1, Cin*9) fused feature+mask weights, flat over (ci,kh,kw) (SMEM)
    # b_ref  : (Cout+1,)       fused bias                                       (SMEM)
    # o_ref  : (Cout, TH, W)
    cin, th, w = x_ref.shape
    cout = o_ref.shape[0]
    hb = top_ref.shape[1]
    f32 = jnp.float32

    s = pl.program_id(1)
    n_s = pl.num_programs(1)

    # Halo rows falling outside the image are zeroed -> this *is* the conv's
    # zero padding along H.  Zero padding along W is handled by the lane masks.
    top_scale = (s > 0).astype(f32)
    bot_scale = (s < n_s - 1).astype(f32)

    row = lax.broadcasted_iota(jnp.int32, (th, w), 0)
    lane = lax.broadcasted_iota(jnp.int32, (th, w), 1)
    is_top = row == 0
    is_bot = row == th - 1
    not_left = lane >= 1
    not_right = lane <= w - 2

    # One dense (TH, W) f32 accumulator per output channel (+1 for the mask),
    # initialised with the bias so no epilogue add is needed.
    acc = [jnp.full((th, w), b_ref[co], f32) for co in range(cout + 1)]

    for ci in range(cin):
        xc = x_ref[ci].astype(f32)                                        # (TH, W)
        halo_top = top_ref[ci, hb - 1:hb, :].astype(f32) * top_scale      # (1, W)
        halo_bot = bot_ref[ci, 0:1, :].astype(f32) * bot_scale            # (1, W)

        # kh shifts: sublane rolls, with the strip-boundary row patched from the halo.
        up = jnp.where(is_top, halo_top, pltpu.roll(xc, 1, 0))            # x[t-1, w]
        down = jnp.where(is_bot, halo_bot, pltpu.roll(xc, th - 1, 0))     # x[t+1, w]

        base = ci * 9
        for kh, sl in enumerate((up, xc, down)):                          # kh = 0, 1, 2
            # kw shifts: lane rolls + border masking (zero padding along W).
            for kw in range(3):
                if kw == 0:
                    tap = jnp.where(not_left, pltpu.roll(sl, 1, 1), 0.0)      # x[.., w-1]
                elif kw == 1:
                    tap = sl                                                  # x[.., w  ]
                else:
                    tap = jnp.where(not_right, pltpu.roll(sl, w - 1, 1), 0.0)  # x[.., w+1]
                k = base + kh * 3 + kw
                # VPU broadcast-FMA over full-width slabs; tap consumed
                # immediately so it never has to stay live.
                for co in range(cout + 1):
                    acc[co] = acc[co] + tap * w_ref[co, k]

    mask = jax.nn.sigmoid(acc[cout])                                       # mask channel
    for co in range(cout):
        o_ref[co] = (acc[co] * mask).astype(o_ref.dtype)


def _pick_tile_h(h, w, cin, cout, itemsize, budget_bytes=12 * 1024 * 1024):
    """Largest strip height (multiple of 8 that divides H) fitting the VMEM budget."""
    if h % 8 != 0:
        return h  # single strip; halo rows are never used
    best = None
    for th in range(8, h + 1, 8):
        if h % th:
            continue
        # double-buffered strip I/O + halo blocks + live f32 slabs
        # (~2 taps in flight, Cout+1 accumulators, slack)
        io = 2 * (cin + cout) * th * w * itemsize + 4 * cin * 8 * w * itemsize
        live = (2 + cout + 1 + 6) * th * w * 4
        if io + live <= budget_bytes:
            best = th
    return best if best is not None else 8


@functools.partial(jax.jit, static_argnames=("tile_h", "vmem_limit_bytes"))
def gated_conv(x, wf, bf, wm, bm, *, tile_h=None, vmem_limit_bytes=48 * 1024 * 1024):
    """GatedConv forward (3x3, stride 1, pad 1).

    x: (N, Cin, H, W) NCHW.  wf: (Cout, Cin, 3, 3), wm: (1, Cin, 3, 3) (PyTorch OIHW).
    Returns (N, Cout, H, W).
    """
    n, cin, h, wd = x.shape
    cout = wf.shape[0]
    assert wf.shape == (cout, cin, 3, 3) and wm.shape == (1, cin, 3, 3)

    th = tile_h if tile_h is not None else _pick_tile_h(h, wd, cin, cout, x.dtype.itemsize)
    assert h % th == 0 and (th == h or th % 8 == 0), \
        "strip height must divide H and be a multiple of 8"
    n_strips = h // th

    # Halo blocks: 8 rows adjacent to the strip (their boundary row is the halo row).
    hb = 8 if (h % 8 == 0 and th % 8 == 0) else h
    if hb == h:                       # single-strip fallback (halo rows zeroed anyway)
        top_map = lambda b, s: (b, 0, 0, 0)
        bot_map = lambda b, s: (b, 0, 0, 0)
    else:
        stride = th // hb
        nhb = h // hb
        top_map = lambda b, s: (b, 0, jnp.maximum(s * stride - 1, 0), 0)
        bot_map = lambda b, s: (b, 0, jnp.minimum((s + 1) * stride, nhb - 1), 0)

    # Fuse the mask conv as one extra output channel; flatten taps over (ci, kh, kw).
    wcat = jnp.concatenate([wf, wm], axis=0).reshape(cout + 1, cin * 9).astype(jnp.float32)
    bcat = jnp.concatenate([bf, bm], axis=0).astype(jnp.float32)

    flops = 2 * n * h * wd * 9 * cin * (cout + 1)
    bytes_accessed = (n * h * wd * (cin + cout)) * x.dtype.itemsize + (wcat.size + bcat.size) * 4

    return pl.pallas_call(
        _gated_conv_kernel,
        out_shape=jax.ShapeDtypeStruct((n, cout, h, wd), x.dtype),
        grid=(n, n_strips),
        in_specs=[
            pl.BlockSpec((None, cin, th, wd), lambda b, s: (b, 0, s, 0)),
            pl.BlockSpec((None, cin, hb, wd), top_map),
            pl.BlockSpec((None, cin, hb, wd), bot_map),
            pl.BlockSpec(memory_space=pltpu.MemorySpace.SMEM),
            pl.BlockSpec(memory_space=pltpu.MemorySpace.SMEM),
        ],
        out_specs=pl.BlockSpec((None, cout, th, wd), lambda b, s: (b, 0, s, 0)),
        compiler_params=pltpu.CompilerParams(
            dimension_semantics=("parallel", "parallel"),
            vmem_limit_bytes=vmem_limit_bytes),
        cost_estimate=pl.CostEstimate(
            flops=flops, transcendentals=n * h * wd, bytes_accessed=bytes_accessed),
    )(x, x, x, wcat, bcat)


def init_gated_conv_params(key, in_cha, out_cha, kernel=3):
    """PyTorch-style Conv2d init, OIHW layout (deterministic for a given key)."""
    kf_w, kf_b, km_w, km_b = jax.random.split(key, 4)
    bound = 1.0 / np.sqrt(in_cha * kernel * kernel)
    wf = jax.random.uniform(kf_w, (out_cha, in_cha, kernel, kernel), jnp.float32, -bound, bound)
    bf = jax.random.uniform(kf_b, (out_cha,), jnp.float32, -bound, bound)
    wm = jax.random.uniform(km_w, (1, in_cha, kernel, kernel), jnp.float32, -bound, bound)
    bm = jax.random.uniform(km_b, (1,), jnp.float32, -bound, bound)
    return wf, bf, wm, bm


# ---------------- reference (plain JAX, for correctness check) ----------------
def _ref_gated_conv(x, wf, bf, wm, bm):
    dn = ("NCHW", "OIHW", "NCHW")
    feat = lax.conv_general_dilated(x, wf, (1, 1), "SAME", dimension_numbers=dn)
    feat = feat + bf.reshape(1, -1, 1, 1)
    mask = lax.conv_general_dilated(x, wm, (1, 1), "SAME", dimension_numbers=dn)
    mask = jax.nn.sigmoid(mask + bm.reshape(1, 1, 1, 1))
    return feat * mask


if __name__ == "__main__":
    key = jax.random.PRNGKey(0)
    k_x, k_p = jax.random.split(key)

    N, IN_CHA, OUT_CHA, HW = 2, 4, 8, 16
    x = jax.random.normal(k_x, (N, IN_CHA, HW, HW), jnp.float32)          # NCHW
    wf, bf, wm, bm = init_gated_conv_params(k_p, IN_CHA, OUT_CHA)

    ref = jax.block_until_ready(_ref_gated_conv(x, wf, bf, wm, bm))

    # (1) auto strip height (single strip), (2) forced 2-strip tiling so the
    # halo / strip-boundary path is exercised and checked as well.
    out_a = jax.block_until_ready(gated_conv(x, wf, bf, wm, bm))
    out_b = jax.block_until_ready(gated_conv(x, wf, bf, wm, bm, tile_h=8))

    np.testing.assert_allclose(np.asarray(out_a), np.asarray(ref), rtol=1e-4, atol=1e-4)
    np.testing.assert_allclose(np.asarray(out_b), np.asarray(ref), rtol=1e-4, atol=1e-4)

    print("KERNEL_OK")
</pallas_src>

<mosaic_0001>
module attributes {stable_mosaic.version = 11 : i64} {
  func.func @_gated_conv_kernel(%arg0: i32, %arg1: i32, %arg2: memref<1x4x16x16xf32, #tpu.memory_space<vmem>>, %arg3: memref<1x4x8x16xf32, #tpu.memory_space<vmem>>, %arg4: memref<1x4x8x16xf32, #tpu.memory_space<vmem>>, %arg5: memref<9x36xf32, #tpu.memory_space<smem>>, %arg6: memref<9xf32, #tpu.memory_space<smem>>, %arg7: memref<1x8x16x16xf32, #tpu.memory_space<vmem>>) attributes {dimension_semantics = [#tpu.dimension_semantics<parallel>, #tpu.dimension_semantics<parallel>], iteration_bounds = array<i64: 2, 1>, scalar_prefetch = 0 : i64, scratch_operands = 0 : i64, tpu.core_type = #tpu.core_type<tc>, window_params = [{transform_indices = @transform_0, window_bounds = array<i64: 1, 4, 16, 16>}, {transform_indices = @transform_1, window_bounds = array<i64: 1, 4, 8, 16>}, {transform_indices = @transform_2, window_bounds = array<i64: 1, 4, 8, 16>}, {transform_indices = @transform_3, window_bounds = array<i64: 9, 36>}, {transform_indices = @transform_4, window_bounds = array<i64: 9>}, {transform_indices = @transform_5, window_bounds = array<i64: 1, 8, 16, 16>}]} {
    %c0_i32 = arith.constant 0 : i32
    %0 = arith.cmpi sgt, %arg1, %c0_i32 : i32
    %1 = arith.extui %0 : i1 to i32
    %2 = arith.sitofp %1 : i32 to f32
    %c0_i32_0 = arith.constant 0 : i32
    %3 = arith.cmpi slt, %arg1, %c0_i32_0 : i32
    %4 = arith.extui %3 : i1 to i32
    %5 = arith.sitofp %4 : i32 to f32
    %6 = tpu.iota {dimensions = array<i32: 0>} : vector<16x16xi32>
    %7 = tpu.iota {dimensions = array<i32: 1>} : vector<16x16xi32>
    %c0_i32_1 = arith.constant 0 : i32
    %8 = vector.broadcast %c0_i32_1 : i32 to vector<16x16xi32>
    %9 = arith.cmpi eq, %6, %8 : vector<16x16xi32>
    %c15_i32 = arith.constant 15 : i32
    %10 = vector.broadcast %c15_i32 : i32 to vector<16x16xi32>
    %11 = arith.cmpi eq, %6, %10 : vector<16x16xi32>
    %c1_i32 = arith.constant 1 : i32
    %12 = vector.broadcast %c1_i32 : i32 to vector<16x16xi32>
    %13 = arith.cmpi sge, %7, %12 : vector<16x16xi32>
    %c14_i32 = arith.constant 14 : i32
    %14 = vector.broadcast %c14_i32 : i32 to vector<16x16xi32>
    %15 = arith.cmpi sle, %7, %14 : vector<16x16xi32>
    %c0 = arith.constant 0 : index
    %16 = memref.load %arg6[%c0] : memref<9xf32, #tpu.memory_space<smem>>
    %17 = vector.broadcast %16 : f32 to vector<16x16xf32>
    %c1 = arith.constant 1 : index
    %18 = memref.load %arg6[%c1] : memref<9xf32, #tpu.memory_space<smem>>
    %19 = vector.broadcast %18 : f32 to vector<16x16xf32>
    %c2 = arith.constant 2 : index
    %20 = memref.load %arg6[%c2] : memref<9xf32, #tpu.memory_space<smem>>
    %21 = vector.broadcast %20 : f32 to vector<16x16xf32>
    %c3 = arith.constant 3 : index
    %22 = memref.load %arg6[%c3] : memref<9xf32, #tpu.memory_space<smem>>
    %23 = vector.broadcast %22 : f32 to vector<16x16xf32>
    %c4 = arith.constant 4 : index
    %24 = memref.load %arg6[%c4] : memref<9xf32, #tpu.memory_space<smem>>
    %25 = vector.broadcast %24 : f32 to vector<16x16xf32>
    %c5 = arith.constant 5 : index
    %26 = memref.load %arg6[%c5] : memref<9xf32, #tpu.memory_space<smem>>
    %27 = vector.broadcast %26 : f32 to vector<16x16xf32>
    %c6 = arith.constant 6 : index
    %28 = memref.load %arg6[%c6] : memref<9xf32, #tpu.memory_space<smem>>
    %29 = vector.broadcast %28 : f32 to vector<16x16xf32>
    %c7 = arith.constant 7 : index
    %30 = memref.load %arg6[%c7] : memref<9xf32, #tpu.memory_space<smem>>
    %31 = vector.broadcast %30 : f32 to vector<16x16xf32>
    %c8 = arith.constant 8 : index
    %32 = memref.load %arg6[%c8] : memref<9xf32, #tpu.memory_space<smem>>
    %33 = vector.broadcast %32 : f32 to vector<16x16xf32>
    %c0_2 = arith.constant 0 : index
    %c0_3 = arith.constant 0 : index
    %c0_4 = arith.constant 0 : index
    %c0_5 = arith.constant 0 : index
    %34 = vector.load %arg2[%c0_2, %c0_3, %c0_4, %c0_5] : memref<1x4x16x16xf32, #tpu.memory_space<vmem>>, vector<1x1x16x16xf32>
    %35 = vector.shape_cast %34 : vector<1x1x16x16xf32> to vector<16x16xf32>
    %c0_6 = arith.constant 0 : index
    %c0_7 = arith.constant 0 : index
    %c7_8 = arith.constant 7 : index
    %c0_9 = arith.constant 0 : index
    %36 = vector.load %arg3[%c0_6, %c0_7, %c7_8, %c0_9] : memref<1x4x8x16xf32, #tpu.memory_space<vmem>>, vector<1x1x1x16xf32>
    %37 = vector.shape_cast %36 : vector<1x1x1x16xf32> to vector<1x16xf32>
    %38 = vector.broadcast %2 : f32 to vector<1x16xf32>
    %39 = arith.mulf %37, %38 : vector<1x16xf32>
    %c0_10 = arith.constant 0 : index
    %c0_11 = arith.constant 0 : index
    %c0_12 = arith.constant 0 : index
    %c0_13 = arith.constant 0 : index
    %40 = vector.load %arg4[%c0_10, %c0_11, %c0_12, %c0_13] : memref<1x4x8x16xf32, #tpu.memory_space<vmem>>, vector<1x1x1x16xf32>
    %41 = vector.shape_cast %40 : vector<1x1x1x16xf32> to vector<1x16xf32>
    %42 = vector.broadcast %5 : f32 to vector<1x16xf32>
    %43 = arith.mulf %41, %42 : vector<1x16xf32>
    %c1_i32_14 = arith.constant 1 : i32
    %44 = tpu.dynamic_rotate %35 by %c1_i32_14 dim 0 : vector<16x16xf32>, i32 -> vector<16x16xf32>
    %45 = vector.shape_cast %39 : vector<1x16xf32> to vector<1x16xf32>
    %46 = vector.broadcast %45 : vector<1x16xf32> to vector<16x16xf32>
    %47 = arith.select %9, %46, %44 : vector<16x16xi1>, vector<16x16xf32>
    %c15_i32_15 = arith.constant 15 : i32
    %48 = tpu.dynamic_rotate %35 by %c15_i32_15 dim 0 : vector<16x16xf32>, i32 -> vector<16x16xf32>
    %49 = vector.shape_cast %43 : vector<1x16xf32> to vector<1x16xf32>
    %50 = vector.broadcast %49 : vector<1x16xf32> to vector<16x16xf32>
    %51 = arith.select %11, %50, %48 : vector<16x16xi1>, vector<16x16xf32>
    %c1_i32_16 = arith.constant 1 : i32
    %52 = tpu.dynamic_rotate %47 by %c1_i32_16 dim 1 : vector<16x16xf32>, i32 -> vector<16x16xf32>
    %cst = arith.constant 0.000000e+00 : f32
    %53 = vector.broadcast %cst : f32 to vector<16x16xf32>
    %54 = arith.select %13, %52, %53 : vector<16x16xi1>, vector<16x16xf32>
    %c0_17 = arith.constant 0 : index
    %c0_18 = arith.constant 0 : index
    %55 = memref.load %arg5[%c0_17, %c0_18] : memref<9x36xf32, #tpu.memory_space<smem>>
    %56 = vector.broadcast %55 : f32 to vector<16x16xf32>
    %57 = arith.mulf %54, %56 : vector<16x16xf32>
    %58 = arith.addf %17, %57 : vector<16x16xf32>
    %c1_19 = arith.constant 1 : index
    %c0_20 = arith.constant 0 : index
    %59 = memref.load %arg5[%c1_19, %c0_20] : memref<9x36xf32, #tpu.memory_space<smem>>
    %60 = vector.broadcast %59 : f32 to vector<16x16xf32>
    %61 = arith.mulf %54, %60 : vector<16x16xf32>
    %62 = arith.addf %19, %61 : vector<16x16xf32>
    %c2_21 = arith.constant 2 : index
    %c0_22 = arith.constant 0 : index
    %63 = memref.load %arg5[%c2_21, %c0_22] : memref<9x36xf32, #tpu.memory_space<smem>>
    %64 = vector.broadcast %63 : f32 to vector<16x16xf32>
    %65 = arith.mulf %54, %64 : vector<16x16xf32>
    %66 = arith.addf %21, %65 : vector<16x16xf32>
    %c3_23 = arith.constant 3 : index
    %c0_24 = arith.constant 0 : index
    %67 = memref.load %arg5[%c3_23, %c0_24] : memref<9x36xf32, #tpu.memory_space<smem>>
    %68 = vector.broadcast %67 : f32 to vector<16x16xf32>
    %69 = arith.mulf %54, %68 : vector<16x16xf32>
    %70 = arith.addf %23, %69 : vector<16x16xf32>
    %c4_25 = arith.constant 4 : index
    %c0_26 = arith.constant 0 : index
    %71 = memref.load %arg5[%c4_25, %c0_26] : memref<9x36xf32, #tpu.memory_space<smem>>
    %72 = vector.broadcast %71 : f32 to vector<16x16xf32>
    %73 = arith.mulf %54, %72 : vector<16x16xf32>
    %74 = arith.addf %25, %73 : vector<16x16xf32>
    %c5_27 = arith.constant 5 : index
    %c0_28 = arith.constant 0 : index
    %75 = memref.load %arg5[%c5_27, %c0_28] : memref<9x36xf32, #tpu.memory_space<smem>>
    %76 = vector.broadcast %75 : f32 to vector<16x16xf32>
    %77 = arith.mulf %54, %76 : vector<16x16xf32>
    %78 = arith.addf %27, %77 : vector<16x16xf32>
    %c6_29 = arith.constant 6 : index
    %c0_30 = arith.constant 0 : index
    %79 = memref.load %arg5[%c6_29, %c0_30] : memref<9x36xf32, #tpu.memory_space<smem>>
    %80 = vector.broadcast %79 : f32 to vector<16x16xf32>
    %81 = arith.mulf %54, %80 : vector<16x16xf32>
    %82 = arith.addf %29, %81 : vector<16x16xf32>
    %c7_31 = arith.constant 7 : index
    %c0_32 = arith.constant 0 : index
    %83 = memref.load %arg5[%c7_31, %c0_32] : memref<9x36xf32, #tpu.memory_space<smem>>
    %84 = vector.broadcast %83 : f32 to vector<16x16xf32>
    %85 = arith.mulf %54, %84 : vector<16x16xf32>
    %86 = arith.addf %31, %85 : vector<16x16xf32>
    %c8_33 = arith.constant 8 : index
    %c0_34 = arith.constant 0 : index
    %87 = memref.load %arg5[%c8_33, %c0_34] : memref<9x36xf32, #tpu.memory_space<smem>>
    %88 = vector.broadcast %87 : f32 to vector<16x16xf32>
    %89 = arith.mulf %54, %88 : vector<16x16xf32>
    %90 = arith.addf %33, %89 : vector<16x16xf32>
    %c0_35 = arith.constant 0 : index
    %c1_36 = arith.constant 1 : index
    %91 = memref.load %arg5[%c0_35, %c1_36] : memref<9x36xf32, #tpu.memory_space<smem>>
    %92 = vector.broadcast %91 : f32 to vector<16x16xf32>
    %93 = arith.mulf %47, %92 : vector<16x16xf32>
    %94 = arith.addf %58, %93 : vector<16x16xf32>
    %c1_37 = arith.constant 1 : index
    %c1_38 = arith.constant 1 : index
    %95 = memref.load %arg5[%c1_37, %c1_38] : memref<9x36xf32, #tpu.memory_space<smem>>
    %96 = vector.broadcast %95 : f32 to vector<16x16xf32>
    %97 = arith.mulf %47, %96 : vector<16x16xf32>
    %98 = arith.addf %62, %97 : vector<16x16xf32>
    %c2_39 = arith.constant 2 : index
    %c1_40 = arith.constant 1 : index
    %99 = memref.load %arg5[%c2_39, %c1_40] : memref<9x36xf32, #tpu.memory_space<smem>>
    %100 = vector.broadcast %99 : f32 to vector<16x16xf32>
    %101 = arith.mulf %47, %100 : vector<16x16xf32>
    %102 = arith.addf %66, %101 : vector<16x16xf32>
    %c3_41 = arith.constant 3 : index
    %c1_42 = arith.constant 1 : index
    %103 = memref.load %arg5[%c3_41, %c1_42] : memref<9x36xf32, #tpu.memory_space<smem>>
    %104 = vector.broadcast %103 : f32 to vector<16x16xf32>
    %105 = arith.mulf %47, %104 : vector<16x16xf32>
    %106 = arith.addf %70, %105 : vector<16x16xf32>
    %c4_43 = arith.constant 4 : index
    %c1_44 = arith.constant 1 : index
    %107 = memref.load %arg5[%c4_43, %c1_44] : memref<9x36xf32, #tpu.memory_space<smem>>
    %108 = vector.broadcast %107 : f32 to vector<16x16xf32>
    %109 = arith.mulf %47, %108 : vector<16x16xf32>
    %110 = arith.addf %74, %109 : vector<16x16xf32>
    %c5_45 = arith.constant 5 : index
    %c1_46 = arith.constant 1 : index
    %111 = memref.load %arg5[%c5_45, %c1_46] : memref<9x36xf32, #tpu.memory_space<smem>>
    %112 = vector.broadcast %111 : f32 to vector<16x16xf32>
    %113 = arith.mulf %47, %112 : vector<16x16xf32>
    %114 = arith.addf %78, %113 : vector<16x16xf32>
    %c6_47 = arith.constant 6 : index
    %c1_48 = arith.constant 1 : index
    %115 = memref.load %arg5[%c6_47, %c1_48] : memref<9x36xf32, #tpu.memory_space<smem>>
    %116 = vector.broadcast %115 : f32 to vector<16x16xf32>
    %117 = arith.mulf %47, %116 : vector<16x16xf32>
    %118 = arith.addf %82, %117 : vector<16x16xf32>
    %c7_49 = arith.constant 7 : index
    %c1_50 = arith.constant 1 : index
    %119 = memref.load %arg5[%c7_49, %c1_50] : memref<9x36xf32, #tpu.memory_space<smem>>
    %120 = vector.broadcast %119 : f32 to vector<16x16xf32>
    %121 = arith.mulf %47, %120 : vector<16x16xf32>
    %122 = arith.addf %86, %121 : vector<16x16xf32>
    %c8_51 = arith.constant 8 : index
    %c1_52 = arith.constant 1 : index
    %123 = memref.load %arg5[%c8_51, %c1_52] : memref<9x36xf32, #tpu.memory_space<smem>>
    %124 = vector.broadcast %123 : f32 to vector<16x16xf32>
    %125 = arith.mulf %47, %124 : vector<16x16xf32>
    %126 = arith.addf %90, %125 : vector<16x16xf32>
    %c15_i32_53 = arith.constant 15 : i32
    %127 = tpu.dynamic_rotate %47 by %c15_i32_53 dim 1 : vector<16x16xf32>, i32 -> vector<16x16xf32>
    %cst_54 = arith.constant 0.000000e+00 : f32
    %128 = vector.broadcast %cst_54 : f32 to vector<16x16xf32>
    %129 = arith.select %15, %127, %128 : vector<16x16xi1>, vector<16x16xf32>
    %c0_55 = arith.constant 0 : index
    %c2_56 = arith.constant 2 : index
    %130 = memref.load %arg5[%c0_55, %c2_56] : memref<9x36xf32, #tpu.memory_space<smem>>
    %131 = vector.broadcast %130 : f32 to vector<16x16xf32>
    %132 = arith.mulf %129, %131 : vector<16x16xf32>
    %133 = arith.addf %94, %132 : vector<16x16xf32>
    %c1_57 = arith.constant 1 : index
    %c2_58 = arith.constant 2 : index
    %134 = memref.load %arg5[%c1_57, %c2_58] : memref<9x36xf32, #tpu.memory_space<smem>>
    %135 = vector.broadcast %134 : f32 to vector<16x16xf32>
    %136 = arith.mulf %129, %135 : vector<16x16xf32>
    %137 = arith.addf %98, %136 : vector<16x16xf32>
    %c2_59 = arith.constant 2 : index
    %c2_60 = arith.constant 2 : index
    %138 = memref.load %arg5[%c2_59, %c2_60] : memref<9x36xf32, #tpu.memory_space<smem>>
    %139 = vector.broadcast %138 : f32 to vector<16x16xf32>
    %140 = arith.mulf %129, %139 : vector<16x16xf32>
    %141 = arith.addf %102, %140 : vector<16x16xf32>
    %c3_61 = arith.constant 3 : index
    %c2_62 = arith.constant 2 : index
    %142 = memref.load %arg5[%c3_61, %c2_62] : memref<9x36xf32, #tpu.memory_space<smem>>
    %143 = vector.broadcast %142 : f32 to vector<16x16xf32>
    %144 = arith.mulf %129, %143 : vector<16x16xf32>
    %145 = arith.addf %106, %144 : vector<16x16xf32>
    %c4_63 = arith.constant 4 : index
    %c2_64 = arith.constant 2 : index
    %146 = memref.load %arg5[%c4_63, %c2_64] : memref<9x36xf32, #tpu.memory_space<smem>>
    %147 = vector.broadcast %146 : f32 to vector<16x16xf32>
    %148 = arith.mulf %129, %147 : vector<16x16xf32>
    %149 = arith.addf %110, %148 : vector<16x16xf32>
    %c5_65 = arith.constant 5 : index
    %c2_66 = arith.constant 2 : index
    %150 = memref.load %arg5[%c5_65, %c2_66] : memref<9x36xf32, #tpu.memory_space<smem>>
    %151 = vector.broadcast %150 : f32 to vector<16x16xf32>
    %152 = arith.mulf %129, %151 : vector<16x16xf32>
    %153 = arith.addf %114, %152 : vector<16x16xf32>
    %c6_67 = arith.constant 6 : index
    %c2_68 = arith.constant 2 : index
    %154 = memref.load %arg5[%c6_67, %c2_68] : memref<9x36xf32, #tpu.memory_space<smem>>
    %155 = vector.broadcast %154 : f32 to vector<16x16xf32>
    %156 = arith.mulf %129, %155 : vector<16x16xf32>
    %157 = arith.addf %118, %156 : vector<16x16xf32>
    %c7_69 = arith.constant 7 : index
    %c2_70 = arith.constant 2 : index
    %158 = memref.load %arg5[%c7_69, %c2_70] : memref<9x36xf32, #tpu.memory_space<smem>>
    %159 = vector.broadcast %158 : f32 to vector<16x16xf32>
    %160 = arith.mulf %129, %159 : vector<16x16xf32>
    %161 = arith.addf %122, %160 : vector<16x16xf32>
    %c8_71 = arith.constant 8 : index
    %c2_72 = arith.constant 2 : index
    %162 = memref.load %arg5[%c8_71, %c2_72] : memref<9x36xf32, #tpu.memory_space<smem>>
    %163 = vector.broadcast %162 : f32 to vector<16x16xf32>
    %164 = arith.mulf %129, %163 : vector<16x16xf32>
    %165 = arith.addf %126, %164 : vector<16x16xf32>
    %c1_i32_73 = arith.constant 1 : i32
    %166 = tpu.dynamic_rotate %35 by %c1_i32_73 dim 1 : vector<16x16xf32>, i32 -> vector<16x16xf32>
    %cst_74 = arith.constant 0.000000e+00 : f32
    %167 = vector.broadcast %cst_74 : f32 to vector<16x16xf32>
    %168 = arith.select %13, %166, %167 : vector<16x16xi1>, vector<16x16xf32>
    %c0_75 = arith.constant 0 : index
    %c3_76 = arith.constant 3 : index
    %169 = memref.load %arg5[%c0_75, %c3_76] : memref<9x36xf32, #tpu.memory_space<smem>>
    %170 = vector.broadcast %169 : f32 to vector<16x16xf32>
    %171 = arith.mulf %168, %170 : vector<16x16xf32>
    %172 = arith.addf %133, %171 : vector<16x16xf32>
    %c1_77 = arith.constant 1 : index
    %c3_78 = arith.constant 3 : index
    %173 = memref.load %arg5[%c1_77, %c3_78] : memref<9x36xf32, #tpu.memory_space<smem>>
    %174 = vector.broadcast %173 : f32 to vector<16x16xf32>
    %175 = arith.mulf %168, %174 : vector<16x16xf32>
    %176 = arith.addf %137, %175 : vector<16x16xf32>
    %c2_79 = arith.constant 2 : index
    %c3_80 = arith.constant 3 : index
    %177 = memref.load %arg5[%c2_79, %c3_80] : memref<9x36xf32, #tpu.memory_space<smem>>
    %178 = vector.broadcast %177 : f32 to vector<16x16xf32>
    %179 = arith.mulf %168, %178 : vector<16x16xf32>
    %180 = arith.addf %141, %179 : vector<16x16xf32>
    %c3_81 = arith.constant 3 : index
    %c3_82 = arith.constant 3 : index
    %181 = memref.load %arg5[%c3_81, %c3_82] : memref<9x36xf32, #tpu.memory_space<smem>>
    %182 = vector.broadcast %181 : f32 to vector<16x16xf32>
    %183 = arith.mulf %168, %182 : vector<16x16xf32>
    %184 = arith.addf %145, %183 : vector<16x16xf32>
    %c4_83 = arith.constant 4 : index
    %c3_84 = arith.constant 3 : index
    %185 = memref.load %arg5[%c4_83, %c3_84] : memref<9x36xf32, #tpu.memory_space<smem>>
    %186 = vector.broadcast %185 : f32 to vector<16x16xf32>
    %187 = arith.mulf %168, %186 : vector<16x16xf32>
    %188 = arith.addf %149, %187 : vector<16x16xf32>
    %c5_85 = arith.constant 5 : index
    %c3_86 = arith.constant 3 : index
    %189 = memref.load %arg5[%c5_85, %c3_86] : memref<9x36xf32, #tpu.memory_space<smem>>
    %190 = vector.broadcast %189 : f32 to vector<16x16xf32>
    %191 = arith.mulf %168, %190 : vector<16x16xf32>
    %192 = arith.addf %153, %191 : vector<16x16xf32>
    %c6_87 = arith.constant 6 : index
    %c3_88 = arith.constant 3 : index
    %193 = memref.load %arg5[%c6_87, %c3_88] : memref<9x36xf32, #tpu.memory_space<smem>>
    %194 = vector.broadcast %193 : f32 to vector<16x16xf32>
    %195 = arith.mulf %168, %194 : vector<16x16xf32>
    %196 = arith.addf %157, %195 : vector<16x16xf32>
    %c7_89 = arith.constant 7 : index
    %c3_90 = arith.constant 3 : index
    %197 = memref.load %arg5[%c7_89, %c3_90] : memref<9x36xf32, #tpu.memory_space<smem>>
    %198 = vector.broadcast %197 : f32 to vector<16x16xf32>
    %199 = arith.mulf %168, %198 : vector<16x16xf32>
    %200 = arith.addf %161, %199 : vector<16x16xf32>
    %c8_91 = arith.constant 8 : index
    %c3_92 = arith.constant 3 : index
    %201 = memref.load %arg5[%c8_91, %c3_92] : memref<9x36xf32, #tpu.memory_space<smem>>
    %202 = vector.broadcast %201 : f32 to vector<16x16xf32>
    %203 = arith.mulf %168, %202 : vector<16x16xf32>
    %204 = arith.addf %165, %203 : vector<16x16xf32>
    %c0_93 = arith.constant 0 : index
    %c4_94 = arith.constant 4 : index
    %205 = memref.load %arg5[%c0_93, %c4_94] : memref<9x36xf32, #tpu.memory_space<smem>>
    %206 = vector.broadcast %205 : f32 to vector<16x16xf32>
    %207 = arith.mulf %35, %206 : vector<16x16xf32>
    %208 = arith.addf %172, %207 : vector<16x16xf32>
    %c1_95 = arith.constant 1 : index
    %c4_96 = arith.constant 4 : index
    %209 = memref.load %arg5[%c1_95, %c4_96] : memref<9x36xf32, #tpu.memory_space<smem>>
    %210 = vector.broadcast %209 : f32 to vector<16x16xf32>
    %211 = arith.mulf %35, %210 : vector<16x16xf32>
    %212 = arith.addf %176, %211 : vector<16x16xf32>
    %c2_97 = arith.constant 2 : index
    %c4_98 = arith.constant 4 : index
    %213 = memref.load %arg5[%c2_97, %c4_98] : memref<9x36xf32, #tpu.memory_space<smem>>
    %214 = vector.broadcast %213 : f32 to vector<16x16xf32>
    %215 = arith.mulf %35, %214 : vector<16x16xf32>
    %216 = arith.addf %180, %215 : vector<16x16xf32>
    %c3_99 = arith.constant 3 : index
    %c4_100 = arith.constant 4 : index
    %217 = memref.load %arg5[%c3_99, %c4_100] : memref<9x36xf32, #tpu.memory_space<smem>>
    %218 = vector.broadcast %217 : f32 to vector<16x16xf32>
    %219 = arith.mulf %35, %218 : vector<16x16xf32>
    %220 = arith.addf %184, %219 : vector<16x16xf32>
    %c4_101 = arith.constant 4 : index
    %c4_102 = arith.constant 4 : index
    %221 = memref.load %arg5[%c4_101, %c4_102] : memref<9x36xf32, #tpu.memory_space<smem>>
    %222 = vector.broadcast %221 : f32 to vector<16x16xf32>
    %223 = arith.mulf %35, %222 : vector<16x16xf32>
    %224 = arith.addf %188, %223 : vector<16x16xf32>
    %c5_103 = arith.constant 5 : index
    %c4_104 = arith.constant 4 : index
    %225 = memref.load %arg5[%c5_103, %c4_104] : memref<9x36xf32, #tpu.memory_space<smem>>
    %226 = vector.broadcast %225 : f32 to vector<16x16xf32>
    %227 = arith.mulf %35, %226 : vector<16x16xf32>
    %228 = arith.addf %192, %227 : vector<16x16xf32>
    %c6_105 = arith.constant 6 : index
    %c4_106 = arith.constant 4 : index
    %229 = memref.load %arg5[%c6_105, %c4_106] : memref<9x36xf32, #tpu.memory_space<smem>>
    %230 = vector.broadcast %229 : f32 to vector<16x16xf32>
    %231 = arith.mulf %35, %230 : vector<16x16xf32>
    %232 = arith.addf %196, %231 : vector<16x16xf32>
    %c7_107 = arith.constant 7 : index
    %c4_108 = arith.constant 4 : index
    %233 = memref.load %arg5[%c7_107, %c4_108] : memref<9x36xf32, #tpu.memory_space<smem>>
    %234 = vector.broadcast %233 : f32 to vector<16x16xf32>
    %235 = arith.mulf %35, %234 : vector<16x16xf32>
    %236 = arith.addf %200, %235 : vector<16x16xf32>
    %c8_109 = arith.constant 8 : index
    %c4_110 = arith.constant 4 : index
    %237 = memref.load %arg5[%c8_109, %c4_110] : memref<9x36xf32, #tpu.memory_space<smem>>
    %238 = vector.broadcast %237 : f32 to vector<16x16xf32>
    %239 = arith.mulf %35, %238 : vector<16x16xf32>
    %240 = arith.addf %204, %239 : vector<16x16xf32>
    %c15_i32_111 = arith.constant 15 : i32
    %241 = tpu.dynamic_rotate %35 by %c15_i32_111 dim 1 : vector<16x16xf32>, i32 -> vector<16x16xf32>
    %cst_112 = arith.constant 0.000000e+00 : f32
    %242 = vector.broadcast %cst_112 : f32 to vector<16x16xf32>
    %243 = arith.select %15, %241, %242 : vector<16x16xi1>, vector<16x16xf32>
    %c0_113 = arith.constant 0 : index
    %c5_114 = arith.constant 5 : index
    %244 = memref.load %arg5[%c0_113, %c5_114] : memref<9x36xf32, #tpu.memory_space<smem>>
    %245 = vector.broadcast %244 : f32 to vector<16x16xf32>
    %246 = arith.mulf %243, %245 : vector<16x16xf32>
    %247 = arith.addf %208, %246 : vector<16x16xf32>
    %c1_115 = arith.constant 1 : index
    %c5_116 = arith.constant 5 : index
    %248 = memref.load %arg5[%c1_115, %c5_116] : memref<9x36xf32, #tpu.memory_space<smem>>
    %249 = vector.broadcast %248 : f32 to vector<16x16xf32>
    %250 = arith.mulf %243, %249 : vector<16x16xf32>
    %251 = arith.addf %212, %250 : vector<16x16xf32>
    %c2_117 = arith.constant 2 : index
    %c5_118 = arith.constant 5 : index
    %252 = memref.load %arg5[%c2_117, %c5_118] : memref<9x36xf32, #tpu.memory_space<smem>>
    %253 = vector.broadcast %252 : f32 to vector<16x16xf32>
    %254 = arith.mulf %243, %253 : vector<16x16xf32>
    %255 = arith.addf %216, %254 : vector<16x16xf32>
    %c3_119 = arith.constant 3 : index
    %c5_120 = arith.constant 5 : index
    %256 = memref.load %arg5[%c3_119, %c5_120] : memref<9x36xf32, #tpu.memory_space<smem>>
    %257 = vector.broadcast %256 : f32 to vector<16x16xf32>
    %258 = arith.mulf %243, %257 : vector<16x16xf32>
    %259 = arith.addf %220, %258 : vector<16x16xf32>
    %c4_121 = arith.constant 4 : index
    %c5_122 = arith.constant 5 : index
    %260 = memref.load %arg5[%c4_121, %c5_122] : memref<9x36xf32, #tpu.memory_space<smem>>
    %261 = vector.broadcast %260 : f32 to vector<16x16xf32>
    %262 = arith.mulf %243, %261 : vector<16x16xf32>
    %263 = arith.addf %224, %262 : vector<16x16xf32>
    %c5_123 = arith.constant 5 : index
    %c5_124 = arith.constant 5 : index
    %264 = memref.load %arg5[%c5_123, %c5_124] : memref<9x36xf32, #tpu.memory_space<smem>>
    %265 = vector.broadcast %264 : f32 to vector<16x16xf32>
    %266 = arith.mulf %243, %265 : vector<16x16xf32>
    %267 = arith.addf %228, %266 : vector<16x16xf32>
    %c6_125 = arith.constant 6 : index
    %c5_126 = arith.constant 5 : index
    %268 = memref.load %arg5[%c6_125, %c5_126] : memref<9x36xf32, #tpu.memory_space<smem>>
    %269 = vector.broadcast %268 : f32 to vector<16x16xf32>
    %270 = arith.mulf %243, %269 : vector<16x16xf32>
    %271 = arith.addf %232, %270 : vector<16x16xf32>
    %c7_127 = arith.constant 7 : index
    %c5_128 = arith.constant 5 : index
    %272 = memref.load %arg5[%c7_127, %c5_128] : memref<9x36xf32, #tpu.memory_space<smem>>
    %273 = vector.broadcast %272 : f32 to vector<16x16xf32>
    %274 = arith.mulf %243, %273 : vector<16x16xf32>
    %275 = arith.addf %236, %274 : vector<16x16xf32>
    %c8_129 = arith.constant 8 : index
    %c5_130 = arith.constant 5 : index
    %276 = memref.load %arg5[%c8_129, %c5_130] : memref<9x36xf32, #tpu.memory_space<smem>>
    %277 = vector.broadcast %276 : f32 to vector<16x16xf32>
    %278 = arith.mulf %243, %277 : vector<16x16xf32>
    %279 = arith.addf %240, %278 : vector<16x16xf32>
    %c1_i32_131 = arith.constant 1 : i32
    %280 = tpu.dynamic_rotate %51 by %c1_i32_131 dim 1 : vector<16x16xf32>, i32 -> vector<16x16xf32>
    %cst_132 = arith.constant 0.000000e+00 : f32
    %281 = vector.broadcast %cst_132 : f32 to vector<16x16xf32>
    %282 = arith.select %13, %280, %281 : vector<16x16xi1>, vector<16x16xf32>
    %c0_133 = arith.constant 0 : index
    %c6_134 = arith.constant 6 : index
    %283 = memref.load %arg5[%c0_133, %c6_134] : memref<9x36xf32, #tpu.memory_space<smem>>
    %284 = vector.broadcast %283 : f32 to vector<16x16xf32>
    %285 = arith.mulf %282, %284 : vector<16x16xf32>
    %286 = arith.addf %247, %285 : vector<16x16xf32>
    %c1_135 = arith.constant 1 : index
    %c6_136 = arith.constant 6 : index
    %287 = memref.load %arg5[%c1_135, %c6_136] : memref<9x36xf32, #tpu.memory_space<smem>>
    %288 = vector.broadcast %287 : f32 to vector<16x16xf32>
    %289 = arith.mulf %282, %288 : vector<16x16xf32>
    %290 = arith.addf %251, %289 : vector<16x16xf32>
    %c2_137 = arith.constant 2 : index
    %c6_138 = arith.constant 6 : index
    %291 = memref.load %arg5[%c2_137, %c6_138] : memref<9x36xf32, #tpu.memory_space<smem>>
    %292 = vector.broadcast %291 : f32 to vector<16x16xf32>
    %293 = arith.mulf %282, %292 : vector<16x16xf32>
    %294 = arith.addf %255, %293 : vector<16x16xf32>
    %c3_139 = arith.constant 3 : index
    %c6_140 = arith.constant 6 : index
    %295 = memref.load %arg5[%c3_139, %c6_140] : memref<9x36xf32, #tpu.memory_space<smem>>
    %296 = vector.broadcast %295 : f32 to vector<16x16xf32>
    %297 = arith.mulf %282, %296 : vector<16x16xf32>
    %298 = arith.addf %259, %297 : vector<16x16xf32>
    %c4_141 = arith.constant 4 : index
    %c6_142 = arith.constant 6 : index
    %299 = memref.load %arg5[%c4_141, %c6_142] : memref<9x36xf32, #tpu.memory_space<smem>>
    %300 = vector.broadcast %299 : f32 to vector<16x16xf32>
    %301 = arith.mulf %282, %300 : vector<16x16xf32>
    %302 = arith.addf %263, %301 : vector<16x16xf32>
    %c5_143 = arith.constant 5 : index
    %c6_144 = arith.constant 6 : index
    %303 = memref.load %arg5[%c5_143, %c6_144] : memref<9x36xf32, #tpu.memory_space<smem>>
    %304 = vector.broadcast %303 : f32 to vector<16x16xf32>
    %305 = arith.mulf %282, %304 : vector<16x16xf32>
    %306 = arith.addf %267, %305 : vector<16x16xf32>
    %c6_145 = arith.constant 6 : index
    %c6_146 = arith.constant 6 : index
    %307 = memref.load %arg5[%c6_145, %c6_146] : memref<9x36xf32, #tpu.memory_space<smem>>
    %308 = vector.broadcast %307 : f32 to vector<16x16xf32>
    %309 = arith.mulf %282, %308 : vector<16x16xf32>
    %310 = arith.addf %271, %309 : vector<16x16xf32>
    %c7_147 = arith.constant 7 : index
    %c6_148 = arith.constant 6 : index
    %311 = memref.load %arg5[%c7_147, %c6_148] : memref<9x36xf32, #tpu.memory_space<smem>>
    %312 = vector.broadcast %311 : f32 to vector<16x16xf32>
    %313 = arith.mulf %282, %312 : vector<16x16xf32>
    %314 = arith.addf %275, %313 : vector<16x16xf32>
    %c8_149 = arith.constant 8 : index
    %c6_150 = arith.constant 6 : index
    %315 = memref.load %arg5[%c8_149, %c6_150] : memref<9x36xf32, #tpu.memory_space<smem>>
    %316 = vector.broadcast %315 : f32 to vector<16x16xf32>
    %317 = arith.mulf %282, %316 : vector<16x16xf32>
    %318 = arith.addf %279, %317 : vector<16x16xf32>
    %c0_151 = arith.constant 0 : index
    %c7_152 = arith.constant 7 : index
    %319 = memref.load %arg5[%c0_151, %c7_152] : memref<9x36xf32, #tpu.memory_space<smem>>
    %320 = vector.broadcast %319 : f32 to vector<16x16xf32>
    %321 = arith.mulf %51, %320 : vector<16x16xf32>
    %322 = arith.addf %286, %321 : vector<16x16xf32>
    %c1_153 = arith.constant 1 : index
    %c7_154 = arith.constant 7 : index
    %323 = memref.load %arg5[%c1_153, %c7_154] : memref<9x36xf32, #tpu.memory_space<smem>>
    %324 = vector.broadcast %323 : f32 to vector<16x16xf32>
    %325 = arith.mulf %51, %324 : vector<16x16xf32>
    %326 = arith.addf %290, %325 : vector<16x16xf32>
    %c2_155 = arith.constant 2 : index
    %c7_156 = arith.constant 7 : index
    %327 = memref.load %arg5[%c2_155, %c7_156] : memref<9x36xf32, #tpu.memory_space<smem>>
    %328 = vector.broadcast %327 : f32 to vector<16x16xf32>
    %329 = arith.mulf %51, %328 : vector<16x16xf32>
    %330 = arith.addf %294, %329 : vector<16x16xf32>
    %c3_157 = arith.constant 3 : index
    %c7_158 = arith.constant 7 : index
    %331 = memref.load %arg5[%c3_157, %c7_158] : memref<9x36xf32, #tpu.memory_space<smem>>
    %332 = vector.broadcast %331 : f32 to vector<16x16xf32>
    %333 = arith.mulf %51, %332 : vector<16x16xf32>
    %334 = arith.addf %298, %333 : vector<16x16xf32>
    %c4_159 = arith.constant 4 : index
    %c7_160 = arith.constant 7 : index
    %335 = memref.load %arg5[%c4_159, %c7_160] : memref<9x36xf32, #tpu.memory_space<smem>>
    %336 = vector.broadcast %335 : f32 to vector<16x16xf32>
    %337 = arith.mulf %51, %336 : vector<16x16xf32>
    %338 = arith.addf %302, %337 : vector<16x16xf32>
    %c5_161 = arith.constant 5 : index
    %c7_162 = arith.constant 7 : index
    %339 = memref.load %arg5[%c5_161, %c7_162] : memref<9x36xf32, #tpu.memory_space<smem>>
    %340 = vector.broadcast %339 : f32 to vector<16x16xf32>
    %341 = arith.mulf %51, %340 : vector<16x16xf32>
    %342 = arith.addf %306, %341 : vector<16x16xf32>
    %c6_163 = arith.constant 6 : index
    %c7_164 = arith.constant 7 : index
    %343 = memref.load %arg5[%c6_163, %c7_164] : memref<9x36xf32, #tpu.memory_space<smem>>
    %344 = vector.broadcast %343 : f32 to vector<16x16xf32>
    %345 = arith.mulf %51, %344 : vector<16x16xf32>
    %346 = arith.addf %310, %345 : vector<16x16xf32>
    %c7_165 = arith.constant 7 : index
    %c7_166 = arith.constant 7 : index
    %347 = memref.load %arg5[%c7_165, %c7_166] : memref<9x36xf32, #tpu.memory_space<smem>>
    %348 = vector.broadcast %347 : f32 to vector<16x16xf32>
    %349 = arith.mulf %51, %348 : vector<16x16xf32>
    %350 = arith.addf %314, %349 : vector<16x16xf32>
    %c8_167 = arith.constant 8 : index
    %c7_168 = arith.constant 7 : index
    %351 = memref.load %arg5[%c8_167, %c7_168] : memref<9x36xf32, #tpu.memory_space<smem>>
    %352 = vector.broadcast %351 : f32 to vector<16x16xf32>
    %353 = arith.mulf %51, %352 : vector<16x16xf32>
    %354 = arith.addf %318, %353 : vector<16x16xf32>
    %c15_i32_169 = arith.constant 15 : i32
    %355 = tpu.dynamic_rotate %51 by %c15_i32_169 dim 1 : vector<16x16xf32>, i32 -> vector<16x16xf32>
    %cst_170 = arith.constant 0.000000e+00 : f32
    %356 = vector.broadcast %cst_170 : f32 to vector<16x16xf32>
    %357 = arith.select %15, %355, %356 : vector<16x16xi1>, vector<16x16xf32>
    %c0_171 = arith.constant 0 : index
    %c8_172 = arith.constant 8 : index
    %358 = memref.load %arg5[%c0_171, %c8_172] : memref<9x36xf32, #tpu.memory_space<smem>>
    %359 = vector.broadcast %358 : f32 to vector<16x16xf32>
    %360 = arith.mulf %357, %359 : vector<16x16xf32>
    %361 = arith.addf %322, %360 : vector<16x16xf32>
    %c1_173 = arith.constant 1 : index
    %c8_174 = arith.constant 8 : index
    %362 = memref.load %arg5[%c1_173, %c8_174] : memref<9x36xf32, #tpu.memory_space<smem>>
    %363 = vector.broadcast %362 : f32 to vector<16x16xf32>
    %364 = arith.mulf %357, %363 : vector<16x16xf32>
    %365 = arith.addf %326, %364 : vector<16x16xf32>
    %c2_175 = arith.constant 2 : index
    %c8_176 = arith.constant 8 : index
    %366 = memref.load %arg5[%c2_175, %c8_176] : memref<9x36xf32, #tpu.memory_space<smem>>
    %367 = vector.broadcast %366 : f32 to vector<16x16xf32>
    %368 = arith.mulf %357, %367 : vector<16x16xf32>
    %369 = arith.addf %330, %368 : vector<16x16xf32>
    %c3_177 = arith.constant 3 : index
    %c8_178 = arith.constant 8 : index
    %370 = memref.load %arg5[%c3_177, %c8_178] : memref<9x36xf32, #tpu.memory_space<smem>>
    %371 = vector.broadcast %370 : f32 to vector<16x16xf32>
    %372 = arith.mulf %357, %371 : vector<16x16xf32>
    %373 = arith.addf %334, %372 : vector<16x16xf32>
    %c4_179 = arith.constant 4 : index
    %c8_180 = arith.constant 8 : index
    %374 = memref.load %arg5[%c4_179, %c8_180] : memref<9x36xf32, #tpu.memory_space<smem>>
    %375 = vector.broadcast %374 : f32 to vector<16x16xf32>
    %376 = arith.mulf %357, %375 : vector<16x16xf32>
    %377 = arith.addf %338, %376 : vector<16x16xf32>
    %c5_181 = arith.constant 5 : index
    %c8_182 = arith.constant 8 : index
    %378 = memref.load %arg5[%c5_181, %c8_182] : memref<9x36xf32, #tpu.memory_space<smem>>
    %379 = vector.broadcast %378 : f32 to vector<16x16xf32>
    %380 = arith.mulf %357, %379 : vector<16x16xf32>
    %381 = arith.addf %342, %380 : vector<16x16xf32>
    %c6_183 = arith.constant 6 : index
    %c8_184 = arith.constant 8 : index
    %382 = memref.load %arg5[%c6_183, %c8_184] : memref<9x36xf32, #tpu.memory_space<smem>>
    %383 = vector.broadcast %382 : f32 to vector<16x16xf32>
    %384 = arith.mulf %357, %383 : vector<16x16xf32>
    %385 = arith.addf %346, %384 : vector<16x16xf32>
    %c7_185 = arith.constant 7 : index
    %c8_186 = arith.constant 8 : index
    %386 = memref.load %arg5[%c7_185, %c8_186] : memref<9x36xf32, #tpu.memory_space<smem>>
    %387 = vector.broadcast %386 : f32 to vector<16x16xf32>
    %388 = arith.mulf %357, %387 : vector<16x16xf32>
    %389 = arith.addf %350, %388 : vector<16x16xf32>
    %c8_187 = arith.constant 8 : index
    %c8_188 = arith.constant 8 : index
    %390 = memref.load %arg5[%c8_187, %c8_188] : memref<9x36xf32, #tpu.memory_space<smem>>
    %391 = vector.broadcast %390 : f32 to vector<16x16xf32>
    %392 = arith.mulf %357, %391 : vector<16x16xf32>
    %393 = arith.addf %354, %392 : vector<16x16xf32>
    %c0_189 = arith.constant 0 : index
    %c1_190 = arith.constant 1 : index
    %c0_191 = arith.constant 0 : index
    %c0_192 = arith.constant 0 : index
    %394 = vector.load %arg2[%c0_189, %c1_190, %c0_191, %c0_192] : memref<1x4x16x16xf32, #tpu.memory_space<vmem>>, vector<1x1x16x16xf32>
    %395 = vector.shape_cast %394 : vector<1x1x16x16xf32> to vector<16x16xf32>
    %c0_193 = arith.constant 0 : index
    %c1_194 = arith.constant 1 : index
    %c7_195 = arith.constant 7 : index
    %c0_196 = arith.constant 0 : index
    %396 = vector.load %arg3[%c0_193, %c1_194, %c7_195, %c0_196] : memref<1x4x8x16xf32, #tpu.memory_space<vmem>>, vector<1x1x1x16xf32>
    %397 = vector.shape_cast %396 : vector<1x1x1x16xf32> to vector<1x16xf32>
    %398 = vector.broadcast %2 : f32 to vector<1x16xf32>
    %399 = arith.mulf %397, %398 : vector<1x16xf32>
    %c0_197 = arith.constant 0 : index
    %c1_198 = arith.constant 1 : index
    %c0_199 = arith.constant 0 : index
    %c0_200 = arith.constant 0 : index
    %400 = vector.load %arg4[%c0_197, %c1_198, %c0_199, %c0_200] : memref<1x4x8x16xf32, #tpu.memory_space<vmem>>, vector<1x1x1x16xf32>
    %401 = vector.shape_cast %400 : vector<1x1x1x16xf32> to vector<1x16xf32>
    %402 = vector.broadcast %5 : f32 to vector<1x16xf32>
    %403 = arith.mulf %401, %402 : vector<1x16xf32>
    %c1_i32_201 = arith.constant 1 : i32
    %404 = tpu.dynamic_rotate %395 by %c1_i32_201 dim 0 : vector<16x16xf32>, i32 -> vector<16x16xf32>
    %405 = vector.shape_cast %399 : vector<1x16xf32> to vector<1x16xf32>
    %406 = vector.broadcast %405 : vector<1x16xf32> to vector<16x16xf32>
    %407 = arith.select %9, %406, %404 : vector<16x16xi1>, vector<16x16xf32>
    %c15_i32_202 = arith.constant 15 : i32
    %408 = tpu.dynamic_rotate %395 by %c15_i32_202 dim 0 : vector<16x16xf32>, i32 -> vector<16x16xf32>
    %409 = vector.shape_cast %403 : vector<1x16xf32> to vector<1x16xf32>
    %410 = vector.broadcast %409 : vector<1x16xf32> to vector<16x16xf32>
    %411 = arith.select %11, %410, %408 : vector<16x16xi1>, vector<16x16xf32>
    %c1_i32_203 = arith.constant 1 : i32
    %412 = tpu.dynamic_rotate %407 by %c1_i32_203 dim 1 : vector<16x16xf32>, i32 -> vector<16x16xf32>
    %cst_204 = arith.constant 0.000000e+00 : f32
    %413 = vector.broadcast %cst_204 : f32 to vector<16x16xf32>
    %414 = arith.select %13, %412, %413 : vector<16x16xi1>, vector<16x16xf32>
    %c0_205 = arith.constant 0 : index
    %c9 = arith.constant 9 : index
    %415 = memref.load %arg5[%c0_205, %c9] : memref<9x36xf32, #tpu.memory_space<smem>>
    %416 = vector.broadcast %415 : f32 to vector<16x16xf32>
    %417 = arith.mulf %414, %416 : vector<16x16xf32>
    %418 = arith.addf %361, %417 : vector<16x16xf32>
    %c1_206 = arith.constant 1 : index
    %c9_207 = arith.constant 9 : index
    %419 = memref.load %arg5[%c1_206, %c9_207] : memref<9x36xf32, #tpu.memory_space<smem>>
    %420 = vector.broadcast %419 : f32 to vector<16x16xf32>
    %421 = arith.mulf %414, %420 : vector<16x16xf32>
    %422 = arith.addf %365, %421 : vector<16x16xf32>
    %c2_208 = arith.constant 2 : index
    %c9_209 = arith.constant 9 : index
    %423 = memref.load %arg5[%c2_208, %c9_209] : memref<9x36xf32, #tpu.memory_space<smem>>
    %424 = vector.broadcast %423 : f32 to vector<16x16xf32>
    %425 = arith.mulf %414, %424 : vector<16x16xf32>
    %426 = arith.addf %369, %425 : vector<16x16xf32>
    %c3_210 = arith.constant 3 : index
    %c9_211 = arith.constant 9 : index
    %427 = memref.load %arg5[%c3_210, %c9_211] : memref<9x36xf32, #tpu.memory_space<smem>>
    %428 = vector.broadcast %427 : f32 to vector<16x16xf32>
    %429 = arith.mulf %414, %428 : vector<16x16xf32>
    %430 = arith.addf %373, %429 : vector<16x16xf32>
    %c4_212 = arith.constant 4 : index
    %c9_213 = arith.constant 9 : index
    %431 = memref.load %arg5[%c4_212, %c9_213] : memref<9x36xf32, #tpu.memory_space<smem>>
    %432 = vector.broadcast %431 : f32 to vector<16x16xf32>
    %433 = arith.mulf %414, %432 : vector<16x16xf32>
    %434 = arith.addf %377, %433 : vector<16x16xf32>
    %c5_214 = arith.constant 5 : index
    %c9_215 = arith.constant 9 : index
    %435 = memref.load %arg5[%c5_214, %c9_215] : memref<9x36xf32, #tpu.memory_space<smem>>
    %436 = vector.broadcast %435 : f32 to vector<16x16xf32>
    %437 = arith.mulf %414, %436 : vector<16x16xf32>
    %438 = arith.addf %381, %437 : vector<16x16xf32>
    %c6_216 = arith.constant 6 : index
    %c9_217 = arith.constant 9 : index
    %439 = memref.load %arg5[%c6_216, %c9_217] : memref<9x36xf32, #tpu.memory_space<smem>>
    %440 = vector.broadcast %439 : f32 to vector<16x16xf32>
    %441 = arith.mulf %414, %440 : vector<16x16xf32>
    %442 = arith.addf %385, %441 : vector<16x16xf32>
    %c7_218 = arith.constant 7 : index
    %c9_219 = arith.constant 9 : index
    %443 = memref.load %arg5[%c7_218, %c9_219] : memref<9x36xf32, #tpu.memory_space<smem>>
    %444 = vector.broadcast %443 : f32 to vector<16x16xf32>
    %445 = arith.mulf %414, %444 : vector<16x16xf32>
    %446 = arith.addf %389, %445 : vector<16x16xf32>
    %c8_220 = arith.constant 8 : index
    %c9_221 = arith.constant 9 : index
    %447 = memref.load %arg5[%c8_220, %c9_221] : memref<9x36xf32, #tpu.memory_space<smem>>
    %448 = vector.broadcast %447 : f32 to vector<16x16xf32>
    %449 = arith.mulf %414, %448 : vector<16x16xf32>
    %450 = arith.addf %393, %449 : vector<16x16xf32>
    %c0_222 = arith.constant 0 : index
    %c10 = arith.constant 10 : index
    %451 = memref.load %arg5[%c0_222, %c10] : memref<9x36xf32, #tpu.memory_space<smem>>
    %452 = vector.broadcast %451 : f32 to vector<16x16xf32>
    %453 = arith.mulf %407, %452 : vector<16x16xf32>
    %454 = arith.addf %418, %453 : vector<16x16xf32>
    %c1_223 = arith.constant 1 : index
    %c10_224 = arith.constant 10 : index
    %455 = memref.load %arg5[%c1_223, %c10_224] : memref<9x36xf32, #tpu.memory_space<smem>>
    %456 = vector.broadcast %455 : f32 to vector<16x16xf32>
    %457 = arith.mulf %407, %456 : vector<16x16xf32>
    %458 = arith.addf %422, %457 : vector<16x16xf32>
    %c2_225 = arith.constant 2 : index
    %c10_226 = arith.constant 10 : index
    %459 = memref.load %arg5[%c2_225, %c10_226] : memref<9x36xf32, #tpu.memory_space<smem>>
    %460 = vector.broadcast %459 : f32 to vector<16x16xf32>
    %461 = arith.mulf %407, %460 : vector<16x16xf32>
    %462 = arith.addf %426, %461 : vector<16x16xf32>
    %c3_227 = arith.constant 3 : index
    %c10_228 = arith.constant 10 : index
    %463 = memref.load %arg5[%c3_227, %c10_228] : memref<9x36xf32, #tpu.memory_space<smem>>
    %464 = vector.broadcast %463 : f32 to vector<16x16xf32>
    %465 = arith.mulf %407, %464 : vector<16x16xf32>
    %466 = arith.addf %430, %465 : vector<16x16xf32>
    %c4_229 = arith.constant 4 : index
    %c10_230 = arith.constant 10 : index
    %467 = memref.load %arg5[%c4_229, %c10_230] : memref<9x36xf32, #tpu.memory_space<smem>>
    %468 = vector.broadcast %467 : f32 to vector<16x16xf32>
    %469 = arith.mulf %407, %468 : vector<16x16xf32>
    %470 = arith.addf %434, %469 : vector<16x16xf32>
    %c5_231 = arith.constant 5 : index
    %c10_232 = arith.constant 10 : index
    %471 = memref.load %arg5[%c5_231, %c10_232] : memref<9x36xf32, #tpu.memory_space<smem>>
    %472 = vector.broadcast %471 : f32 to vector<16x16xf32>
    %473 = arith.mulf %407, %472 : vector<16x16xf32>
    %474 = arith.addf %438, %473 : vector<16x16xf32>
    %c6_233 = arith.constant 6 : index
    %c10_234 = arith.constant 10 : index
    %475 = memref.load %arg5[%c6_233, %c10_234] : memref<9x36xf32, #tpu.memory_space<smem>>
    %476 = vector.broadcast %475 : f32 to vector<16x16xf32>
    %477 = arith.mulf %407, %476 : vector<16x16xf32>
    %478 = arith.addf %442, %477 : vector<16x16xf32>
    %c7_235 = arith.constant 7 : index
    %c10_236 = arith.constant 10 : index
    %479 = memref.load %arg5[%c7_235, %c10_236] : memref<9x36xf32, #tpu.memory_space<smem>>
    %480 = vector.broadcast %479 : f32 to vector<16x16xf32>
    %481 = arith.mulf %407, %480 : vector<16x16xf32>
    %482 = arith.addf %446, %481 : vector<16x16xf32>
    %c8_237 = arith.constant 8 : index
    %c10_238 = arith.constant 10 : index
    %483 = memref.load %arg5[%c8_237, %c10_238] : memref<9x36xf32, #tpu.memory_space<smem>>
    %484 = vector.broadcast %483 : f32 to vector<16x16xf32>
    %485 = arith.mulf %407, %484 : vector<16x16xf32>
    %486 = arith.addf %450, %485 : vector<16x16xf32>
    %c15_i32_239 = arith.constant 15 : i32
    %487 = tpu.dynamic_rotate %407 by %c15_i32_239 dim 1 : vector<16x16xf32>, i32 -> vector<16x16xf32>
    %cst_240 = arith.constant 0.000000e+00 : f32
    %488 = vector.broadcast %cst_240 : f32 to vector<16x16xf32>
    %489 = arith.select %15, %487, %488 : vector<16x16xi1>, vector<16x16xf32>
    %c0_241 = arith.constant 0 : index
    %c11 = arith.constant 11 : index
    %490 = memref.load %arg5[%c0_241, %c11] : memref<9x36xf32, #tpu.memory_space<smem>>
    %491 = vector.broadcast %490 : f32 to vector<16x16xf32>
    %492 = arith.mulf %489, %491 : vector<16x16xf32>
    %493 = arith.addf %454, %492 : vector<16x16xf32>
    %c1_242 = arith.constant 1 : index
    %c11_243 = arith.constant 11 : index
    %494 = memref.load %arg5[%c1_242, %c11_243] : memref<9x36xf32, #tpu.memory_space<smem>>
    %495 = vector.broadcast %494 : f32 to vector<16x16xf32>
    %496 = arith.mulf %489, %495 : vector<16x16xf32>
    %497 = arith.addf %458, %496 : vector<16x16xf32>
    %c2_244 = arith.constant 2 : index
    %c11_245 = arith.constant 11 : index
    %498 = memref.load %arg5[%c2_244, %c11_245] : memref<9x36xf32, #tpu.memory_space<smem>>
    %499 = vector.broadcast %498 : f32 to vector<16x16xf32>
    %500 = arith.mulf %489, %499 : vector<16x16xf32>
    %501 = arith.addf %462, %500 : vector<16x16xf32>
    %c3_246 = arith.constant 3 : index
    %c11_247 = arith.constant 11 : index
    %502 = memref.load %arg5[%c3_246, %c11_247] : memref<9x36xf32, #tpu.memory_space<smem>>
    %503 = vector.broadcast %502 : f32 to vector<16x16xf32>
    %504 = arith.mulf %489, %503 : vector<16x16xf32>
    %505 = arith.addf %466, %504 : vector<16x16xf32>
    %c4_248 = arith.constant 4 : index
    %c11_249 = arith.constant 11 : index
    %506 = memref.load %arg5[%c4_248, %c11_249] : memref<9x36xf32, #tpu.memory_space<smem>>
    %507 = vector.broadcast %506 : f32 to vector<16x16xf32>
    %508 = arith.mulf %489, %507 : vector<16x16xf32>
    %509 = arith.addf %470, %508 : vector<16x16xf32>
    %c5_250 = arith.constant 5 : index
    %c11_251 = arith.constant 11 : index
    %510 = memref.load %arg5[%c5_250, %c11_251] : memref<9x36xf32, #tpu.memory_space<smem>>
    %511 = vector.broadcast %510 : f32 to vector<16x16xf32>
    %512 = arith.mulf %489, %511 : vector<16x16xf32>
    %513 = arith.addf %474, %512 : vector<16x16xf32>
    %c6_252 = arith.constant 6 : index
    %c11_253 = arith.constant 11 : index
    %514 = memref.load %arg5[%c6_252, %c11_253] : memref<9x36xf32, #tpu.memory_space<smem>>
    %515 = vector.broadcast %514 : f32 to vector<16x16xf32>
    %516 = arith.mulf %489, %515 : vector<16x16xf32>
    %517 = arith.addf %478, %516 : vector<16x16xf32>
    %c7_254 = arith.constant 7 : index
    %c11_255 = arith.constant 11 : index
    %518 = memref.load %arg5[%c7_254, %c11_255] : memref<9x36xf32, #tpu.memory_space<smem>>
    %519 = vector.broadcast %518 : f32 to vector<16x16xf32>
    %520 = arith.mulf %489, %519 : vector<16x16xf32>
    %521 = arith.addf %482, %520 : vector<16x16xf32>
    %c8_256 = arith.constant 8 : index
    %c11_257 = arith.constant 11 : index
    %522 = memref.load %arg5[%c8_256, %c11_257] : memref<9x36xf32, #tpu.memory_space<smem>>
    %523 = vector.broadcast %522 : f32 to vector<16x16xf32>
    %524 = arith.mulf %489, %523 : vector<16x16xf32>
    %525 = arith.addf %486, %524 : vector<16x16xf32>
    %c1_i32_258 = arith.constant 1 : i32
    %526 = tpu.dynamic_rotate %395 by %c1_i32_258 dim 1 : vector<16x16xf32>, i32 -> vector<16x16xf32>
    %cst_259 = arith.constant 0.000000e+00 : f32
    %527 = vector.broadcast %cst_259 : f32 to vector<16x16xf32>
    %528 = arith.select %13, %526, %527 : vector<16x16xi1>, vector<16x16xf32>
    %c0_260 = arith.constant 0 : index
    %c12 = arith.constant 12 : index
    %529 = memref.load %arg5[%c0_260, %c12] : memref<9x36xf32, #tpu.memory_space<smem>>
    %530 = vector.broadcast %529 : f32 to vector<16x16xf32>
    %531 = arith.mulf %528, %530 : vector<16x16xf32>
    %532 = arith.addf %493, %531 : vector<16x16xf32>
    %c1_261 = arith.constant 1 : index
    %c12_262 = arith.constant 12 : index
    %533 = memref.load %arg5[%c1_261, %c12_262] : memref<9x36xf32, #tpu.memory_space<smem>>
    %534 = vector.broadcast %533 : f32 to vector<16x16xf32>
    %535 = arith.mulf %528, %534 : vector<16x16xf32>
    %536 = arith.addf %497, %535 : vector<16x16xf32>
    %c2_263 = arith.constant 2 : index
    %c12_264 = arith.constant 12 : index
    %537 = memref.load %arg5[%c2_263, %c12_264] : memref<9x36xf32, #tpu.memory_space<smem>>
    %538 = vector.broadcast %537 : f32 to vector<16x16xf32>
    %539 = arith.mulf %528, %538 : vector<16x16xf32>
    %540 = arith.addf %501, %539 : vector<16x16xf32>
    %c3_265 = arith.constant 3 : index
    %c12_266 = arith.constant 12 : index
    %541 = memref.load %arg5[%c3_265, %c12_266] : memref<9x36xf32, #tpu.memory_space<smem>>
    %542 = vector.broadcast %541 : f32 to vector<16x16xf32>
    %543 = arith.mulf %528, %542 : vector<16x16xf32>
    %544 = arith.addf %505, %543 : vector<16x16xf32>
    %c4_267 = arith.constant 4 : index
    %c12_268 = arith.constant 12 : index
    %545 = memref.load %arg5[%c4_267, %c12_268] : memref<9x36xf32, #tpu.memory_space<smem>>
    %546 = vector.broadcast %545 : f32 to vector<16x16xf32>
    %547 = arith.mulf %528, %546 : vector<16x16xf32>
    %548 = arith.addf %509, %547 : vector<16x16xf32>
    %c5_269 = arith.constant 5 : index
    %c12_270 = arith.constant 12 : index
    %549 = memref.load %arg5[%c5_269, %c12_270] : memref<9x36xf32, #tpu.memory_space<smem>>
    %550 = vector.broadcast %549 : f32 to vector<16x16xf32>
    %551 = arith.mulf %528, %550 : vector<16x16xf32>
    %552 = arith.addf %513, %551 : vector<16x16xf32>
    %c6_271 = arith.constant 6 : index
    %c12_272 = arith.constant 12 : index
    %553 = memref.load %arg5[%c6_271, %c12_272] : memref<9x36xf32, #tpu.memory_space<smem>>
    %554 = vector.broadcast %553 : f32 to vector<16x16xf32>
    %555 = arith.mulf %528, %554 : vector<16x16xf32>
    %556 = arith.addf %517, %555 : vector<16x16xf32>
    %c7_273 = arith.constant 7 : index
    %c12_274 = arith.constant 12 : index
    %557 = memref.load %arg5[%c7_273, %c12_274] : memref<9x36xf32, #tpu.memory_space<smem>>
    %558 = vector.broadcast %557 : f32 to vector<16x16xf32>
    %559 = arith.mulf %528, %558 : vector<16x16xf32>
    %560 = arith.addf %521, %559 : vector<16x16xf32>
    %c8_275 = arith.constant 8 : index
    %c12_276 = arith.constant 12 : index
    %561 = memref.load %arg5[%c8_275, %c12_276] : memref<9x36xf32, #tpu.memory_space<smem>>
    %562 = vector.broadcast %561 : f32 to vector<16x16xf32>
    %563 = arith.mulf %528, %562 : vector<16x16xf32>
    %564 = arith.addf %525, %563 : vector<16x16xf32>
    %c0_277 = arith.constant 0 : index
    %c13 = arith.constant 13 : index
    %565 = memref.load %arg5[%c0_277, %c13] : memref<9x36xf32, #tpu.memory_space<smem>>
    %566 = vector.broadcast %565 : f32 to vector<16x16xf32>
    %567 = arith.mulf %395, %566 : vector<16x16xf32>
    %568 = arith.addf %532, %567 : vector<16x16xf32>
    %c1_278 = arith.constant 1 : index
    %c13_279 = arith.constant 13 : index
    %569 = memref.load %arg5[%c1_278, %c13_279] : memref<9x36xf32, #tpu.memory_space<smem>>
    %570 = vector.broadcast %569 : f32 to vector<16x16xf32>
    %571 = arith.mulf %395, %570 : vector<16x16xf32>
    %572 = arith.addf %536, %571 : vector<16x16xf32>
    %c2_280 = arith.constant 2 : index
    %c13_281 = arith.constant 13 : index
    %573 = memref.load %arg5[%c2_280, %c13_281] : memref<9x36xf32, #tpu.memory_space<smem>>
    %574 = vector.broadcast %573 : f32 to vector<16x16xf32>
    %575 = arith.mulf %395, %574 : vector<16x16xf32>
    %576 = arith.addf %540, %575 : vector<16x16xf32>
    %c3_282 = arith.constant 3 : index
    %c13_283 = arith.constant 13 : index
    %577 = memref.load %arg5[%c3_282, %c13_283] : memref<9x36xf32, #tpu.memory_space<smem>>
    %578 = vector.broadcast %577 : f32 to vector<16x16xf32>
    %579 = arith.mulf %395, %578 : vector<16x16xf32>
    %580 = arith.addf %544, %579 : vector<16x16xf32>
    %c4_284 = arith.constant 4 : index
    %c13_285 = arith.constant 13 : index
    %581 = memref.load %arg5[%c4_284, %c13_285] : memref<9x36xf32, #tpu.memory_space<smem>>
    %582 = vector.broadcast %581 : f32 to vector<16x16xf32>
    %583 = arith.mulf %395, %582 : vector<16x16xf32>
    %584 = arith.addf %548, %583 : vector<16x16xf32>
    %c5_286 = arith.constant 5 : index
    %c13_287 = arith.constant 13 : index
    %585 = memref.load %arg5[%c5_286, %c13_287] : memref<9x36xf32, #tpu.memory_space<smem>>
    %586 = vector.broadcast %585 : f32 to vector<16x16xf32>
    %587 = arith.mulf %395, %586 : vector<16x16xf32>
    %588 = arith.addf %552, %587 : vector<16x16xf32>
    %c6_288 = arith.constant 6 : index
    %c13_289 = arith.constant 13 : index
    %589 = memref.load %arg5[%c6_288, %c13_289] : memref<9x36xf32, #tpu.memory_space<smem>>
    %590 = vector.broadcast %589 : f32 to vector<16x16xf32>
    %591 = arith.mulf %395, %590 : vector<16x16xf32>
    %592 = arith.addf %556, %591 : vector<16x16xf32>
    %c7_290 = arith.constant 7 : index
    %c13_291 = arith.constant 13 : index
    %593 = memref.load %arg5[%c7_290, %c13_291] : memref<9x36xf32, #tpu.memory_space<smem>>
    %594 = vector.broadcast %593 : f32 to vector<16x16xf32>
    %595 = arith.mulf %395, %594 : vector<16x16xf32>
    %596 = arith.addf %560, %595 : vector<16x16xf32>
    %c8_292 = arith.constant 8 : index
    %c13_293 = arith.constant 13 : index
    %597 = memref.load %arg5[%c8_292, %c13_293] : memref<9x36xf32, #tpu.memory_space<smem>>
    %598 = vector.broadcast %597 : f32 to vector<16x16xf32>
    %599 = arith.mulf %395, %598 : vector<16x16xf32>
    %600 = arith.addf %564, %599 : vector<16x16xf32>
    %c15_i32_294 = arith.constant 15 : i32
    %601 = tpu.dynamic_rotate %395 by %c15_i32_294 dim 1 : vector<16x16xf32>, i32 -> vector<16x16xf32>
    %cst_295 = arith.constant 0.000000e+00 : f32
    %602 = vector.broadcast %cst_295 : f32 to vector<16x16xf32>
    %603 = arith.select %15, %601, %602 : vector<16x16xi1>, vector<16x16xf32>
    %c0_296 = arith.constant 0 : index
    %c14 = arith.constant 14 : index
    %604 = memref.load %arg5[%c0_296, %c14] : memref<9x36xf32, #tpu.memory_space<smem>>
    %605 = vector.broadcast %604 : f32 to vector<16x16xf32>
    %606 = arith.mulf %603, %605 : vector<16x16xf32>
    %607 = arith.addf %568, %606 : vector<16x16xf32>
    %c1_297 = arith.constant 1 : index
    %c14_298 = arith.constant 14 : index
    %608 = memref.load %arg5[%c1_297, %c14_298] : memref<9x36xf32, #tpu.memory_space<smem>>
    %609 = vector.broadcast %608 : f32 to vector<16x16xf32>
    %610 = arith.mulf %603, %609 : vector<16x16xf32>
    %611 = arith.addf %572, %610 : vector<16x16xf32>
    %c2_299 = arith.constant 2 : index
    %c14_300 = arith.constant 14 : index
    %612 = memref.load %arg5[%c2_299, %c14_300] : memref<9x36xf32, #tpu.memory_space<smem>>
    %613 = vector.broadcast %612 : f32 to vector<16x16xf32>
    %614 = arith.mulf %603, %613 : vector<16x16xf32>
    %615 = arith.addf %576, %614 : vector<16x16xf32>
    %c3_301 = arith.constant 3 : index
    %c14_302 = arith.constant 14 : index
    %616 = memref.load %arg5[%c3_301, %c14_302] : memref<9x36xf32, #tpu.memory_space<smem>>
    %617 = vector.broadcast %616 : f32 to vector<16x16xf32>
    %618 = arith.mulf %603, %617 : vector<16x16xf32>
    %619 = arith.addf %580, %618 : vector<16x16xf32>
    %c4_303 = arith.constant 4 : index
    %c14_304 = arith.constant 14 : index
    %620 = memref.load %arg5[%c4_303, %c14_304] : memref<9x36xf32, #tpu.memory_space<smem>>
    %621 = vector.broadcast %620 : f32 to vector<16x16xf32>
    %622 = arith.mulf %603, %621 : vector<16x16xf32>
    %623 = arith.addf %584, %622 : vector<16x16xf32>
    %c5_305 = arith.constant 5 : index
    %c14_306 = arith.constant 14 : index
    %624 = memref.load %arg5[%c5_305, %c14_306] : memref<9x36xf32, #tpu.memory_space<smem>>
    %625 = vector.broadcast %624 : f32 to vector<16x16xf32>
    %626 = arith.mulf %603, %625 : vector<16x16xf32>
    %627 = arith.addf %588, %626 : vector<16x16xf32>
    %c6_307 = arith.constant 6 : index
    %c14_308 = arith.constant 14 : index
    %628 = memref.load %arg5[%c6_307, %c14_308] : memref<9x36xf32, #tpu.memory_space<smem>>
    %629 = vector.broadcast %628 : f32 to vector<16x16xf32>
    %630 = arith.mulf %603, %629 : vector<16x16xf32>
    %631 = arith.addf %592, %630 : vector<16x16xf32>
    %c7_309 = arith.constant 7 : index
    %c14_310 = arith.constant 14 : index
    %632 = memref.load %arg5[%c7_309, %c14_310] : memref<9x36xf32, #tpu.memory_space<smem>>
    %633 = vector.broadcast %632 : f32 to vector<16x16xf32>
    %634 = arith.mulf %603, %633 : vector<16x16xf32>
    %635 = arith.addf %596, %634 : vector<16x16xf32>
    %c8_311 = arith.constant 8 : index
    %c14_312 = arith.constant 14 : index
    %636 = memref.load %arg5[%c8_311, %c14_312] : memref<9x36xf32, #tpu.memory_space<smem>>
    %637 = vector.broadcast %636 : f32 to vector<16x16xf32>
    %638 = arith.mulf %603, %637 : vector<16x16xf32>
    %639 = arith.addf %600, %638 : vector<16x16xf32>
    %c1_i32_313 = arith.constant 1 : i32
    %640 = tpu.dynamic_rotate %411 by %c1_i32_313 dim 1 : vector<16x16xf32>, i32 -> vector<16x16xf32>
    %cst_314 = arith.constant 0.000000e+00 : f32
    %641 = vector.broadcast %cst_314 : f32 to vector<16x16xf32>
    %642 = arith.select %13, %640, %641 : vector<16x16xi1>, vector<16x16xf32>
    %c0_315 = arith.constant 0 : index
    %c15 = arith.constant 15 : index
    %643 = memref.load %arg5[%c0_315, %c15] : memref<9x36xf32, #tpu.memory_space<smem>>
    %644 = vector.broadcast %643 : f32 to vector<16x16xf32>
    %645 = arith.mulf %642, %644 : vector<16x16xf32>
    %646 = arith.addf %607, %645 : vector<16x16xf32>
    %c1_316 = arith.constant 1 : index
    %c15_317 = arith.constant 15 : index
    %647 = memref.load %arg5[%c1_316, %c15_317] : memref<9x36xf32, #tpu.memory_space<smem>>
    %648 = vector.broadcast %647 : f32 to vector<16x16xf32>
    %649 = arith.mulf %642, %648 : vector<16x16xf32>
    %650 = arith.addf %611, %649 : vector<16x16xf32>
    %c2_318 = arith.constant 2 : index
    %c15_319 = arith.constant 15 : index
    %651 = memref.load %arg5[%c2_318, %c15_319] : memref<9x36xf32, #tpu.memory_space<smem>>
    %652 = vector.broadcast %651 : f32 to vector<16x16xf32>
    %653 = arith.mulf %642, %652 : vector<16x16xf32>
    %654 = arith.addf %615, %653 : vector<16x16xf32>
    %c3_320 = arith.constant 3 : index
    %c15_321 = arith.constant 15 : index
    %655 = memref.load %arg5[%c3_320, %c15_321] : memref<9x36xf32, #tpu.memory_space<smem>>
    %656 = vector.broadcast %655 : f32 to vector<16x16xf32>
    %657 = arith.mulf %642, %656 : vector<16x16xf32>
    %658 = arith.addf %619, %657 : vector<16x16xf32>
    %c4_322 = arith.constant 4 : index
    %c15_323 = arith.constant 15 : index
    %659 = memref.load %arg5[%c4_322, %c15_323] : memref<9x36xf32, #tpu.memory_space<smem>>
    %660 = vector.broadcast %659 : f32 to vector<16x16xf32>
    %661 = arith.mulf %642, %660 : vector<16x16xf32>
    %662 = arith.addf %623, %661 : vector<16x16xf32>
    %c5_324 = arith.constant 5 : index
    %c15_325 = arith.constant 15 : index
    %663 = memref.load %arg5[%c5_324, %c15_325] : memref<9x36xf32, #tpu.memory_space<smem>>
    %664 = vector.broadcast %663 : f32 to vector<16x16xf32>
    %665 = arith.mulf %642, %664 : vector<16x16xf32>
    %666 = arith.addf %627, %665 : vector<16x16xf32>
    %c6_326 = arith.constant 6 : index
    %c15_327 = arith.constant 15 : index
    %667 = memref.load %arg5[%c6_326, %c15_327] : memref<9x36xf32, #tpu.memory_space<smem>>
    %668 = vector.broadcast %667 : f32 to vector<16x16xf32>
    %669 = arith.mulf %642, %668 : vector<16x16xf32>
    %670 = arith.addf %631, %669 : vector<16x16xf32>
    %c7_328 = arith.constant 7 : index
    %c15_329 = arith.constant 15 : index
    %671 = memref.load %arg5[%c7_328, %c15_329] : memref<9x36xf32, #tpu.memory_space<smem>>
    %672 = vector.broadcast %671 : f32 to vector<16x16xf32>
    %673 = arith.mulf %642, %672 : vector<16x16xf32>
    %674 = arith.addf %635, %673 : vector<16x16xf32>
    %c8_330 = arith.constant 8 : index
    %c15_331 = arith.constant 15 : index
    %675 = memref.load %arg5[%c8_330, %c15_331] : memref<9x36xf32, #tpu.memory_space<smem>>
    %676 = vector.broadcast %675 : f32 to vector<16x16xf32>
    %677 = arith.mulf %642, %676 : vector<16x16xf32>
    %678 = arith.addf %639, %677 : vector<16x16xf32>
    %c0_332 = arith.constant 0 : index
    %c16 = arith.constant 16 : index
    %679 = memref.load %arg5[%c0_332, %c16] : memref<9x36xf32, #tpu.memory_space<smem>>
    %680 = vector.broadcast %679 : f32 to vector<16x16xf32>
    %681 = arith.mulf %411, %680 : vector<16x16xf32>
    %682 = arith.addf %646, %681 : vector<16x16xf32>
    %c1_333 = arith.constant 1 : index
    %c16_334 = arith.constant 16 : index
    %683 = memref.load %arg5[%c1_333, %c16_334] : memref<9x36xf32, #tpu.memory_space<smem>>
    %684 = vector.broadcast %683 : f32 to vector<16x16xf32>
    %685 = arith.mulf %411, %684 : vector<16x16xf32>
    %686 = arith.addf %650, %685 : vector<16x16xf32>
    %c2_335 = arith.constant 2 : index
    %c16_336 = arith.constant 16 : index
    %687 = memref.load %arg5[%c2_335, %c16_336] : memref<9x36xf32, #tpu.memory_space<smem>>
    %688 = vector.broadcast %687 : f32 to vector<16x16xf32>
    %689 = arith.mulf %411, %688 : vector<16x16xf32>
    %690 = arith.addf %654, %689 : vector<16x16xf32>
    %c3_337 = arith.constant 3 : index
    %c16_338 = arith.constant 16 : index
    %691 = memref.load %arg5[%c3_337, %c16_338] : memref<9x36xf32, #tpu.memory_space<smem>>
    %692 = vector.broadcast %691 : f32 to vector<16x16xf32>
    %693 = arith.mulf %411, %692 : vector<16x16xf32>
    %694 = arith.addf %658, %693 : vector<16x16xf32>
    %c4_339 = arith.constant 4 : index
    %c16_340 = arith.constant 16 : index
    %695 = memref.load %arg5[%c4_339, %c16_340] : memref<9x36xf32, #tpu.memory_space<smem>>
    %696 = vector.broadcast %695 : f32 to vector<16x16xf32>
    %697 = arith.mulf %411, %696 : vector<16x16xf32>
    %698 = arith.addf %662, %697 : vector<16x16xf32>
    %c5_341 = arith.constant 5 : index
    %c16_342 = arith.constant 16 : index
    %699 = memref.load %arg5[%c5_341, %c16_342] : memref<9x36xf32, #tpu.memory_space<smem>>
    %700 = vector.broadcast %699 : f32 to vector<16x16xf32>
    %701 = arith.mulf %411, %700 : vector<16x16xf32>
    %702 = arith.addf %666, %701 : vector<16x16xf32>
    %c6_343 = arith.constant 6 : index
    %c16_344 = arith.constant 16 : index
    %703 = memref.load %arg5[%c6_343, %c16_344] : memref<9x36xf32, #tpu.memory_space<smem>>
    %704 = vector.broadcast %703 : f32 to vector<16x16xf32>
    %705 = arith.mulf %411, %704 : vector<16x16xf32>
    %706 = arith.addf %670, %705 : vector<16x16xf32>
    %c7_345 = arith.constant 7 : index
    %c16_346 = arith.constant 16 : index
    %707 = memref.load %arg5[%c7_345, %c16_346] : memref<9x36xf32, #tpu.memory_space<smem>>
    %708 = vector.broadcast %707 : f32 to vector<16x16xf32>
    %709 = arith.mulf %411, %708 : vector<16x16xf32>
    %710 = arith.addf %674, %709 : vector<16x16xf32>
    %c8_347 = arith.constant 8 : index
    %c16_348 = arith.constant 16 : index
    %711 = memref.load %arg5[%c8_347, %c16_348] : memref<9x36xf32, #tpu.memory_space<smem>>
    %712 = vector.broadcast %711 : f32 to vector<16x16xf32>
    %713 = arith.mulf %411, %712 : vector<16x16xf32>
    %714 = arith.addf %678, %713 : vector<16x16xf32>
    %c15_i32_349 = arith.constant 15 : i32
    %715 = tpu.dynamic_rotate %411 by %c15_i32_349 dim 1 : vector<16x16xf32>, i32 -> vector<16x16xf32>
    %cst_350 = arith.constant 0.000000e+00 : f32
    %716 = vector.broadcast %cst_350 : f32 to vector<16x16xf32>
    %717 = arith.select %15, %715, %716 : vector<16x16xi1>, vector<16x16xf32>
    %c0_351 = arith.constant 0 : index
    %c17 = arith.constant 17 : index
    %718 = memref.load %arg5[%c0_351, %c17] : memref<9x36xf32, #tpu.memory_space<smem>>
    %719 = vector.broadcast %718 : f32 to vector<16x16xf32>
    %720 = arith.mulf %717, %719 : vector<16x16xf32>
    %721 = arith.addf %682, %720 : vector<16x16xf32>
    %c1_352 = arith.constant 1 : index
    %c17_353 = arith.constant 17 : index
    %722 = memref.load %arg5[%c1_352, %c17_353] : memref<9x36xf32, #tpu.memory_space<smem>>
    %723 = vector.broadcast %722 : f32 to vector<16x16xf32>
    %724 = arith.mulf %717, %723 : vector<16x16xf32>
    %725 = arith.addf %686, %724 : vector<16x16xf32>
    %c2_354 = arith.constant 2 : index
    %c17_355 = arith.constant 17 : index
    %726 = memref.load %arg5[%c2_354, %c17_355] : memref<9x36xf32, #tpu.memory_space<smem>>
    %727 = vector.broadcast %726 : f32 to vector<16x16xf32>
    %728 = arith.mulf %717, %727 : vector<16x16xf32>
    %729 = arith.addf %690, %728 : vector<16x16xf32>
    %c3_356 = arith.constant 3 : index
    %c17_357 = arith.constant 17 : index
    %730 = memref.load %arg5[%c3_356, %c17_357] : memref<9x36xf32, #tpu.memory_space<smem>>
    %731 = vector.broadcast %730 : f32 to vector<16x16xf32>
    %732 = arith.mulf %717, %731 : vector<16x16xf32>
    %733 = arith.addf %694, %732 : vector<16x16xf32>
    %c4_358 = arith.constant 4 : index
    %c17_359 = arith.constant 17 : index
    %734 = memref.load %arg5[%c4_358, %c17_359] : memref<9x36xf32, #tpu.memory_space<smem>>
    %735 = vector.broadcast %734 : f32 to vector<16x16xf32>
    %736 = arith.mulf %717, %735 : vector<16x16xf32>
    %737 = arith.addf %698, %736 : vector<16x16xf32>
    %c5_360 = arith.constant 5 : index
    %c17_361 = arith.constant 17 : index
    %738 = memref.load %arg5[%c5_360, %c17_361] : memref<9x36xf32, #tpu.memory_space<smem>>
    %739 = vector.broadcast %738 : f32 to vector<16x16xf32>
    %740 = arith.mulf %717, %739 : vector<16x16xf32>
    %741 = arith.addf %702, %740 : vector<16x16xf32>
    %c6_362 = arith.constant 6 : index
    %c17_363 = arith.constant 17 : index
    %742 = memref.load %arg5[%c6_362, %c17_363] : memref<9x36xf32, #tpu.memory_space<smem>>
    %743 = vector.broadcast %742 : f32 to vector<16x16xf32>
    %744 = arith.mulf %717, %743 : vector<16x16xf32>
    %745 = arith.addf %706, %744 : vector<16x16xf32>
    %c7_364 = arith.constant 7 : index
    %c17_365 = arith.constant 17 : index
    %746 = memref.load %arg5[%c7_364, %c17_365] : memref<9x36xf32, #tpu.memory_space<smem>>
    %747 = vector.broadcast %746 : f32 to vector<16x16xf32>
    %748 = arith.mulf %717, %747 : vector<16x16xf32>
    %749 = arith.addf %710, %748 : vector<16x16xf32>
    %c8_366 = arith.constant 8 : index
    %c17_367 = arith.constant 17 : index
    %750 = memref.load %arg5[%c8_366, %c17_367] : memref<9x36xf32, #tpu.memory_space<smem>>
    %751 = vector.broadcast %750 : f32 to vector<16x16xf32>
    %752 = arith.mulf %717, %751 : vector<16x16xf32>
    %753 = arith.addf %714, %752 : vector<16x16xf32>
    %c0_368 = arith.constant 0 : index
    %c2_369 = arith.constant 2 : index
    %c0_370 = arith.constant 0 : index
    %c0_371 = arith.constant 0 : index
    %754 = vector.load %arg2[%c0_368, %c2_369, %c0_370, %c0_371] : memref<1x4x16x16xf32, #tpu.memory_space<vmem>>, vector<1x1x16x16xf32>
    %755 = vector.shape_cast %754 : vector<1x1x16x16xf32> to vector<16x16xf32>
    %c0_372 = arith.constant 0 : index
    %c2_373 = arith.constant 2 : index
    %c7_374 = arith.constant 7 : index
    %c0_375 = arith.constant 0 : index
    %756 = vector.load %arg3[%c0_372, %c2_373, %c7_374, %c0_375] : memref<1x4x8x16xf32, #tpu.memory_space<vmem>>, vector<1x1x1x16xf32>
    %757 = vector.shape_cast %756 : vector<1x1x1x16xf32> to vector<1x16xf32>
    %758 = vector.broadcast %2 : f32 to vector<1x16xf32>
    %759 = arith.mulf %757, %758 : vector<1x16xf32>
    %c0_376 = arith.constant 0 : index
    %c2_377 = arith.constant 2 : index
    %c0_378 = arith.constant 0 : index
    %c0_379 = arith.constant 0 : index
    %760 = vector.load %arg4[%c0_376, %c2_377, %c0_378, %c0_379] : memref<1x4x8x16xf32, #tpu.memory_space<vmem>>, vector<1x1x1x16xf32>
    %761 = vector.shape_cast %760 : vector<1x1x1x16xf32> to vector<1x16xf32>
    %762 = vector.broadcast %5 : f32 to vector<1x16xf32>
    %763 = arith.mulf %761, %762 : vector<1x16xf32>
    %c1_i32_380 = arith.constant 1 : i32
    %764 = tpu.dynamic_rotate %755 by %c1_i32_380 dim 0 : vector<16x16xf32>, i32 -> vector<16x16xf32>
    %765 = vector.shape_cast %759 : vector<1x16xf32> to vector<1x16xf32>
    %766 = vector.broadcast %765 : vector<1x16xf32> to vector<16x16xf32>
    %767 = arith.select %9, %766, %764 : vector<16x16xi1>, vector<16x16xf32>
    %c15_i32_381 = arith.constant 15 : i32
    %768 = tpu.dynamic_rotate %755 by %c15_i32_381 dim 0 : vector<16x16xf32>, i32 -> vector<16x16xf32>
    %769 = vector.shape_cast %763 : vector<1x16xf32> to vector<1x16xf32>
    %770 = vector.broadcast %769 : vector<1x16xf32> to vector<16x16xf32>
    %771 = arith.select %11, %770, %768 : vector<16x16xi1>, vector<16x16xf32>
    %c1_i32_382 = arith.constant 1 : i32
    %772 = tpu.dynamic_rotate %767 by %c1_i32_382 dim 1 : vector<16x16xf32>, i32 -> vector<16x16xf32>
    %cst_383 = arith.constant 0.000000e+00 : f32
    %773 = vector.broadcast %cst_383 : f32 to vector<16x16xf32>
    %774 = arith.select %13, %772, %773 : vector<16x16xi1>, vector<16x16xf32>
    %c0_384 = arith.constant 0 : index
    %c18 = arith.constant 18 : index
    %775 = memref.load %arg5[%c0_384, %c18] : memref<9x36xf32, #tpu.memory_space<smem>>
    %776 = vector.broadcast %775 : f32 to vector<16x16xf32>
    %777 = arith.mulf %774, %776 : vector<16x16xf32>
    %778 = arith.addf %721, %777 : vector<16x16xf32>
    %c1_385 = arith.constant 1 : index
    %c18_386 = arith.constant 18 : index
    %779 = memref.load %arg5[%c1_385, %c18_386] : memref<9x36xf32, #tpu.memory_space<smem>>
    %780 = vector.broadcast %779 : f32 to vector<16x16xf32>
    %781 = arith.mulf %774, %780 : vector<16x16xf32>
    %782 = arith.addf %725, %781 : vector<16x16xf32>
    %c2_387 = arith.constant 2 : index
    %c18_388 = arith.constant 18 : index
    %783 = memref.load %arg5[%c2_387, %c18_388] : memref<9x36xf32, #tpu.memory_space<smem>>
    %784 = vector.broadcast %783 : f32 to vector<16x16xf32>
    %785 = arith.mulf %774, %784 : vector<16x16xf32>
    %786 = arith.addf %729, %785 : vector<16x16xf32>
    %c3_389 = arith.constant 3 : index
    %c18_390 = arith.constant 18 : index
    %787 = memref.load %arg5[%c3_389, %c18_390] : memref<9x36xf32, #tpu.memory_space<smem>>
    %788 = vector.broadcast %787 : f32 to vector<16x16xf32>
    %789 = arith.mulf %774, %788 : vector<16x16xf32>
    %790 = arith.addf %733, %789 : vector<16x16xf32>
    %c4_391 = arith.constant 4 : index
    %c18_392 = arith.constant 18 : index
    %791 = memref.load %arg5[%c4_391, %c18_392] : memref<9x36xf32, #tpu.memory_space<smem>>
    %792 = vector.broadcast %791 : f32 to vector<16x16xf32>
    %793 = arith.mulf %774, %792 : vector<16x16xf32>
    %794 = arith.addf %737, %793 : vector<16x16xf32>
    %c5_393 = arith.constant 5 : index
    %c18_394 = arith.constant 18 : index
    %795 = memref.load %arg5[%c5_393, %c18_394] : memref<9x36xf32, #tpu.memory_space<smem>>
    %796 = vector.broadcast %795 : f32 to vector<16x16xf32>
    %797 = arith.mulf %774, %796 : vector<16x16xf32>
    %798 = arith.addf %741, %797 : vector<16x16xf32>
    %c6_395 = arith.constant 6 : index
    %c18_396 = arith.constant 18 : index
    %799 = memref.load %arg5[%c6_395, %c18_396] : memref<9x36xf32, #tpu.memory_space<smem>>
    %800 = vector.broadcast %799 : f32 to vector<16x16xf32>
    %801 = arith.mulf %774, %800 : vector<16x16xf32>
    %802 = arith.addf %745, %801 : vector<16x16xf32>
    %c7_397 = arith.constant 7 : index
    %c18_398 = arith.constant 18 : index
    %803 = memref.load %arg5[%c7_397, %c18_398] : memref<9x36xf32, #tpu.memory_space<smem>>
    %804 = vector.broadcast %803 : f32 to vector<16x16xf32>
    %805 = arith.mulf %774, %804 : vector<16x16xf32>
    %806 = arith.addf %749, %805 : vector<16x16xf32>
    %c8_399 = arith.constant 8 : index
    %c18_400 = arith.constant 18 : index
    %807 = memref.load %arg5[%c8_399, %c18_400] : memref<9x36xf32, #tpu.memory_space<smem>>
    %808 = vector.broadcast %807 : f32 to vector<16x16xf32>
    %809 = arith.mulf %774, %808 : vector<16x16xf32>
    %810 = arith.addf %753, %809 : vector<16x16xf32>
    %c0_401 = arith.constant 0 : index
    %c19 = arith.constant 19 : index
    %811 = memref.load %arg5[%c0_401, %c19] : memref<9x36xf32, #tpu.memory_space<smem>>
    %812 = vector.broadcast %811 : f32 to vector<16x16xf32>
    %813 = arith.mulf %767, %812 : vector<16x16xf32>
    %814 = arith.addf %778, %813 : vector<16x16xf32>
    %c1_402 = arith.constant 1 : index
    %c19_403 = arith.constant 19 : index
    %815 = memref.load %arg5[%c1_402, %c19_403] : memref<9x36xf32, #tpu.memory_space<smem>>
    %816 = vector.broadcast %815 : f32 to vector<16x16xf32>
    %817 = arith.mulf %767, %816 : vector<16x16xf32>
    %818 = arith.addf %782, %817 : vector<16x16xf32>
    %c2_404 = arith.constant 2 : index
    %c19_405 = arith.constant 19 : index
    %819 = memref.load %arg5[%c2_404, %c19_405] : memref<9x36xf32, #tpu.memory_space<smem>>
    %820 = vector.broadcast %819 : f32 to vector<16x16xf32>
    %821 = arith.mulf %767, %820 : vector<16x16xf32>
    %822 = arith.addf %786, %821 : vector<16x16xf32>
    %c3_406 = arith.constant 3 : index
    %c19_407 = arith.constant 19 : index
    %823 = memref.load %arg5[%c3_406, %c19_407] : memref<9x36xf32, #tpu.memory_space<smem>>
    %824 = vector.broadcast %823 : f32 to vector<16x16xf32>
    %825 = arith.mulf %767, %824 : vector<16x16xf32>
    %826 = arith.addf %790, %825 : vector<16x16xf32>
    %c4_408 = arith.constant 4 : index
    %c19_409 = arith.constant 19 : index
    %827 = memref.load %arg5[%c4_408, %c19_409] : memref<9x36xf32, #tpu.memory_space<smem>>
    %828 = vector.broadcast %827 : f32 to vector<16x16xf32>
    %829 = arith.mulf %767, %828 : vector<16x16xf32>
    %830 = arith.addf %794, %829 : vector<16x16xf32>
    %c5_410 = arith.constant 5 : index
    %c19_411 = arith.constant 19 : index
    %831 = memref.load %arg5[%c5_410, %c19_411] : memref<9x36xf32, #tpu.memory_space<smem>>
    %832 = vector.broadcast %831 : f32 to vector<16x16xf32>
    %833 = arith.mulf %767, %832 : vector<16x16xf32>
    %834 = arith.addf %798, %833 : vector<16x16xf32>
    %c6_412 = arith.constant 6 : index
    %c19_413 = arith.constant 19 : index
    %835 = memref.load %arg5[%c6_412, %c19_413] : memref<9x36xf32, #tpu.memory_space<smem>>
    %836 = vector.broadcast %835 : f32 to vector<16x16xf32>
    %837 = arith.mulf %767, %836 : vector<16x16xf32>
    %838 = arith.addf %802, %837 : vector<16x16xf32>
    %c7_414 = arith.constant 7 : index
    %c19_415 = arith.constant 19 : index
    %839 = memref.load %arg5[%c7_414, %c19_415] : memref<9x36xf32, #tpu.memory_space<smem>>
    %840 = vector.broadcast %839 : f32 to vector<16x16xf32>
    %841 = arith.mulf %767, %840 : vector<16x16xf32>
    %842 = arith.addf %806, %841 : vector<16x16xf32>
    %c8_416 = arith.constant 8 : index
    %c19_417 = arith.constant 19 : index
    %843 = memref.load %arg5[%c8_416, %c19_417] : memref<9x36xf32, #tpu.memory_space<smem>>
    %844 = vector.broadcast %843 : f32 to vector<16x16xf32>
    %845 = arith.mulf %767, %844 : vector<16x16xf32>
    %846 = arith.addf %810, %845 : vector<16x16xf32>
    %c15_i32_418 = arith.constant 15 : i32
    %847 = tpu.dynamic_rotate %767 by %c15_i32_418 dim 1 : vector<16x16xf32>, i32 -> vector<16x16xf32>
    %cst_419 = arith.constant 0.000000e+00 : f32
    %848 = vector.broadcast %cst_419 : f32 to vector<16x16xf32>
    %849 = arith.select %15, %847, %848 : vector<16x16xi1>, vector<16x16xf32>
    %c0_420 = arith.constant 0 : index
    %c20 = arith.constant 20 : index
    %850 = memref.load %arg5[%c0_420, %c20] : memref<9x36xf32, #tpu.memory_space<smem>>
    %851 = vector.broadcast %850 : f32 to vector<16x16xf32>
    %852 = arith.mulf %849, %851 : vector<16x16xf32>
    %853 = arith.addf %814, %852 : vector<16x16xf32>
    %c1_421 = arith.constant 1 : index
    %c20_422 = arith.constant 20 : index
    %854 = memref.load %arg5[%c1_421, %c20_422] : memref<9x36xf32, #tpu.memory_space<smem>>
    %855 = vector.broadcast %854 : f32 to vector<16x16xf32>
    %856 = arith.mulf %849, %855 : vector<16x16xf32>
    %857 = arith.addf %818, %856 : vector<16x16xf32>
    %c2_423 = arith.constant 2 : index
    %c20_424 = arith.constant 20 : index
    %858 = memref.load %arg5[%c2_423, %c20_424] : memref<9x36xf32, #tpu.memory_space<smem>>
    %859 = vector.broadcast %858 : f32 to vector<16x16xf32>
    %860 = arith.mulf %849, %859 : vector<16x16xf32>
    %861 = arith.addf %822, %860 : vector<16x16xf32>
    %c3_425 = arith.constant 3 : index
    %c20_426 = arith.constant 20 : index
    %862 = memref.load %arg5[%c3_425, %c20_426] : memref<9x36xf32, #tpu.memory_space<smem>>
    %863 = vector.broadcast %862 : f32 to vector<16x16xf32>
    %864 = arith.mulf %849, %863 : vector<16x16xf32>
    %865 = arith.addf %826, %864 : vector<16x16xf32>
    %c4_427 = arith.constant 4 : index
    %c20_428 = arith.constant 20 : index
    %866 = memref.load %arg5[%c4_427, %c20_428] : memref<9x36xf32, #tpu.memory_space<smem>>
    %867 = vector.broadcast %866 : f32 to vector<16x16xf32>
    %868 = arith.mulf %849, %867 : vector<16x16xf32>
    %869 = arith.addf %830, %868 : vector<16x16xf32>
    %c5_429 = arith.constant 5 : index
    %c20_430 = arith.constant 20 : index
    %870 = memref.load %arg5[%c5_429, %c20_430] : memref<9x36xf32, #tpu.memory_space<smem>>
    %871 = vector.broadcast %870 : f32 to vector<16x16xf32>
    %872 = arith.mulf %849, %871 : vector<16x16xf32>
    %873 = arith.addf %834, %872 : vector<16x16xf32>
    %c6_431 = arith.constant 6 : index
    %c20_432 = arith.constant 20 : index
    %874 = memref.load %arg5[%c6_431, %c20_432] : memref<9x36xf32, #tpu.memory_space<smem>>
    %875 = vector.broadcast %874 : f32 to vector<16x16xf32>
    %876 = arith.mulf %849, %875 : vector<16x16xf32>
    %877 = arith.addf %838, %876 : vector<16x16xf32>
    %c7_433 = arith.constant 7 : index
    %c20_434 = arith.constant 20 : index
    %878 = memref.load %arg5[%c7_433, %c20_434] : memref<9x36xf32, #tpu.memory_space<smem>>
    %879 = vector.broadcast %878 : f32 to vector<16x16xf32>
    %880 = arith.mulf %849, %879 : vector<16x16xf32>
    %881 = arith.addf %842, %880 : vector<16x16xf32>
    %c8_435 = arith.constant 8 : index
    %c20_436 = arith.constant 20 : index
    %882 = memref.load %arg5[%c8_435, %c20_436] : memref<9x36xf32, #tpu.memory_space<smem>>
    %883 = vector.broadcast %882 : f32 to vector<16x16xf32>
    %884 = arith.mulf %849, %883 : vector<16x16xf32>
    %885 = arith.addf %846, %884 : vector<16x16xf32>
    %c1_i32_437 = arith.constant 1 : i32
    %886 = tpu.dynamic_rotate %755 by %c1_i32_437 dim 1 : vector<16x16xf32>, i32 -> vector<16x16xf32>
    %cst_438 = arith.constant 0.000000e+00 : f32
    %887 = vector.broadcast %cst_438 : f32 to vector<16x16xf32>
    %888 = arith.select %13, %886, %887 : vector<16x16xi1>, vector<16x16xf32>
    %c0_439 = arith.constant 0 : index
    %c21 = arith.constant 21 : index
    %889 = memref.load %arg5[%c0_439, %c21] : memref<9x36xf32, #tpu.memory_space<smem>>
    %890 = vector.broadcast %889 : f32 to vector<16x16xf32>
    %891 = arith.mulf %888, %890 : vector<16x16xf32>
    %892 = arith.addf %853, %891 : vector<16x16xf32>
    %c1_440 = arith.constant 1 : index
    %c21_441 = arith.constant 21 : index
    %893 = memref.load %arg5[%c1_440, %c21_441] : memref<9x36xf32, #tpu.memory_space<smem>>
    %894 = vector.broadcast %893 : f32 to vector<16x16xf32>
    %895 = arith.mulf %888, %894 : vector<16x16xf32>
    %896 = arith.addf %857, %895 : vector<16x16xf32>
    %c2_442 = arith.constant 2 : index
    %c21_443 = arith.constant 21 : index
    %897 = memref.load %arg5[%c2_442, %c21_443] : memref<9x36xf32, #tpu.memory_space<smem>>
    %898 = vector.broadcast %897 : f32 to vector<16x16xf32>
    %899 = arith.mulf %888, %898 : vector<16x16xf32>
    %900 = arith.addf %861, %899 : vector<16x16xf32>
    %c3_444 = arith.constant 3 : index
    %c21_445 = arith.constant 21 : index
    %901 = memref.load %arg5[%c3_444, %c21_445] : memref<9x36xf32, #tpu.memory_space<smem>>
    %902 = vector.broadcast %901 : f32 to vector<16x16xf32>
    %903 = arith.mulf %888, %902 : vector<16x16xf32>
    %904 = arith.addf %865, %903 : vector<16x16xf32>
    %c4_446 = arith.constant 4 : index
    %c21_447 = arith.constant 21 : index
    %905 = memref.load %arg5[%c4_446, %c21_447] : memref<9x36xf32, #tpu.memory_space<smem>>
    %906 = vector.broadcast %905 : f32 to vector<16x16xf32>
    %907 = arith.mulf %888, %906 : vector<16x16xf32>
    %908 = arith.addf %869, %907 : vector<16x16xf32>
    %c5_448 = arith.constant 5 : index
    %c21_449 = arith.constant 21 : index
    %909 = memref.load %arg5[%c5_448, %c21_449] : memref<9x36xf32, #tpu.memory_space<smem>>
    %910 = vector.broadcast %909 : f32 to vector<16x16xf32>
    %911 = arith.mulf %888, %910 : vector<16x16xf32>
    %912 = arith.addf %873, %911 : vector<16x16xf32>
    %c6_450 = arith.constant 6 : index
    %c21_451 = arith.constant 21 : index
    %913 = memref.load %arg5[%c6_450, %c21_451] : memref<9x36xf32, #tpu.memory_space<smem>>
    %914 = vector.broadcast %913 : f32 to vector<16x16xf32>
    %915 = arith.mulf %888, %914 : vector<16x16xf32>
    %916 = arith.addf %877, %915 : vector<16x16xf32>
    %c7_452 = arith.constant 7 : index
    %c21_453 = arith.constant 21 : index
    %917 = memref.load %arg5[%c7_452, %c21_453] : memref<9x36xf32, #tpu.memory_space<smem>>
    %918 = vector.broadcast %917 : f32 to vector<16x16xf32>
    %919 = arith.mulf %888, %918 : vector<16x16xf32>
    %920 = arith.addf %881, %919 : vector<16x16xf32>
    %c8_454 = arith.constant 8 : index
    %c21_455 = arith.constant 21 : index
    %921 = memref.load %arg5[%c8_454, %c21_455] : memref<9x36xf32, #tpu.memory_space<smem>>
    %922 = vector.broadcast %921 : f32 to vector<16x16xf32>
    %923 = arith.mulf %888, %922 : vector<16x16xf32>
    %924 = arith.addf %885, %923 : vector<16x16xf32>
    %c0_456 = arith.constant 0 : index
    %c22 = arith.constant 22 : index
    %925 = memref.load %arg5[%c0_456, %c22] : memref<9x36xf32, #tpu.memory_space<smem>>
    %926 = vector.broadcast %925 : f32 to vector<16x16xf32>
    %927 = arith.mulf %755, %926 : vector<16x16xf32>
    %928 = arith.addf %892, %927 : vector<16x16xf32>
    %c1_457 = arith.constant 1 : index
    %c22_458 = arith.constant 22 : index
    %929 = memref.load %arg5[%c1_457, %c22_458] : memref<9x36xf32, #tpu.memory_space<smem>>
    %930 = vector.broadcast %929 : f32 to vector<16x16xf32>
    %931 = arith.mulf %755, %930 : vector<16x16xf32>
    %932 = arith.addf %896, %931 : vector<16x16xf32>
    %c2_459 = arith.constant 2 : index
    %c22_460 = arith.constant 22 : index
    %933 = memref.load %arg5[%c2_459, %c22_460] : memref<9x36xf32, #tpu.memory_space<smem>>
    %934 = vector.broadcast %933 : f32 to vector<16x16xf32>
    %935 = arith.mulf %755, %934 : vector<16x16xf32>
    %936 = arith.addf %900, %935 : vector<16x16xf32>
    %c3_461 = arith.constant 3 : index
    %c22_462 = arith.constant 22 : index
    %937 = memref.load %arg5[%c3_461, %c22_462] : memref<9x36xf32, #tpu.memory_space<smem>>
    %938 = vector.broadcast %937 : f32 to vector<16x16xf32>
    %939 = arith.mulf %755, %938 : vector<16x16xf32>
    %940 = arith.addf %904, %939 : vector<16x16xf32>
    %c4_463 = arith.constant 4 : index
    %c22_464 = arith.constant 22 : index
    %941 = memref.load %arg5[%c4_463, %c22_464] : memref<9x36xf32, #tpu.memory_space<smem>>
    %942 = vector.broadcast %941 : f32 to vector<16x16xf32>
    %943 = arith.mulf %755, %942 : vector<16x16xf32>
    %944 = arith.addf %908, %943 : vector<16x16xf32>
    %c5_465 = arith.constant 5 : index
    %c22_466 = arith.constant 22 : index
    %945 = memref.load %arg5[%c5_465, %c22_466] : memref<9x36xf32, #tpu.memory_space<smem>>
    %946 = vector.broadcast %945 : f32 to vector<16x16xf32>
    %947 = arith.mulf %755, %946 : vector<16x16xf32>
    %948 = arith.addf %912, %947 : vector<16x16xf32>
    %c6_467 = arith.constant 6 : index
    %c22_468 = arith.constant 22 : index
    %949 = memref.load %arg5[%c6_467, %c22_468] : memref<9x36xf32, #tpu.memory_space<smem>>
    %950 = vector.broadcast %949 : f32 to vector<16x16xf32>
    %951 = arith.mulf %755, %950 : vector<16x16xf32>
    %952 = arith.addf %916, %951 : vector<16x16xf32>
    %c7_469 = arith.constant 7 : index
    %c22_470 = arith.constant 22 : index
    %953 = memref.load %arg5[%c7_469, %c22_470] : memref<9x36xf32, #tpu.memory_space<smem>>
    %954 = vector.broadcast %953 : f32 to vector<16x16xf32>
    %955 = arith.mulf %755, %954 : vector<16x16xf32>
    %956 = arith.addf %920, %955 : vector<16x16xf32>
    %c8_471 = arith.constant 8 : index
    %c22_472 = arith.constant 22 : index
    %957 = memref.load %arg5[%c8_471, %c22_472] : memref<9x36xf32, #tpu.memory_space<smem>>
    %958 = vector.broadcast %957 : f32 to vector<16x16xf32>
    %959 = arith.mulf %755, %958 : vector<16x16xf32>
    %960 = arith.addf %924, %959 : vector<16x16xf32>
    %c15_i32_473 = arith.constant 15 : i32
    %961 = tpu.dynamic_rotate %755 by %c15_i32_473 dim 1 : vector<16x16xf32>, i32 -> vector<16x16xf32>
    %cst_474 = arith.constant 0.000000e+00 : f32
    %962 = vector.broadcast %cst_474 : f32 to vector<16x16xf32>
    %963 = arith.select %15, %961, %962 : vector<16x16xi1>, vector<16x16xf32>
    %c0_475 = arith.constant 0 : index
    %c23 = arith.constant 23 : index
    %964 = memref.load %arg5[%c0_475, %c23] : memref<9x36xf32, #tpu.memory_space<smem>>
    %965 = vector.broadcast %964 : f32 to vector<16x16xf32>
    %966 = arith.mulf %963, %965 : vector<16x16xf32>
    %967 = arith.addf %928, %966 : vector<16x16xf32>
    %c1_476 = arith.constant 1 : index
    %c23_477 = arith.constant 23 : index
    %968 = memref.load %arg5[%c1_476, %c23_477] : memref<9x36xf32, #tpu.memory_space<smem>>
    %969 = vector.broadcast %968 : f32 to vector<16x16xf32>
    %970 = arith.mulf %963, %969 : vector<16x16xf32>
    %971 = arith.addf %932, %970 : vector<16x16xf32>
    %c2_478 = arith.constant 2 : index
    %c23_479 = arith.constant 23 : index
    %972 = memref.load %arg5[%c2_478, %c23_479] : memref<9x36xf32, #tpu.memory_space<smem>>
    %973 = vector.broadcast %972 : f32 to vector<16x16xf32>
    %974 = arith.mulf %963, %973 : vector<16x16xf32>
    %975 = arith.addf %936, %974 : vector<16x16xf32>
    %c3_480 = arith.constant 3 : index
    %c23_481 = arith.constant 23 : index
    %976 = memref.load %arg5[%c3_480, %c23_481] : memref<9x36xf32, #tpu.memory_space<smem>>
    %977 = vector.broadcast %976 : f32 to vector<16x16xf32>
    %978 = arith.mulf %963, %977 : vector<16x16xf32>
    %979 = arith.addf %940, %978 : vector<16x16xf32>
    %c4_482 = arith.constant 4 : index
    %c23_483 = arith.constant 23 : index
    %980 = memref.load %arg5[%c4_482, %c23_483] : memref<9x36xf32, #tpu.memory_space<smem>>
    %981 = vector.broadcast %980 : f32 to vector<16x16xf32>
    %982 = arith.mulf %963, %981 : vector<16x16xf32>
    %983 = arith.addf %944, %982 : vector<16x16xf32>
    %c5_484 = arith.constant 5 : index
    %c23_485 = arith.constant 23 : index
    %984 = memref.load %arg5[%c5_484, %c23_485] : memref<9x36xf32, #tpu.memory_space<smem>>
    %985 = vector.broadcast %984 : f32 to vector<16x16xf32>
    %986 = arith.mulf %963, %985 : vector<16x16xf32>
    %987 = arith.addf %948, %986 : vector<16x16xf32>
    %c6_486 = arith.constant 6 : index
    %c23_487 = arith.constant 23 : index
    %988 = memref.load %arg5[%c6_486, %c23_487] : memref<9x36xf32, #tpu.memory_space<smem>>
    %989 = vector.broadcast %988 : f32 to vector<16x16xf32>
    %990 = arith.mulf %963, %989 : vector<16x16xf32>
    %991 = arith.addf %952, %990 : vector<16x16xf32>
    %c7_488 = arith.constant 7 : index
    %c23_489 = arith.constant 23 : index
    %992 = memref.load %arg5[%c7_488, %c23_489] : memref<9x36xf32, #tpu.memory_space<smem>>
    %993 = vector.broadcast %992 : f32 to vector<16x16xf32>
    %994 = arith.mulf %963, %993 : vector<16x16xf32>
    %995 = arith.addf %956, %994 : vector<16x16xf32>
    %c8_490 = arith.constant 8 : index
    %c23_491 = arith.constant 23 : index
    %996 = memref.load %arg5[%c8_490, %c23_491] : memref<9x36xf32, #tpu.memory_space<smem>>
    %997 = vector.broadcast %996 : f32 to vector<16x16xf32>
    %998 = arith.mulf %963, %997 : vector<16x16xf32>
    %999 = arith.addf %960, %998 : vector<16x16xf32>
    %c1_i32_492 = arith.constant 1 : i32
    %1000 = tpu.dynamic_rotate %771 by %c1_i32_492 dim 1 : vector<16x16xf32>, i32 -> vector<16x16xf32>
    %cst_493 = arith.constant 0.000000e+00 : f32
    %1001 = vector.broadcast %cst_493 : f32 to vector<16x16xf32>
    %1002 = arith.select %13, %1000, %1001 : vector<16x16xi1>, vector<16x16xf32>
    %c0_494 = arith.constant 0 : index
    %c24 = arith.constant 24 : index
    %1003 = memref.load %arg5[%c0_494, %c24] : memref<9x36xf32, #tpu.memory_space<smem>>
    %1004 = vector.broadcast %1003 : f32 to vector<16x16xf32>
    %1005 = arith.mulf %1002, %1004 : vector<16x16xf32>
    %1006 = arith.addf %967, %1005 : vector<16x16xf32>
    %c1_495 = arith.constant 1 : index
    %c24_496 = arith.constant 24 : index
    %1007 = memref.load %arg5[%c1_495, %c24_496] : memref<9x36xf32, #tpu.memory_space<smem>>
    %1008 = vector.broadcast %1007 : f32 to vector<16x16xf32>
    %1009 = arith.mulf %1002, %1008 : vector<16x16xf32>
    %1010 = arith.addf %971, %1009 : vector<16x16xf32>
    %c2_497 = arith.constant 2 : index
    %c24_498 = arith.constant 24 : index
    %1011 = memref.load %arg5[%c2_497, %c24_498] : memref<9x36xf32, #tpu.memory_space<smem>>
    %1012 = vector.broadcast %1011 : f32 to vector<16x16xf32>
    %1013 = arith.mulf %1002, %1012 : vector<16x16xf32>
    %1014 = arith.addf %975, %1013 : vector<16x16xf32>
    %c3_499 = arith.constant 3 : index
    %c24_500 = arith.constant 24 : index
    %1015 = memref.load %arg5[%c3_499, %c24_500] : memref<9x36xf32, #tpu.memory_space<smem>>
    %1016 = vector.broadcast %1015 : f32 to vector<16x16xf32>
    %1017 = arith.mulf %1002, %1016 : vector<16x16xf32>
    %1018 = arith.addf %979, %1017 : vector<16x16xf32>
    %c4_501 = arith.constant 4 : index
    %c24_502 = arith.constant 24 : index
    %1019 = memref.load %arg5[%c4_501, %c24_502] : memref<9x36xf32, #tpu.memory_space<smem>>
    %1020 = vector.broadcast %1019 : f32 to vector<16x16xf32>
    %1021 = arith.mulf %1002, %1020 : vector<16x16xf32>
    %1022 = arith.addf %983, %1021 : vector<16x16xf32>
    %c5_503 = arith.constant 5 : index
    %c24_504 = arith.constant 24 : index
    %1023 = memref.load %arg5[%c5_503, %c24_504] : memref<9x36xf32, #tpu.memory_space<smem>>
    %1024 = vector.broadcast %1023 : f32 to vector<16x16xf32>
    %1025 = arith.mulf %1002, %1024 : vector<16x16xf32>
    %1026 = arith.addf %987, %1025 : vector<16x16xf32>
    %c6_505 = arith.constant 6 : index
    %c24_506 = arith.constant 24 : index
    %1027 = memref.load %arg5[%c6_505, %c24_506] : memref<9x36xf32, #tpu.memory_space<smem>>
    %1028 = vector.broadcast %1027 : f32 to vector<16x16xf32>
    %1029 = arith.mulf %1002, %1028 : vector<16x16xf32>
    %1030 = arith.addf %991, %1029 : vector<16x16xf32>
    %c7_507 = arith.constant 7 : index
    %c24_508 = arith.constant 24 : index
    %1031 = memref.load %arg5[%c7_507, %c24_508] : memref<9x36xf32, #tpu.memory_space<smem>>
    %1032 = vector.broadcast %1031 : f32 to vector<16x16xf32>
    %1033 = arith.mulf %1002, %1032 : vector<16x16xf32>
    %1034 = arith.addf %995, %1033 : vector<16x16xf32>
    %c8_509 = arith.constant 8 : index
    %c24_510 = arith.constant 24 : index
    %1035 = memref.load %arg5[%c8_509, %c24_510] : memref<9x36xf32, #tpu.memory_space<smem>>
    %1036 = vector.broadcast %1035 : f32 to vector<16x16xf32>
    %1037 = arith.mulf %1002, %1036 : vector<16x16xf32>
    %1038 = arith.addf %999, %1037 : vector<16x16xf32>
    %c0_511 = arith.constant 0 : index
    %c25 = arith.constant 25 : index
    %1039 = memref.load %arg5[%c0_511, %c25] : memref<9x36xf32, #tpu.memory_space<smem>>
    %1040 = vector.broadcast %1039 : f32 to vector<16x16xf32>
    %1041 = arith.mulf %771, %1040 : vector<16x16xf32>
    %1042 = arith.addf %1006, %1041 : vector<16x16xf32>
    %c1_512 = arith.constant 1 : index
    %c25_513 = arith.constant 25 : index
    %1043 = memref.load %arg5[%c1_512, %c25_513] : memref<9x36xf32, #tpu.memory_space<smem>>
    %1044 = vector.broadcast %1043 : f32 to vector<16x16xf32>
    %1045 = arith.mulf %771, %1044 : vector<16x16xf32>
    %1046 = arith.addf %1010, %1045 : vector<16x16xf32>
    %c2_514 = arith.constant 2 : index
    %c25_515 = arith.constant 25 : index
    %1047 = memref.load %arg5[%c2_514, %c25_515] : memref<9x36xf32, #tpu.memory_space<smem>>
    %1048 = vector.broadcast %1047 : f32 to vector<16x16xf32>
    %1049 = arith.mulf %771, %1048 : vector<16x16xf32>
    %1050 = arith.addf %1014, %1049 : vector<16x16xf32>
    %c3_516 = arith.constant 3 : index
    %c25_517 = arith.constant 25 : index
    %1051 = memref.load %arg5[%c3_516, %c25_517] : memref<9x36xf32, #tpu.memory_space<smem>>
    %1052 = vector.broadcast %1051 : f32 to vector<16x16xf32>
    %1053 = arith.mulf %771, %1052 : vector<16x16xf32>
    %1054 = arith.addf %1018, %1053 : vector<16x16xf32>
    %c4_518 = arith.constant 4 : index
    %c25_519 = arith.constant 25 : index
    %1055 = memref.load %arg5[%c4_518, %c25_519] : memref<9x36xf32, #tpu.memory_space<smem>>
    %1056 = vector.broadcast %1055 : f32 to vector<16x16xf32>
    %1057 = arith.mulf %771, %1056 : vector<16x16xf32>
    %1058 = arith.addf %1022, %1057 : vector<16x16xf32>
    %c5_520 = arith.constant 5 : index
    %c25_521 = arith.constant 25 : index
    %1059 = memref.load %arg5[%c5_520, %c25_521] : memref<9x36xf32, #tpu.memory_space<smem>>
    %1060 = vector.broadcast %1059 : f32 to vector<16x16xf32>
    %1061 = arith.mulf %771, %1060 : vector<16x16xf32>
    %1062 = arith.addf %1026, %1061 : vector<16x16xf32>
    %c6_522 = arith.constant 6 : index
    %c25_523 = arith.constant 25 : index
    %1063 = memref.load %arg5[%c6_522, %c25_523] : memref<9x36xf32, #tpu.memory_space<smem>>
    %1064 = vector.broadcast %1063 : f32 to vector<16x16xf32>
    %1065 = arith.mulf %771, %1064 : vector<16x16xf32>
    %1066 = arith.addf %1030, %1065 : vector<16x16xf32>
    %c7_524 = arith.constant 7 : index
    %c25_525 = arith.constant 25 : index
    %1067 = memref.load %arg5[%c7_524, %c25_525] : memref<9x36xf32, #tpu.memory_space<smem>>
    %1068 = vector.broadcast %1067 : f32 to vector<16x16xf32>
    %1069 = arith.mulf %771, %1068 : vector<16x16xf32>
    %1070 = arith.addf %1034, %1069 : vector<16x16xf32>
    %c8_526 = arith.constant 8 : index
    %c25_527 = arith.constant 25 : index
    %1071 = memref.load %arg5[%c8_526, %c25_527] : memref<9x36xf32, #tpu.memory_space<smem>>
    %1072 = vector.broadcast %1071 : f32 to vector<16x16xf32>
    %1073 = arith.mulf %771, %1072 : vector<16x16xf32>
    %1074 = arith.addf %1038, %1073 : vector<16x16xf32>
    %c15_i32_528 = arith.constant 15 : i32
    %1075 = tpu.dynamic_rotate %771 by %c15_i32_528 dim 1 : vector<16x16xf32>, i32 -> vector<16x16xf32>
    %cst_529 = arith.constant 0.000000e+00 : f32
    %1076 = vector.broadcast %cst_529 : f32 to vector<16x16xf32>
    %1077 = arith.select %15, %1075, %1076 : vector<16x16xi1>, vector<16x16xf32>
    %c0_530 = arith.constant 0 : index
    %c26 = arith.constant 26 : index
    %1078 = memref.load %arg5[%c0_530, %c26] : memref<9x36xf32, #tpu.memory_space<smem>>
    %1079 = vector.broadcast %1078 : f32 to vector<16x16xf32>
    %1080 = arith.mulf %1077, %1079 : vector<16x16xf32>
    %1081 = arith.addf %1042, %1080 : vector<16x16xf32>
    %c1_531 = arith.constant 1 : index
    %c26_532 = arith.constant 26 : index
    %1082 = memref.load %arg5[%c1_531, %c26_532] : memref<9x36xf32, #tpu.memory_space<smem>>
    %1083 = vector.broadcast %1082 : f32 to vector<16x16xf32>
    %1084 = arith.mulf %1077, %1083 : vector<16x16xf32>
    %1085 = arith.addf %1046, %1084 : vector<16x16xf32>
    %c2_533 = arith.constant 2 : index
    %c26_534 = arith.constant 26 : index
    %1086 = memref.load %arg5[%c2_533, %c26_534] : memref<9x36xf32, #tpu.memory_space<smem>>
    %1087 = vector.broadcast %1086 : f32 to vector<16x16xf32>
    %1088 = arith.mulf %1077, %1087 : vector<16x16xf32>
    %1089 = arith.addf %1050, %1088 : vector<16x16xf32>
    %c3_535 = arith.constant 3 : index
    %c26_536 = arith.constant 26 : index
    %1090 = memref.load %arg5[%c3_535, %c26_536] : memref<9x36xf32, #tpu.memory_space<smem>>
    %1091 = vector.broadcast %1090 : f32 to vector<16x16xf32>
    %1092 = arith.mulf %1077, %1091 : vector<16x16xf32>
    %1093 = arith.addf %1054, %1092 : vector<16x16xf32>
    %c4_537 = arith.constant 4 : index
    %c26_538 = arith.constant 26 : index
    %1094 = memref.load %arg5[%c4_537, %c26_538] : memref<9x36xf32, #tpu.memory_space<smem>>
    %1095 = vector.broadcast %1094 : f32 to vector<16x16xf32>
    %1096 = arith.mulf %1077, %1095 : vector<16x16xf32>
    %1097 = arith.addf %1058, %1096 : vector<16x16xf32>
    %c5_539 = arith.constant 5 : index
    %c26_540 = arith.constant 26 : index
    %1098 = memref.load %arg5[%c5_539, %c26_540] : memref<9x36xf32, #tpu.memory_space<smem>>
    %1099 = vector.broadcast %1098 : f32 to vector<16x16xf32>
    %1100 = arith.mulf %1077, %1099 : vector<16x16xf32>
    %1101 = arith.addf %1062, %1100 : vector<16x16xf32>
    %c6_541 = arith.constant 6 : index
    %c26_542 = arith.constant 26 : index
    %1102 = memref.load %arg5[%c6_541, %c26_542] : memref<9x36xf32, #tpu.memory_space<smem>>
    %1103 = vector.broadcast %1102 : f32 to vector<16x16xf32>
    %1104 = arith.mulf %1077, %1103 : vector<16x16xf32>
    %1105 = arith.addf %1066, %1104 : vector<16x16xf32>
    %c7_543 = arith.constant 7 : index
    %c26_544 = arith.constant 26 : index
    %1106 = memref.load %arg5[%c7_543, %c26_544] : memref<9x36xf32, #tpu.memory_space<smem>>
    %1107 = vector.broadcast %1106 : f32 to vector<16x16xf32>
    %1108 = arith.mulf %1077, %1107 : vector<16x16xf32>
    %1109 = arith.addf %1070, %1108 : vector<16x16xf32>
    %c8_545 = arith.constant 8 : index
    %c26_546 = arith.constant 26 : index
    %1110 = memref.load %arg5[%c8_545, %c26_546] : memref<9x36xf32, #tpu.memory_space<smem>>
    %1111 = vector.broadcast %1110 : f32 to vector<16x16xf32>
    %1112 = arith.mulf %1077, %1111 : vector<16x16xf32>
    %1113 = arith.addf %1074, %1112 : vector<16x16xf32>
    %c0_547 = arith.constant 0 : index
    %c3_548 = arith.constant 3 : index
    %c0_549 = arith.constant 0 : index
    %c0_550 = arith.constant 0 : index
    %1114 = vector.load %arg2[%c0_547, %c3_548, %c0_549, %c0_550] : memref<1x4x16x16xf32, #tpu.memory_space<vmem>>, vector<1x1x16x16xf32>
    %1115 = vector.shape_cast %1114 : vector<1x1x16x16xf32> to vector<16x16xf32>
    %c0_551 = arith.constant 0 : index
    %c3_552 = arith.constant 3 : index
    %c7_553 = arith.constant 7 : index
    %c0_554 = arith.constant 0 : index
    %1116 = vector.load %arg3[%c0_551, %c3_552, %c7_553, %c0_554] : memref<1x4x8x16xf32, #tpu.memory_space<vmem>>, vector<1x1x1x16xf32>
    %1117 = vector.shape_cast %1116 : vector<1x1x1x16xf32> to vector<1x16xf32>
    %1118 = vector.broadcast %2 : f32 to vector<1x16xf32>
    %1119 = arith.mulf %1117, %1118 : vector<1x16xf32>
    %c0_555 = arith.constant 0 : index
    %c3_556 = arith.constant 3 : index
    %c0_557 = arith.constant 0 : index
    %c0_558 = arith.constant 0 : index
    %1120 = vector.load %arg4[%c0_555, %c3_556, %c0_557, %c0_558] : memref<1x4x8x16xf32, #tpu.memory_space<vmem>>, vector<1x1x1x16xf32>
    %1121 = vector.shape_cast %1120 : vector<1x1x1x16xf32> to vector<1x16xf32>
    %1122 = vector.broadcast %5 : f32 to vector<1x16xf32>
    %1123 = arith.mulf %1121, %1122 : vector<1x16xf32>
    %c1_i32_559 = arith.constant 1 : i32
    %1124 = tpu.dynamic_rotate %1115 by %c1_i32_559 dim 0 : vector<16x16xf32>, i32 -> vector<16x16xf32>
    %1125 = vector.shape_cast %1119 : vector<1x16xf32> to vector<1x16xf32>
    %1126 = vector.broadcast %1125 : vector<1x16xf32> to vector<16x16xf32>
    %1127 = arith.select %9, %1126, %1124 : vector<16x16xi1>, vector<16x16xf32>
    %c15_i32_560 = arith.constant 15 : i32
    %1128 = tpu.dynamic_rotate %1115 by %c15_i32_560 dim 0 : vector<16x16xf32>, i32 -> vector<16x16xf32>
    %1129 = vector.shape_cast %1123 : vector<1x16xf32> to vector<1x16xf32>
    %1130 = vector.broadcast %1129 : vector<1x16xf32> to vector<16x16xf32>
    %1131 = arith.select %11, %1130, %1128 : vector<16x16xi1>, vector<16x16xf32>
    %c1_i32_561 = arith.constant 1 : i32
    %1132 = tpu.dynamic_rotate %1127 by %c1_i32_561 dim 1 : vector<16x16xf32>, i32 -> vector<16x16xf32>
    %cst_562 = arith.constant 0.000000e+00 : f32
    %1133 = vector.broadcast %cst_562 : f32 to vector<16x16xf32>
    %1134 = arith.select %13, %1132, %1133 : vector<16x16xi1>, vector<16x16xf32>
    %c0_563 = arith.constant 0 : index
    %c27 = arith.constant 27 : index
    %1135 = memref.load %arg5[%c0_563, %c27] : memref<9x36xf32, #tpu.memory_space<smem>>
    %1136 = vector.broadcast %1135 : f32 to vector<16x16xf32>
    %1137 = arith.mulf %1134, %1136 : vector<16x16xf32>
    %1138 = arith.addf %1081, %1137 : vector<16x16xf32>
    %c1_564 = arith.constant 1 : index
    %c27_565 = arith.constant 27 : index
    %1139 = memref.load %arg5[%c1_564, %c27_565] : memref<9x36xf32, #tpu.memory_space<smem>>
    %1140 = vector.broadcast %1139 : f32 to vector<16x16xf32>
    %1141 = arith.mulf %1134, %1140 : vector<16x16xf32>
    %1142 = arith.addf %1085, %1141 : vector<16x16xf32>
    %c2_566 = arith.constant 2 : index
    %c27_567 = arith.constant 27 : index
    %1143 = memref.load %arg5[%c2_566, %c27_567] : memref<9x36xf32, #tpu.memory_space<smem>>
    %1144 = vector.broadcast %1143 : f32 to vector<16x16xf32>
    %1145 = arith.mulf %1134, %1144 : vector<16x16xf32>
    %1146 = arith.addf %1089, %1145 : vector<16x16xf32>
    %c3_568 = arith.constant 3 : index
    %c27_569 = arith.constant 27 : index
    %1147 = memref.load %arg5[%c3_568, %c27_569] : memref<9x36xf32, #tpu.memory_space<smem>>
    %1148 = vector.broadcast %1147 : f32 to vector<16x16xf32>
    %1149 = arith.mulf %1134, %1148 : vector<16x16xf32>
    %1150 = arith.addf %1093, %1149 : vector<16x16xf32>
    %c4_570 = arith.constant 4 : index
    %c27_571 = arith.constant 27 : index
    %1151 = memref.load %arg5[%c4_570, %c27_571] : memref<9x36xf32, #tpu.memory_space<smem>>
    %1152 = vector.broadcast %1151 : f32 to vector<16x16xf32>
    %1153 = arith.mulf %1134, %1152 : vector<16x16xf32>
    %1154 = arith.addf %1097, %1153 : vector<16x16xf32>
    %c5_572 = arith.constant 5 : index
    %c27_573 = arith.constant 27 : index
    %1155 = memref.load %arg5[%c5_572, %c27_573] : memref<9x36xf32, #tpu.memory_space<smem>>
    %1156 = vector.broadcast %1155 : f32 to vector<16x16xf32>
    %1157 = arith.mulf %1134, %1156 : vector<16x16xf32>
    %1158 = arith.addf %1101, %1157 : vector<16x16xf32>
    %c6_574 = arith.constant 6 : index
    %c27_575 = arith.constant 27 : index
    %1159 = memref.load %arg5[%c6_574, %c27_575] : memref<9x36xf32, #tpu.memory_space<smem>>
    %1160 = vector.broadcast %1159 : f32 to vector<16x16xf32>
    %1161 = arith.mulf %1134, %1160 : vector<16x16xf32>
    %1162 = arith.addf %1105, %1161 : vector<16x16xf32>
    %c7_576 = arith.constant 7 : index
    %c27_577 = arith.constant 27 : index
    %1163 = memref.load %arg5[%c7_576, %c27_577] : memref<9x36xf32, #tpu.memory_space<smem>>
    %1164 = vector.broadcast %1163 : f32 to vector<16x16xf32>
    %1165 = arith.mulf %1134, %1164 : vector<16x16xf32>
    %1166 = arith.addf %1109, %1165 : vector<16x16xf32>
    %c8_578 = arith.constant 8 : index
    %c27_579 = arith.constant 27 : index
    %1167 = memref.load %arg5[%c8_578, %c27_579] : memref<9x36xf32, #tpu.memory_space<smem>>
    %1168 = vector.broadcast %1167 : f32 to vector<16x16xf32>
    %1169 = arith.mulf %1134, %1168 : vector<16x16xf32>
    %1170 = arith.addf %1113, %1169 : vector<16x16xf32>
    %c0_580 = arith.constant 0 : index
    %c28 = arith.constant 28 : index
    %1171 = memref.load %arg5[%c0_580, %c28] : memref<9x36xf32, #tpu.memory_space<smem>>
    %1172 = vector.broadcast %1171 : f32 to vector<16x16xf32>
    %1173 = arith.mulf %1127, %1172 : vector<16x16xf32>
    %1174 = arith.addf %1138, %1173 : vector<16x16xf32>
    %c1_581 = arith.constant 1 : index
    %c28_582 = arith.constant 28 : index
    %1175 = memref.load %arg5[%c1_581, %c28_582] : memref<9x36xf32, #tpu.memory_space<smem>>
    %1176 = vector.broadcast %1175 : f32 to vector<16x16xf32>
    %1177 = arith.mulf %1127, %1176 : vector<16x16xf32>
    %1178 = arith.addf %1142, %1177 : vector<16x16xf32>
    %c2_583 = arith.constant 2 : index
    %c28_584 = arith.constant 28 : index
    %1179 = memref.load %arg5[%c2_583, %c28_584] : memref<9x36xf32, #tpu.memory_space<smem>>
    %1180 = vector.broadcast %1179 : f32 to vector<16x16xf32>
    %1181 = arith.mulf %1127, %1180 : vector<16x16xf32>
    %1182 = arith.addf %1146, %1181 : vector<16x16xf32>
    %c3_585 = arith.constant 3 : index
    %c28_586 = arith.constant 28 : index
    %1183 = memref.load %arg5[%c3_585, %c28_586] : memref<9x36xf32, #tpu.memory_space<smem>>
    %1184 = vector.broadcast %1183 : f32 to vector<16x16xf32>
    %1185 = arith.mulf %1127, %1184 : vector<16x16xf32>
    %1186 = arith.addf %1150, %1185 : vector<16x16xf32>
    %c4_587 = arith.constant 4 : index
    %c28_588 = arith.constant 28 : index
    %1187 = memref.load %arg5[%c4_587, %c28_588] : memref<9x36xf32, #tpu.memory_space<smem>>
    %1188 = vector.broadcast %1187 : f32 to vector<16x16xf32>
    %1189 = arith.mulf %1127, %1188 : vector<16x16xf32>
    %1190 = arith.addf %1154, %1189 : vector<16x16xf32>
    %c5_589 = arith.constant 5 : index
    %c28_590 = arith.constant 28 : index
    %1191 = memref.load %arg5[%c5_589, %c28_590] : memref<9x36xf32, #tpu.memory_space<smem>>
    %1192 = vector.broadcast %1191 : f32 to vector<16x16xf32>
    %1193 = arith.mulf %1127, %1192 : vector<16x16xf32>
    %1194 = arith.addf %1158, %1193 : vector<16x16xf32>
    %c6_591 = arith.constant 6 : index
    %c28_592 = arith.constant 28 : index
    %1195 = memref.load %arg5[%c6_591, %c28_592] : memref<9x36xf32, #tpu.memory_space<smem>>
    %1196 = vector.broadcast %1195 : f32 to vector<16x16xf32>
    %1197 = arith.mulf %1127, %1196 : vector<16x16xf32>
    %1198 = arith.addf %1162, %1197 : vector<16x16xf32>
    %c7_593 = arith.constant 7 : index
    %c28_594 = arith.constant 28 : index
    %1199 = memref.load %arg5[%c7_593, %c28_594] : memref<9x36xf32, #tpu.memory_space<smem>>
    %1200 = vector.broadcast %1199 : f32 to vector<16x16xf32>
    %1201 = arith.mulf %1127, %1200 : vector<16x16xf32>
    %1202 = arith.addf %1166, %1201 : vector<16x16xf32>
    %c8_595 = arith.constant 8 : index
    %c28_596 = arith.constant 28 : index
    %1203 = memref.load %arg5[%c8_595, %c28_596] : memref<9x36xf32, #tpu.memory_space<smem>>
    %1204 = vector.broadcast %1203 : f32 to vector<16x16xf32>
    %1205 = arith.mulf %1127, %1204 : vector<16x16xf32>
    %1206 = arith.addf %1170, %1205 : vector<16x16xf32>
    %c15_i32_597 = arith.constant 15 : i32
    %1207 = tpu.dynamic_rotate %1127 by %c15_i32_597 dim 1 : vector<16x16xf32>, i32 -> vector<16x16xf32>
    %cst_598 = arith.constant 0.000000e+00 : f32
    %1208 = vector.broadcast %cst_598 : f32 to vector<16x16xf32>
    %1209 = arith.select %15, %1207, %1208 : vector<16x16xi1>, vector<16x16xf32>
    %c0_599 = arith.constant 0 : index
    %c29 = arith.constant 29 : index
    %1210 = memref.load %arg5[%c0_599, %c29] : memref<9x36xf32, #tpu.memory_space<smem>>
    %1211 = vector.broadcast %1210 : f32 to vector<16x16xf32>
    %1212 = arith.mulf %1209, %1211 : vector<16x16xf32>
    %1213 = arith.addf %1174, %1212 : vector<16x16xf32>
    %c1_600 = arith.constant 1 : index
    %c29_601 = arith.constant 29 : index
    %1214 = memref.load %arg5[%c1_600, %c29_601] : memref<9x36xf32, #tpu.memory_space<smem>>
    %1215 = vector.broadcast %1214 : f32 to vector<16x16xf32>
    %1216 = arith.mulf %1209, %1215 : vector<16x16xf32>
    %1217 = arith.addf %1178, %1216 : vector<16x16xf32>
    %c2_602 = arith.constant 2 : index
    %c29_603 = arith.constant 29 : index
    %1218 = memref.load %arg5[%c2_602, %c29_603] : memref<9x36xf32, #tpu.memory_space<smem>>
    %1219 = vector.broadcast %1218 : f32 to vector<16x16xf32>
    %1220 = arith.mulf %1209, %1219 : vector<16x16xf32>
    %1221 = arith.addf %1182, %1220 : vector<16x16xf32>
    %c3_604 = arith.constant 3 : index
    %c29_605 = arith.constant 29 : index
    %1222 = memref.load %arg5[%c3_604, %c29_605] : memref<9x36xf32, #tpu.memory_space<smem>>
    %1223 = vector.broadcast %1222 : f32 to vector<16x16xf32>
    %1224 = arith.mulf %1209, %1223 : vector<16x16xf32>
    %1225 = arith.addf %1186, %1224 : vector<16x16xf32>
    %c4_606 = arith.constant 4 : index
    %c29_607 = arith.constant 29 : index
    %1226 = memref.load %arg5[%c4_606, %c29_607] : memref<9x36xf32, #tpu.memory_space<smem>>
    %1227 = vector.broadcast %1226 : f32 to vector<16x16xf32>
    %1228 = arith.mulf %1209, %1227 : vector<16x16xf32>
    %1229 = arith.addf %1190, %1228 : vector<16x16xf32>
    %c5_608 = arith.constant 5 : index
    %c29_609 = arith.constant 29 : index
    %1230 = memref.load %arg5[%c5_608, %c29_609] : memref<9x36xf32, #tpu.memory_space<smem>>
    %1231 = vector.broadcast %1230 : f32 to vector<16x16xf32>
    %1232 = arith.mulf %1209, %1231 : vector<16x16xf32>
    %1233 = arith.addf %1194, %1232 : vector<16x16xf32>
    %c6_610 = arith.constant 6 : index
    %c29_611 = arith.constant 29 : index
    %1234 = memref.load %arg5[%c6_610, %c29_611] : memref<9x36xf32, #tpu.memory_space<smem>>
    %1235 = vector.broadcast %1234 : f32 to vector<16x16xf32>
    %1236 = arith.mulf %1209, %1235 : vector<16x16xf32>
    %1237 = arith.addf %1198, %1236 : vector<16x16xf32>
    %c7_612 = arith.constant 7 : index
    %c29_613 = arith.constant 29 : index
    %1238 = memref.load %arg5[%c7_612, %c29_613] : memref<9x36xf32, #tpu.memory_space<smem>>
    %1239 = vector.broadcast %1238 : f32 to vector<16x16xf32>
    %1240 = arith.mulf %1209, %1239 : vector<16x16xf32>
    %1241 = arith.addf %1202, %1240 : vector<16x16xf32>
    %c8_614 = arith.constant 8 : index
    %c29_615 = arith.constant 29 : index
    %1242 = memref.load %arg5[%c8_614, %c29_615] : memref<9x36xf32, #tpu.memory_space<smem>>
    %1243 = vector.broadcast %1242 : f32 to vector<16x16xf32>
    %1244 = arith.mulf %1209, %1243 : vector<16x16xf32>
    %1245 = arith.addf %1206, %1244 : vector<16x16xf32>
    %c1_i32_616 = arith.constant 1 : i32
    %1246 = tpu.dynamic_rotate %1115 by %c1_i32_616 dim 1 : vector<16x16xf32>, i32 -> vector<16x16xf32>
    %cst_617 = arith.constant 0.000000e+00 : f32
    %1247 = vector.broadcast %cst_617 : f32 to vector<16x16xf32>
    %1248 = arith.select %13, %1246, %1247 : vector<16x16xi1>, vector<16x16xf32>
    %c0_618 = arith.constant 0 : index
    %c30 = arith.constant 30 : index
    %1249 = memref.load %arg5[%c0_618, %c30] : memref<9x36xf32, #tpu.memory_space<smem>>
    %1250 = vector.broadcast %1249 : f32 to vector<16x16xf32>
    %1251 = arith.mulf %1248, %1250 : vector<16x16xf32>
    %1252 = arith.addf %1213, %1251 : vector<16x16xf32>
    %c1_619 = arith.constant 1 : index
    %c30_620 = arith.constant 30 : index
    %1253 = memref.load %arg5[%c1_619, %c30_620] : memref<9x36xf32, #tpu.memory_space<smem>>
    %1254 = vector.broadcast %1253 : f32 to vector<16x16xf32>
    %1255 = arith.mulf %1248, %1254 : vector<16x16xf32>
    %1256 = arith.addf %1217, %1255 : vector<16x16xf32>
    %c2_621 = arith.constant 2 : index
    %c30_622 = arith.constant 30 : index
    %1257 = memref.load %arg5[%c2_621, %c30_622] : memref<9x36xf32, #tpu.memory_space<smem>>
    %1258 = vector.broadcast %1257 : f32 to vector<16x16xf32>
    %1259 = arith.mulf %1248, %1258 : vector<16x16xf32>
    %1260 = arith.addf %1221, %1259 : vector<16x16xf32>
    %c3_623 = arith.constant 3 : index
    %c30_624 = arith.constant 30 : index
    %1261 = memref.load %arg5[%c3_623, %c30_624] : memref<9x36xf32, #tpu.memory_space<smem>>
    %1262 = vector.broadcast %1261 : f32 to vector<16x16xf32>
    %1263 = arith.mulf %1248, %1262 : vector<16x16xf32>
    %1264 = arith.addf %1225, %1263 : vector<16x16xf32>
    %c4_625 = arith.constant 4 : index
    %c30_626 = arith.constant 30 : index
    %1265 = memref.load %arg5[%c4_625, %c30_626] : memref<9x36xf32, #tpu.memory_space<smem>>
    %1266 = vector.broadcast %1265 : f32 to vector<16x16xf32>
    %1267 = arith.mulf %1248, %1266 : vector<16x16xf32>
    %1268 = arith.addf %1229, %1267 : vector<16x16xf32>
    %c5_627 = arith.constant 5 : index
    %c30_628 = arith.constant 30 : index
    %1269 = memref.load %arg5[%c5_627, %c30_628] : memref<9x36xf32, #tpu.memory_space<smem>>
    %1270 = vector.broadcast %1269 : f32 to vector<16x16xf32>
    %1271 = arith.mulf %1248, %1270 : vector<16x16xf32>
    %1272 = arith.addf %1233, %1271 : vector<16x16xf32>
    %c6_629 = arith.constant 6 : index
    %c30_630 = arith.constant 30 : index
    %1273 = memref.load %arg5[%c6_629, %c30_630] : memref<9x36xf32, #tpu.memory_space<smem>>
    %1274 = vector.broadcast %1273 : f32 to vector<16x16xf32>
    %1275 = arith.mulf %1248, %1274 : vector<16x16xf32>
    %1276 = arith.addf %1237, %1275 : vector<16x16xf32>
    %c7_631 = arith.constant 7 : index
    %c30_632 = arith.constant 30 : index
    %1277 = memref.load %arg5[%c7_631, %c30_632] : memref<9x36xf32, #tpu.memory_space<smem>>
    %1278 = vector.broadcast %1277 : f32 to vector<16x16xf32>
    %1279 = arith.mulf %1248, %1278 : vector<16x16xf32>
    %1280 = arith.addf %1241, %1279 : vector<16x16xf32>
    %c8_633 = arith.constant 8 : index
    %c30_634 = arith.constant 30 : index
    %1281 = memref.load %arg5[%c8_633, %c30_634] : memref<9x36xf32, #tpu.memory_space<smem>>
    %1282 = vector.broadcast %1281 : f32 to vector<16x16xf32>
    %1283 = arith.mulf %1248, %1282 : vector<16x16xf32>
    %1284 = arith.addf %1245, %1283 : vector<16x16xf32>
    %c0_635 = arith.constant 0 : index
    %c31 = arith.constant 31 : index
    %1285 = memref.load %arg5[%c0_635, %c31] : memref<9x36xf32, #tpu.memory_space<smem>>
    %1286 = vector.broadcast %1285 : f32 to vector<16x16xf32>
    %1287 = arith.mulf %1115, %1286 : vector<16x16xf32>
    %1288 = arith.addf %1252, %1287 : vector<16x16xf32>
    %c1_636 = arith.constant 1 : index
    %c31_637 = arith.constant 31 : index
    %1289 = memref.load %arg5[%c1_636, %c31_637] : memref<9x36xf32, #tpu.memory_space<smem>>
    %1290 = vector.broadcast %1289 : f32 to vector<16x16xf32>
    %1291 = arith.mulf %1115, %1290 : vector<16x16xf32>
    %1292 = arith.addf %1256, %1291 : vector<16x16xf32>
    %c2_638 = arith.constant 2 : index
    %c31_639 = arith.constant 31 : index
    %1293 = memref.load %arg5[%c2_638, %c31_639] : memref<9x36xf32, #tpu.memory_space<smem>>
    %1294 = vector.broadcast %1293 : f32 to vector<16x16xf32>
    %1295 = arith.mulf %1115, %1294 : vector<16x16xf32>
    %1296 = arith.addf %1260, %1295 : vector<16x16xf32>
    %c3_640 = arith.constant 3 : index
    %c31_641 = arith.constant 31 : index
    %1297 = memref.load %arg5[%c3_640, %c31_641] : memref<9x36xf32, #tpu.memory_space<smem>>
    %1298 = vector.broadcast %1297 : f32 to vector<16x16xf32>
    %1299 = arith.mulf %1115, %1298 : vector<16x16xf32>
    %1300 = arith.addf %1264, %1299 : vector<16x16xf32>
    %c4_642 = arith.constant 4 : index
    %c31_643 = arith.constant 31 : index
    %1301 = memref.load %arg5[%c4_642, %c31_643] : memref<9x36xf32, #tpu.memory_space<smem>>
    %1302 = vector.broadcast %1301 : f32 to vector<16x16xf32>
    %1303 = arith.mulf %1115, %1302 : vector<16x16xf32>
    %1304 = arith.addf %1268, %1303 : vector<16x16xf32>
    %c5_644 = arith.constant 5 : index
    %c31_645 = arith.constant 31 : index
    %1305 = memref.load %arg5[%c5_644, %c31_645] : memref<9x36xf32, #tpu.memory_space<smem>>
    %1306 = vector.broadcast %1305 : f32 to vector<16x16xf32>
    %1307 = arith.mulf %1115, %1306 : vector<16x16xf32>
    %1308 = arith.addf %1272, %1307 : vector<16x16xf32>
    %c6_646 = arith.constant 6 : index
    %c31_647 = arith.constant 31 : index
    %1309 = memref.load %arg5[%c6_646, %c31_647] : memref<9x36xf32, #tpu.memory_space<smem>>
    %1310 = vector.broadcast %1309 : f32 to vector<16x16xf32>
    %1311 = arith.mulf %1115, %1310 : vector<16x16xf32>
    %1312 = arith.addf %1276, %1311 : vector<16x16xf32>
    %c7_648 = arith.constant 7 : index
    %c31_649 = arith.constant 31 : index
    %1313 = memref.load %arg5[%c7_648, %c31_649] : memref<9x36xf32, #tpu.memory_space<smem>>
    %1314 = vector.broadcast %1313 : f32 to vector<16x16xf32>
    %1315 = arith.mulf %1115, %1314 : vector<16x16xf32>
    %1316 = arith.addf %1280, %1315 : vector<16x16xf32>
    %c8_650 = arith.constant 8 : index
    %c31_651 = arith.constant 31 : index
    %1317 = memref.load %arg5[%c8_650, %c31_651] : memref<9x36xf32, #tpu.memory_space<smem>>
    %1318 = vector.broadcast %1317 : f32 to vector<16x16xf32>
    %1319 = arith.mulf %1115, %1318 : vector<16x16xf32>
    %1320 = arith.addf %1284, %1319 : vector<16x16xf32>
    %c15_i32_652 = arith.constant 15 : i32
    %1321 = tpu.dynamic_rotate %1115 by %c15_i32_652 dim 1 : vector<16x16xf32>, i32 -> vector<16x16xf32>
    %cst_653 = arith.constant 0.000000e+00 : f32
    %1322 = vector.broadcast %cst_653 : f32 to vector<16x16xf32>
    %1323 = arith.select %15, %1321, %1322 : vector<16x16xi1>, vector<16x16xf32>
    %c0_654 = arith.constant 0 : index
    %c32 = arith.constant 32 : index
    %1324 = memref.load %arg5[%c0_654, %c32] : memref<9x36xf32, #tpu.memory_space<smem>>
    %1325 = vector.broadcast %1324 : f32 to vector<16x16xf32>
    %1326 = arith.mulf %1323, %1325 : vector<16x16xf32>
    %1327 = arith.addf %1288, %1326 : vector<16x16xf32>
    %c1_655 = arith.constant 1 : index
    %c32_656 = arith.constant 32 : index
    %1328 = memref.load %arg5[%c1_655, %c32_656] : memref<9x36xf32, #tpu.memory_space<smem>>
    %1329 = vector.broadcast %1328 : f32 to vector<16x16xf32>
    %1330 = arith.mulf %1323, %1329 : vector<16x16xf32>
    %1331 = arith.addf %1292, %1330 : vector<16x16xf32>
    %c2_657 = arith.constant 2 : index
    %c32_658 = arith.constant 32 : index
    %1332 = memref.load %arg5[%c2_657, %c32_658] : memref<9x36xf32, #tpu.memory_space<smem>>
    %1333 = vector.broadcast %1332 : f32 to vector<16x16xf32>
    %1334 = arith.mulf %1323, %1333 : vector<16x16xf32>
    %1335 = arith.addf %1296, %1334 : vector<16x16xf32>
    %c3_659 = arith.constant 3 : index
    %c32_660 = arith.constant 32 : index
    %1336 = memref.load %arg5[%c3_659, %c32_660] : memref<9x36xf32, #tpu.memory_space<smem>>
    %1337 = vector.broadcast %1336 : f32 to vector<16x16xf32>
    %1338 = arith.mulf %1323, %1337 : vector<16x16xf32>
    %1339 = arith.addf %1300, %1338 : vector<16x16xf32>
    %c4_661 = arith.constant 4 : index
    %c32_662 = arith.constant 32 : index
    %1340 = memref.load %arg5[%c4_661, %c32_662] : memref<9x36xf32, #tpu.memory_space<smem>>
    %1341 = vector.broadcast %1340 : f32 to vector<16x16xf32>
    %1342 = arith.mulf %1323, %1341 : vector<16x16xf32>
    %1343 = arith.addf %1304, %1342 : vector<16x16xf32>
    %c5_663 = arith.constant 5 : index
    %c32_664 = arith.constant 32 : index
    %1344 = memref.load %arg5[%c5_663, %c32_664] : memref<9x36xf32, #tpu.memory_space<smem>>
    %1345 = vector.broadcast %1344 : f32 to vector<16x16xf32>
    %1346 = arith.mulf %1323, %1345 : vector<16x16xf32>
    %1347 = arith.addf %1308, %1346 : vector<16x16xf32>
    %c6_665 = arith.constant 6 : index
    %c32_666 = arith.constant 32 : index
    %1348 = memref.load %arg5[%c6_665, %c32_666] : memref<9x36xf32, #tpu.memory_space<smem>>
    %1349 = vector.broadcast %1348 : f32 to vector<16x16xf32>
    %1350 = arith.mulf %1323, %1349 : vector<16x16xf32>
    %1351 = arith.addf %1312, %1350 : vector<16x16xf32>
    %c7_667 = arith.constant 7 : index
    %c32_668 = arith.constant 32 : index
    %1352 = memref.load %arg5[%c7_667, %c32_668] : memref<9x36xf32, #tpu.memory_space<smem>>
    %1353 = vector.broadcast %1352 : f32 to vector<16x16xf32>
    %1354 = arith.mulf %1323, %1353 : vector<16x16xf32>
    %1355 = arith.addf %1316, %1354 : vector<16x16xf32>
    %c8_669 = arith.constant 8 : index
    %c32_670 = arith.constant 32 : index
    %1356 = memref.load %arg5[%c8_669, %c32_670] : memref<9x36xf32, #tpu.memory_space<smem>>
    %1357 = vector.broadcast %1356 : f32 to vector<16x16xf32>
    %1358 = arith.mulf %1323, %1357 : vector<16x16xf32>
    %1359 = arith.addf %1320, %1358 : vector<16x16xf32>
    %c1_i32_671 = arith.constant 1 : i32
    %1360 = tpu.dynamic_rotate %1131 by %c1_i32_671 dim 1 : vector<16x16xf32>, i32 -> vector<16x16xf32>
    %cst_672 = arith.constant 0.000000e+00 : f32
    %1361 = vector.broadcast %cst_672 : f32 to vector<16x16xf32>
    %1362 = arith.select %13, %1360, %1361 : vector<16x16xi1>, vector<16x16xf32>
    %c0_673 = arith.constant 0 : index
    %c33 = arith.constant 33 : index
    %1363 = memref.load %arg5[%c0_673, %c33] : memref<9x36xf32, #tpu.memory_space<smem>>
    %1364 = vector.broadcast %1363 : f32 to vector<16x16xf32>
    %1365 = arith.mulf %1362, %1364 : vector<16x16xf32>
    %1366 = arith.addf %1327, %1365 : vector<16x16xf32>
    %c1_674 = arith.constant 1 : index
    %c33_675 = arith.constant 33 : index
    %1367 = memref.load %arg5[%c1_674, %c33_675] : memref<9x36xf32, #tpu.memory_space<smem>>
    %1368 = vector.broadcast %1367 : f32 to vector<16x16xf32>
    %1369 = arith.mulf %1362, %1368 : vector<16x16xf32>
    %1370 = arith.addf %1331, %1369 : vector<16x16xf32>
    %c2_676 = arith.constant 2 : index
    %c33_677 = arith.constant 33 : index
    %1371 = memref.load %arg5[%c2_676, %c33_677] : memref<9x36xf32, #tpu.memory_space<smem>>
    %1372 = vector.broadcast %1371 : f32 to vector<16x16xf32>
    %1373 = arith.mulf %1362, %1372 : vector<16x16xf32>
    %1374 = arith.addf %1335, %1373 : vector<16x16xf32>
    %c3_678 = arith.constant 3 : index
    %c33_679 = arith.constant 33 : index
    %1375 = memref.load %arg5[%c3_678, %c33_679] : memref<9x36xf32, #tpu.memory_space<smem>>
    %1376 = vector.broadcast %1375 : f32 to vector<16x16xf32>
    %1377 = arith.mulf %1362, %1376 : vector<16x16xf32>
    %1378 = arith.addf %1339, %1377 : vector<16x16xf32>
    %c4_680 = arith.constant 4 : index
    %c33_681 = arith.constant 33 : index
    %1379 = memref.load %arg5[%c4_680, %c33_681] : memref<9x36xf32, #tpu.memory_space<smem>>
    %1380 = vector.broadcast %1379 : f32 to vector<16x16xf32>
    %1381 = arith.mulf %1362, %1380 : vector<16x16xf32>
    %1382 = arith.addf %1343, %1381 : vector<16x16xf32>
    %c5_682 = arith.constant 5 : index
    %c33_683 = arith.constant 33 : index
    %1383 = memref.load %arg5[%c5_682, %c33_683] : memref<9x36xf32, #tpu.memory_space<smem>>
    %1384 = vector.broadcast %1383 : f32 to vector<16x16xf32>
    %1385 = arith.mulf %1362, %1384 : vector<16x16xf32>
    %1386 = arith.addf %1347, %1385 : vector<16x16xf32>
    %c6_684 = arith.constant 6 : index
    %c33_685 = arith.constant 33 : index
    %1387 = memref.load %arg5[%c6_684, %c33_685] : memref<9x36xf32, #tpu.memory_space<smem>>
    %1388 = vector.broadcast %1387 : f32 to vector<16x16xf32>
    %1389 = arith.mulf %1362, %1388 : vector<16x16xf32>
    %1390 = arith.addf %1351, %1389 : vector<16x16xf32>
    %c7_686 = arith.constant 7 : index
    %c33_687 = arith.constant 33 : index
    %1391 = memref.load %arg5[%c7_686, %c33_687] : memref<9x36xf32, #tpu.memory_space<smem>>
    %1392 = vector.broadcast %1391 : f32 to vector<16x16xf32>
    %1393 = arith.mulf %1362, %1392 : vector<16x16xf32>
    %1394 = arith.addf %1355, %1393 : vector<16x16xf32>
    %c8_688 = arith.constant 8 : index
    %c33_689 = arith.constant 33 : index
    %1395 = memref.load %arg5[%c8_688, %c33_689] : memref<9x36xf32, #tpu.memory_space<smem>>
    %1396 = vector.broadcast %1395 : f32 to vector<16x16xf32>
    %1397 = arith.mulf %1362, %1396 : vector<16x16xf32>
    %1398 = arith.addf %1359, %1397 : vector<16x16xf32>
    %c0_690 = arith.constant 0 : index
    %c34 = arith.constant 34 : index
    %1399 = memref.load %arg5[%c0_690, %c34] : memref<9x36xf32, #tpu.memory_space<smem>>
    %1400 = vector.broadcast %1399 : f32 to vector<16x16xf32>
    %1401 = arith.mulf %1131, %1400 : vector<16x16xf32>
    %1402 = arith.addf %1366, %1401 : vector<16x16xf32>
    %c1_691 = arith.constant 1 : index
    %c34_692 = arith.constant 34 : index
    %1403 = memref.load %arg5[%c1_691, %c34_692] : memref<9x36xf32, #tpu.memory_space<smem>>
    %1404 = vector.broadcast %1403 : f32 to vector<16x16xf32>
    %1405 = arith.mulf %1131, %1404 : vector<16x16xf32>
    %1406 = arith.addf %1370, %1405 : vector<16x16xf32>
    %c2_693 = arith.constant 2 : index
    %c34_694 = arith.constant 34 : index
    %1407 = memref.load %arg5[%c2_693, %c34_694] : memref<9x36xf32, #tpu.memory_space<smem>>
    %1408 = vector.broadcast %1407 : f32 to vector<16x16xf32>
    %1409 = arith.mulf %1131, %1408 : vector<16x16xf32>
    %1410 = arith.addf %1374, %1409 : vector<16x16xf32>
    %c3_695 = arith.constant 3 : index
    %c34_696 = arith.constant 34 : index
    %1411 = memref.load %arg5[%c3_695, %c34_696] : memref<9x36xf32, #tpu.memory_space<smem>>
    %1412 = vector.broadcast %1411 : f32 to vector<16x16xf32>
    %1413 = arith.mulf %1131, %1412 : vector<16x16xf32>
    %1414 = arith.addf %1378, %1413 : vector<16x16xf32>
    %c4_697 = arith.constant 4 : index
    %c34_698 = arith.constant 34 : index
    %1415 = memref.load %arg5[%c4_697, %c34_698] : memref<9x36xf32, #tpu.memory_space<smem>>
    %1416 = vector.broadcast %1415 : f32 to vector<16x16xf32>
    %1417 = arith.mulf %1131, %1416 : vector<16x16xf32>
    %1418 = arith.addf %1382, %1417 : vector<16x16xf32>
    %c5_699 = arith.constant 5 : index
    %c34_700 = arith.constant 34 : index
    %1419 = memref.load %arg5[%c5_699, %c34_700] : memref<9x36xf32, #tpu.memory_space<smem>>
    %1420 = vector.broadcast %1419 : f32 to vector<16x16xf32>
    %1421 = arith.mulf %1131, %1420 : vector<16x16xf32>
    %1422 = arith.addf %1386, %1421 : vector<16x16xf32>
    %c6_701 = arith.constant 6 : index
    %c34_702 = arith.constant 34 : index
    %1423 = memref.load %arg5[%c6_701, %c34_702] : memref<9x36xf32, #tpu.memory_space<smem>>
    %1424 = vector.broadcast %1423 : f32 to vector<16x16xf32>
    %1425 = arith.mulf %1131, %1424 : vector<16x16xf32>
    %1426 = arith.addf %1390, %1425 : vector<16x16xf32>
    %c7_703 = arith.constant 7 : index
    %c34_704 = arith.constant 34 : index
    %1427 = memref.load %arg5[%c7_703, %c34_704] : memref<9x36xf32, #tpu.memory_space<smem>>
    %1428 = vector.broadcast %1427 : f32 to vector<16x16xf32>
    %1429 = arith.mulf %1131, %1428 : vector<16x16xf32>
    %1430 = arith.addf %1394, %1429 : vector<16x16xf32>
    %c8_705 = arith.constant 8 : index
    %c34_706 = arith.constant 34 : index
    %1431 = memref.load %arg5[%c8_705, %c34_706] : memref<9x36xf32, #tpu.memory_space<smem>>
    %1432 = vector.broadcast %1431 : f32 to vector<16x16xf32>
    %1433 = arith.mulf %1131, %1432 : vector<16x16xf32>
    %1434 = arith.addf %1398, %1433 : vector<16x16xf32>
    %c15_i32_707 = arith.constant 15 : i32
    %1435 = tpu.dynamic_rotate %1131 by %c15_i32_707 dim 1 : vector<16x16xf32>, i32 -> vector<16x16xf32>
    %cst_708 = arith.constant 0.000000e+00 : f32
    %1436 = vector.broadcast %cst_708 : f32 to vector<16x16xf32>
    %1437 = arith.select %15, %1435, %1436 : vector<16x16xi1>, vector<16x16xf32>
    %c0_709 = arith.constant 0 : index
    %c35 = arith.constant 35 : index
    %1438 = memref.load %arg5[%c0_709, %c35] : memref<9x36xf32, #tpu.memory_space<smem>>
    %1439 = vector.broadcast %1438 : f32 to vector<16x16xf32>
    %1440 = arith.mulf %1437, %1439 : vector<16x16xf32>
    %1441 = arith.addf %1402, %1440 : vector<16x16xf32>
    %c1_710 = arith.constant 1 : index
    %c35_711 = arith.constant 35 : index
    %1442 = memref.load %arg5[%c1_710, %c35_711] : memref<9x36xf32, #tpu.memory_space<smem>>
    %1443 = vector.broadcast %1442 : f32 to vector<16x16xf32>
    %1444 = arith.mulf %1437, %1443 : vector<16x16xf32>
    %1445 = arith.addf %1406, %1444 : vector<16x16xf32>
    %c2_712 = arith.constant 2 : index
    %c35_713 = arith.constant 35 : index
    %1446 = memref.load %arg5[%c2_712, %c35_713] : memref<9x36xf32, #tpu.memory_space<smem>>
    %1447 = vector.broadcast %1446 : f32 to vector<16x16xf32>
    %1448 = arith.mulf %1437, %1447 : vector<16x16xf32>
    %1449 = arith.addf %1410, %1448 : vector<16x16xf32>
    %c3_714 = arith.constant 3 : index
    %c35_715 = arith.constant 35 : index
    %1450 = memref.load %arg5[%c3_714, %c35_715] : memref<9x36xf32, #tpu.memory_space<smem>>
    %1451 = vector.broadcast %1450 : f32 to vector<16x16xf32>
    %1452 = arith.mulf %1437, %1451 : vector<16x16xf32>
    %1453 = arith.addf %1414, %1452 : vector<16x16xf32>
    %c4_716 = arith.constant 4 : index
    %c35_717 = arith.constant 35 : index
    %1454 = memref.load %arg5[%c4_716, %c35_717] : memref<9x36xf32, #tpu.memory_space<smem>>
    %1455 = vector.broadcast %1454 : f32 to vector<16x16xf32>
    %1456 = arith.mulf %1437, %1455 : vector<16x16xf32>
    %1457 = arith.addf %1418, %1456 : vector<16x16xf32>
    %c5_718 = arith.constant 5 : index
    %c35_719 = arith.constant 35 : index
    %1458 = memref.load %arg5[%c5_718, %c35_719] : memref<9x36xf32, #tpu.memory_space<smem>>
    %1459 = vector.broadcast %1458 : f32 to vector<16x16xf32>
    %1460 = arith.mulf %1437, %1459 : vector<16x16xf32>
    %1461 = arith.addf %1422, %1460 : vector<16x16xf32>
    %c6_720 = arith.constant 6 : index
    %c35_721 = arith.constant 35 : index
    %1462 = memref.load %arg5[%c6_720, %c35_721] : memref<9x36xf32, #tpu.memory_space<smem>>
    %1463 = vector.broadcast %1462 : f32 to vector<16x16xf32>
    %1464 = arith.mulf %1437, %1463 : vector<16x16xf32>
    %1465 = arith.addf %1426, %1464 : vector<16x16xf32>
    %c7_722 = arith.constant 7 : index
    %c35_723 = arith.constant 35 : index
    %1466 = memref.load %arg5[%c7_722, %c35_723] : memref<9x36xf32, #tpu.memory_space<smem>>
    %1467 = vector.broadcast %1466 : f32 to vector<16x16xf32>
    %1468 = arith.mulf %1437, %1467 : vector<16x16xf32>
    %1469 = arith.addf %1430, %1468 : vector<16x16xf32>
    %c8_724 = arith.constant 8 : index
    %c35_725 = arith.constant 35 : index
    %1470 = memref.load %arg5[%c8_724, %c35_725] : memref<9x36xf32, #tpu.memory_space<smem>>
    %1471 = vector.broadcast %1470 : f32 to vector<16x16xf32>
    %1472 = arith.mulf %1437, %1471 : vector<16x16xf32>
    %1473 = arith.addf %1434, %1472 : vector<16x16xf32>
    %1474 = arith.negf %1473 : vector<16x16xf32>
    %1475 = math.exp %1474 : vector<16x16xf32>
    %cst_726 = arith.constant 1.000000e+00 : f32
    %1476 = vector.broadcast %cst_726 : f32 to vector<16x16xf32>
    %1477 = arith.addf %1476, %1475 : vector<16x16xf32>
    %1478 = arith.divf %1476, %1477 : vector<16x16xf32>
    %1479 = arith.mulf %1441, %1478 : vector<16x16xf32>
    %c0_727 = arith.constant 0 : index
    %c0_728 = arith.constant 0 : index
    %c0_729 = arith.constant 0 : index
    %c0_730 = arith.constant 0 : index
    %1480 = vector.load %arg7[%c0_727, %c0_728, %c0_729, %c0_730] : memref<1x8x16x16xf32, #tpu.memory_space<vmem>>, vector<1x1x16x16xf32>
    %1481 = vector.shape_cast %1480 : vector<1x1x16x16xf32> to vector<16x16xf32>
    %1482 = vector.shape_cast %1479 : vector<16x16xf32> to vector<1x1x16x16xf32>
    tpu.vector_store %arg7[%c0_727, %c0_728, %c0_729, %c0_730], %1482 {strides = array<i32>} : memref<1x8x16x16xf32, #tpu.memory_space<vmem>>, vector<1x1x16x16xf32>,
    %1483 = arith.mulf %1445, %1478 : vector<16x16xf32>
    %c0_731 = arith.constant 0 : index
    %c1_732 = arith.constant 1 : index
    %c0_733 = arith.constant 0 : index
    %c0_734 = arith.constant 0 : index
    %1484 = vector.load %arg7[%c0_731, %c1_732, %c0_733, %c0_734] : memref<1x8x16x16xf32, #tpu.memory_space<vmem>>, vector<1x1x16x16xf32>
    %1485 = vector.shape_cast %1484 : vector<1x1x16x16xf32> to vector<16x16xf32>
    %1486 = vector.shape_cast %1483 : vector<16x16xf32> to vector<1x1x16x16xf32>
    tpu.vector_store %arg7[%c0_731, %c1_732, %c0_733, %c0_734], %1486 {strides = array<i32>} : memref<1x8x16x16xf32, #tpu.memory_space<vmem>>, vector<1x1x16x16xf32>,
    %1487 = arith.mulf %1449, %1478 : vector<16x16xf32>
    %c0_735 = arith.constant 0 : index
    %c2_736 = arith.constant 2 : index
    %c0_737 = arith.constant 0 : index
    %c0_738 = arith.constant 0 : index
    %1488 = vector.load %arg7[%c0_735, %c2_736, %c0_737, %c0_738] : memref<1x8x16x16xf32, #tpu.memory_space<vmem>>, vector<1x1x16x16xf32>
    %1489 = vector.shape_cast %1488 : vector<1x1x16x16xf32> to vector<16x16xf32>
    %1490 = vector.shape_cast %1487 : vector<16x16xf32> to vector<1x1x16x16xf32>
    tpu.vector_store %arg7[%c0_735, %c2_736, %c0_737, %c0_738], %1490 {strides = array<i32>} : memref<1x8x16x16xf32, #tpu.memory_space<vmem>>, vector<1x1x16x16xf32>,
    %1491 = arith.mulf %1453, %1478 : vector<16x16xf32>
    %c0_739 = arith.constant 0 : index
    %c3_740 = arith.constant 3 : index
    %c0_741 = arith.constant 0 : index
    %c0_742 = arith.constant 0 : index
    %1492 = vector.load %arg7[%c0_739, %c3_740, %c0_741, %c0_742] : memref<1x8x16x16xf32, #tpu.memory_space<vmem>>, vector<1x1x16x16xf32>
    %1493 = vector.shape_cast %1492 : vector<1x1x16x16xf32> to vector<16x16xf32>
    %1494 = vector.shape_cast %1491 : vector<16x16xf32> to vector<1x1x16x16xf32>
    tpu.vector_store %arg7[%c0_739, %c3_740, %c0_741, %c0_742], %1494 {strides = array<i32>} : memref<1x8x16x16xf32, #tpu.memory_space<vmem>>, vector<1x1x16x16xf32>,
    %1495 = arith.mulf %1457, %1478 : vector<16x16xf32>
    %c0_743 = arith.constant 0 : index
    %c4_744 = arith.constant 4 : index
    %c0_745 = arith.constant 0 : index
    %c0_746 = arith.constant 0 : index
    %1496 = vector.load %arg7[%c0_743, %c4_744, %c0_745, %c0_746] : memref<1x8x16x16xf32, #tpu.memory_space<vmem>>, vector<1x1x16x16xf32>
    %1497 = vector.shape_cast %1496 : vector<1x1x16x16xf32> to vector<16x16xf32>
    %1498 = vector.shape_cast %1495 : vector<16x16xf32> to vector<1x1x16x16xf32>
    tpu.vector_store %arg7[%c0_743, %c4_744, %c0_745, %c0_746], %1498 {strides = array<i32>} : memref<1x8x16x16xf32, #tpu.memory_space<vmem>>, vector<1x1x16x16xf32>,
    %1499 = arith.mulf %1461, %1478 : vector<16x16xf32>
    %c0_747 = arith.constant 0 : index
    %c5_748 = arith.constant 5 : index
    %c0_749 = arith.constant 0 : index
    %c0_750 = arith.constant 0 : index
    %1500 = vector.load %arg7[%c0_747, %c5_748, %c0_749, %c0_750] : memref<1x8x16x16xf32, #tpu.memory_space<vmem>>, vector<1x1x16x16xf32>
    %1501 = vector.shape_cast %1500 : vector<1x1x16x16xf32> to vector<16x16xf32>
    %1502 = vector.shape_cast %1499 : vector<16x16xf32> to vector<1x1x16x16xf32>
    tpu.vector_store %arg7[%c0_747, %c5_748, %c0_749, %c0_750], %1502 {strides = array<i32>} : memref<1x8x16x16xf32, #tpu.memory_space<vmem>>, vector<1x1x16x16xf32>,
    %1503 = arith.mulf %1465, %1478 : vector<16x16xf32>
    %c0_751 = arith.constant 0 : index
    %c6_752 = arith.constant 6 : index
    %c0_753 = arith.constant 0 : index
    %c0_754 = arith.constant 0 : index
    %1504 = vector.load %arg7[%c0_751, %c6_752, %c0_753, %c0_754] : memref<1x8x16x16xf32, #tpu.memory_space<vmem>>, vector<1x1x16x16xf32>
    %1505 = vector.shape_cast %1504 : vector<1x1x16x16xf32> to vector<16x16xf32>
    %1506 = vector.shape_cast %1503 : vector<16x16xf32> to vector<1x1x16x16xf32>
    tpu.vector_store %arg7[%c0_751, %c6_752, %c0_753, %c0_754], %1506 {strides = array<i32>} : memref<1x8x16x16xf32, #tpu.memory_space<vmem>>, vector<1x1x16x16xf32>,
    %1507 = arith.mulf %1469, %1478 : vector<16x16xf32>
    %c0_755 = arith.constant 0 : index
    %c7_756 = arith.constant 7 : index
    %c0_757 = arith.constant 0 : index
    %c0_758 = arith.constant 0 : index
    %1508 = vector.load %arg7[%c0_755, %c7_756, %c0_757, %c0_758] : memref<1x8x16x16xf32, #tpu.memory_space<vmem>>, vector<1x1x16x16xf32>
    %1509 = vector.shape_cast %1508 : vector<1x1x16x16xf32> to vector<16x16xf32>
    %1510 = vector.shape_cast %1507 : vector<16x16xf32> to vector<1x1x16x16xf32>
    tpu.vector_store %arg7[%c0_755, %c7_756, %c0_757, %c0_758], %1510 {strides = array<i32>} : memref<1x8x16x16xf32, #tpu.memory_space<vmem>>, vector<1x1x16x16xf32>,
    return
  }
  func.func @transform_0(%arg0: i32, %arg1: i32) -> (i32, i32, i32, i32) {
    %c0_i32 = arith.constant 0 : i32
    %c0_i32_0 = arith.constant 0 : i32
    %c0_i32_1 = arith.constant 0 : i32
    return %arg0, %c0_i32, %arg1, %c0_i32_0 : i32, i32, i32, i32
  }
  func.func @transform_1(%arg0: i32, %arg1: i32) -> (i32, i32, i32, i32) {
    %c2_i32 = arith.constant 2 : i32
    %0 = arith.muli %arg1, %c2_i32 : i32
    %c1_i32 = arith.constant 1 : i32
    %1 = arith.subi %0, %c1_i32 : i32
    %c0_i32 = arith.constant 0 : i32
    %2 = arith.maxsi %1, %c0_i32 : i32
    %c0_i32_0 = arith.constant 0 : i32
    %c0_i32_1 = arith.constant 0 : i32
    %c0_i32_2 = arith.constant 0 : i32
    return %arg0, %c0_i32_0, %2, %c0_i32_1 : i32, i32, i32, i32
  }
  func.func @transform_2(%arg0: i32, %arg1: i32) -> (i32, i32, i32, i32) {
    %c1_i32 = arith.constant 1 : i32
    %0 = arith.addi %arg1, %c1_i32 : i32
    %c2_i32 = arith.constant 2 : i32
    %1 = arith.muli %0, %c2_i32 : i32
    %c1_i32_0 = arith.constant 1 : i32
    %2 = arith.minsi %1, %c1_i32_0 : i32
    %c0_i32 = arith.constant 0 : i32
    %c0_i32_1 = arith.constant 0 : i32
    %c0_i32_2 = arith.constant 0 : i32
    return %arg0, %c0_i32, %2, %c0_i32_1 : i32, i32, i32, i32
  }
  func.func @transform_3(%arg0: i32, %arg1: i32) -> (i32, i32) {
    %c0_i32 = arith.constant 0 : i32
    %c0_i32_0 = arith.constant 0 : i32
    %c0_i32_1 = arith.constant 0 : i32
    return %c0_i32, %c0_i32_0 : i32, i32
  }
  func.func @transform_4(%arg0: i32, %arg1: i32) -> i32 {
    %c0_i32 = arith.constant 0 : i32
    %c0_i32_0 = arith.constant 0 : i32
    return %c0_i32 : i32
  }
  func.func @transform_5(%arg0: i32, %arg1: i32) -> (i32, i32, i32, i32) {
    %c0_i32 = arith.constant 0 : i32
    %c0_i32_0 = arith.constant 0 : i32
    %c0_i32_1 = arith.constant 0 : i32
    return %arg0, %c0_i32, %arg1, %c0_i32_0 : i32, i32, i32, i32
  }
}

</mosaic_0001>

<llo_original>
// kernel: gated_conv.1
$region0: #{gated_conv.1}
  #allocation0 [shape = 'u32[]', space=smem, size = 0x4, offset = 0x4, fixed_abs, tag = 'smem constant byte address 0x4 - core index']
  #allocation1 [shape = 'u32[144,128]{1,0:T(1,128)}', space=vmem, size = 0x12000, scoped, tag = 'internal scratch']
  %s0 = inlined_call_operand.vmem [shape: f32[2,4,16,16], index: 0, kind: input, shape index: {}, may-alias: {0,1,2}]
  %s1 = inlined_call_operand.vmem [shape: f32[2,4,16,16], index: 1, kind: input, shape index: {}, may-alias: {0,1,2}]
  %s2 = inlined_call_operand.vmem [shape: f32[2,4,16,16], index: 2, kind: input, shape index: {}, may-alias: {0,1,2}]
  %s3 = inlined_call_operand.vmem [shape: f32[9,36], index: 3, kind: input, shape index: {}]
  %s4 = inlined_call_operand.vmem [shape: f32[9], index: 4, kind: input, shape index: {}]
  %s5 = inlined_call_operand.hbm [shape: f32[2,8,16,16], index: 5, kind: output, shape index: {}]
  %s6 = sld [smem:[#allocation0]]
  $region137: #{gated_conv.1} parent=0
    _
  %s8 = ssub.s32 1, %s6
  %s9 = scalar_select 0, %s8, %s6
  $region1: #{gated_conv.1} parent=0
    #allocation2 [shape = 'u8[32768]{0}', space=vmem, size = 0x8000, scoped, tag = 'input window, operand 1']
    #allocation3 [shape = 'u8[32768]{0}', space=vmem, size = 0x8000, scoped, tag = 'input window, operand 2']
    #allocation4 [shape = 'u8[8192]{0}', space=smem, size = 0x2000, scoped, tag = 'input window, operand 3, single buffered']
    #allocation5 [shape = 's32[2]{0}', space=sflag, size = 0x8, scoped, tag = 'scoped memory for gated_conv.1']
    #allocation6 [shape = 's32[2]{0}', space=sflag, size = 0x8, scoped, tag = 'scoped memory for gated_conv.1']
    #allocation7 [shape = 'u8[512]{0}', space=smem, size = 0x200, scoped, tag = 'input window, operand 4, single buffered']
    #allocation8 [shape = 's32[1]{0}', space=sflag, size = 0x4, scoped, tag = 'scoped memory for gated_conv.1']
    #allocation9 [shape = 'u8[131072]{0}', space=vmem, size = 0x20000, scoped, tag = 'output window, operand 0']
    %10 = vsyncpa [#allocation6], 0
    %11 = vsyncpa [#allocation8], 0
    %12 = vsyncpa [#allocation5], 0
    %s13 = scalar_lea.sflag [#allocation5], 1
    %14 = vsyncpa %s13, 0
    loop: start=0, step=1, limit=4
    $region2: #{gated_conv.1} parent=1 // loop_pre_header
      _
    $region3: #{gated_conv.1} parent=1 // loop_header
      %s16 = sphi 0, %s20
      %p17 = scmp.ge.s32.totalorder %s16, 4
      %s23 = sphi 0, %s35
      %s24 = sphi 0, %s31
      %s25 = sphi 0, %s23
      %s26 = sphi 0, %s24
      %s27 = sphi 0, %s25
      %s28 = sphi 0, %s26
      %s40 = sphi 0, %s42
      %s43 = sphi 0, %s40
      %s44 = sphi 0, %s43
      %s60 = sphi 0, %s44
      %s76 = sphi 0, %s78
      %s79 = sphi 0, %s76
      %s80 = sphi 0, %s79
      %s96 = sphi 0, %s80
      %s112 = sphi 0, %s114
      %s115 = sphi 0, %s112
      %s116 = sphi 0, %s115
      %s132 = sphi 0, %s116
      %s136 = sphi 0, %s136
      %s138 = sphi 0, %s136
      %s139 = sphi 0, %s138
      %s153 = sphi 0, %s139
      %s157 = sphi 0, %s157
      %s159 = sphi 0, %s157
      %s160 = sphi 0, %s159
      %s174 = sphi 0, %s160
      %s182 = sphi 0, %s184
      %s185 = sphi 0, %s182
      %s186 = sphi 0, %s185
      %s202 = sphi 0, %s186
    $region4: #{gated_conv.1} parent=1 // loop_header_branch
      %19 = sbr.rel (%p17) target = $region8
    $region5: #{gated_conv.1} parent=1 // loop_body
      %s21 = ssub.s32 %s16, 1
      %s22 = ssub.s32 %s16, 2
      %s29 = sadd.s32 1, %s24
      %p30 = scmp.ge.s32.totalorder %s29, 1
      %s31 = scalar_select %p30, 0, %s29
      %s32 = sadd.s32 1, %s23
      %s33 = scalar_select %p30, %s32, %s23
      %p34 = scmp.ge.s32.totalorder %s33, 2
      %s35 = scalar_select %p34, 0, %s33
      %s36 = ssub.s32 %s23, %s35
      %s37 = ssub.s32 %s24, %s31
      %s38 = sor.u32 %s36, %s37
      %p39 = scmp.eq.s32.totalorder %s38, 0
      %s41 = sadd.s32 %s40, 1
      %s42 = scalar_select %p39, %s40, %s41
      %p45 = pneg %p39
      %p46 = scmp.eq.s32.totalorder %s16, 1
      %p47 = por %p45, %p46
      %p48 = scmp.ne.s32.totalorder %s40, %s43
      %p49 = scmp.eq.s32.totalorder %s16, 0
      %p50 = por %p48, %p49
      %p51 = scmp.ne.s32.totalorder %s40, %s43
      %p52 = scmp.eq.s32.totalorder %s21, 1
      %p53 = por %p51, %p52
      %p54 = scmp.ne.s32.totalorder %s43, %s44
      %p55 = scmp.eq.s32.totalorder %s21, 0
      %p56 = por %p54, %p55
      %p57 = scmp.ne.s32.totalorder %s43, %s44
      %p58 = scmp.eq.s32.totalorder %s22, 1
      %p59 = por %p57, %p58
      %p61 = scmp.ne.s32.totalorder %s44, %s60
      %p62 = scmp.eq.s32.totalorder %s22, 0
      %p63 = por %p61, %p62
      %s64 = smul.u32 %s24, 2
      %s65 = ssub.s32 %s64, 1
      %p66 = scmp.gt.s32.totalorder %s65, 0
      %s67 = scalar_select %p66, %s65, 0
      %s68 = smul.u32 %s31, 2
      %s69 = ssub.s32 %s68, 1
      %p70 = scmp.gt.s32.totalorder %s69, 0
      %s71 = scalar_select %p70, %s69, 0
      %s72 = ssub.s32 %s23, %s35
      %s73 = ssub.s32 %s67, %s71
      %s74 = sor.u32 %s72, %s73
      %p75 = scmp.eq.s32.totalorder %s74, 0
      %s77 = sadd.s32 %s76, 1
      %s78 = scalar_select %p75, %s76, %s77
      %p81 = pneg %p75
      %p82 = scmp.eq.s32.totalorder %s16, 1
      %p83 = por %p81, %p82
      %p84 = scmp.ne.s32.totalorder %s76, %s79
      %p85 = scmp.eq.s32.totalorder %s16, 0
      %p86 = por %p84, %p85
      %p87 = scmp.ne.s32.totalorder %s76, %s79
      %p88 = scmp.eq.s32.totalorder %s21, 1
      %p89 = por %p87, %p88
      %p90 = scmp.ne.s32.totalorder %s79, %s80
      %p91 = scmp.eq.s32.totalorder %s21, 0
      %p92 = por %p90, %p91
      %p93 = scmp.ne.s32.totalorder %s79, %s80
      %p94 = scmp.eq.s32.totalorder %s22, 1
      %p95 = por %p93, %p94
      %p97 = scmp.ne.s32.totalorder %s80, %s96
      %p98 = scmp.eq.s32.totalorder %s22, 0
      %p99 = por %p97, %p98
      %s100 = sadd.s32 %s24, 1
      %s101 = smul.u32 %s100, 2
      %p102 = scmp.lt.s32.totalorder %s101, 1
      %s103 = scalar_select %p102, %s101, 1
      %s104 = sadd.s32 %s31, 1
      %s105 = smul.u32 %s104, 2
      %p106 = scmp.lt.s32.totalorder %s105, 1
      %s107 = scalar_select %p106, %s105, 1
      %s108 = ssub.s32 %s23, %s35
      %s109 = ssub.s32 %s103, %s107
      %s110 = sor.u32 %s108, %s109
      %p111 = scmp.eq.s32.totalorder %s110, 0
      %s113 = sadd.s32 %s112, 1
      %s114 = scalar_select %p111, %s112, %s113
      %p117 = pneg %p111
      %p118 = scmp.eq.s32.totalorder %s16, 1
      %p119 = por %p117, %p118
      %p120 = scmp.ne.s32.totalorder %s112, %s115
      %p121 = scmp.eq.s32.totalorder %s16, 0
      %p122 = por %p120, %p121
      %p123 = scmp.ne.s32.totalorder %s112, %s115
      %p124 = scmp.eq.s32.totalorder %s21, 1
      %p125 = por %p123, %p124
      %p126 = scmp.ne.s32.totalorder %s115, %s116
      %p127 = scmp.eq.s32.totalorder %s21, 0
      %p128 = por %p126, %p127
      %p129 = scmp.ne.s32.totalorder %s115, %s116
      %p130 = scmp.eq.s32.totalorder %s22, 1
      %p131 = por %p129, %p130
      %p133 = scmp.ne.s32.totalorder %s116, %s132
      %p134 = scmp.eq.s32.totalorder %s22, 0
      %p135 = por %p133, %p134
      %s137 = sadd.s32 %s136, 1
      %p140 = scmp.eq.s32.totalorder %s16, 1
      %p141 = scmp.ne.s32.totalorder %s136, %s138
      %p142 = scmp.eq.s32.totalorder %s16, 0
      %p143 = por %p141, %p142
      %p144 = scmp.ne.s32.totalorder %s136, %s138
      %p145 = scmp.eq.s32.totalorder %s21, 1
      %p146 = por %p144, %p145
      %p147 = scmp.ne.s32.totalorder %s138, %s139
      %p148 = scmp.eq.s32.totalorder %s21, 0
      %p149 = por %p147, %p148
      %p150 = scmp.ne.s32.totalorder %s138, %s139
      %p151 = scmp.eq.s32.totalorder %s22, 1
      %p152 = por %p150, %p151
      %p154 = scmp.ne.s32.totalorder %s139, %s153
      %p155 = scmp.eq.s32.totalorder %s22, 0
      %p156 = por %p154, %p155
      %s158 = sadd.s32 %s157, 1
      %p161 = scmp.eq.s32.totalorder %s16, 1
      %p162 = scmp.ne.s32.totalorder %s157, %s159
      %p163 = scmp.eq.s32.totalorder %s16, 0
      %p164 = por %p162, %p163
      %p165 = scmp.ne.s32.totalorder %s157, %s159
      %p166 = scmp.eq.s32.totalorder %s21, 1
      %p167 = por %p165, %p166
      %p168 = scmp.ne.s32.totalorder %s159, %s160
      %p169 = scmp.eq.s32.totalorder %s21, 0
      %p170 = por %p168, %p169
      %p171 = scmp.ne.s32.totalorder %s159, %s160
      %p172 = scmp.eq.s32.totalorder %s22, 1
      %p173 = por %p171, %p172
      %p175 = scmp.ne.s32.totalorder %s160, %s174
      %p176 = scmp.eq.s32.totalorder %s22, 0
      %p177 = por %p175, %p176
      %s178 = ssub.s32 %s23, %s35
      %s179 = ssub.s32 %s24, %s31
      %s180 = sor.u32 %s178, %s179
      %p181 = scmp.eq.s32.totalorder %s180, 0
      %s183 = sadd.s32 %s182, 1
      %s184 = scalar_select %p181, %s182, %s183
      %p187 = pneg %p181
      %p188 = scmp.eq.s32.totalorder %s16, 1
      %p189 = por %p187, %p188
      %p190 = scmp.ne.s32.totalorder %s182, %s185
      %p191 = scmp.eq.s32.totalorder %s16, 0
      %p192 = por %p190, %p191
      %p193 = scmp.ne.s32.totalorder %s182, %s185
      %p194 = scmp.eq.s32.totalorder %s21, 1
      %p195 = por %p193, %p194
      %p196 = scmp.ne.s32.totalorder %s185, %s186
      %p197 = scmp.eq.s32.totalorder %s21, 0
      %p198 = por %p196, %p197
      %p199 = scmp.ne.s32.totalorder %s185, %s186
      %p200 = scmp.eq.s32.totalorder %s22, 1
      %p201 = por %p199, %p200
      %p203 = scmp.ne.s32.totalorder %s186, %s202
      %p204 = scmp.eq.s32.totalorder %s22, 0
      %p205 = por %p203, %p204
      %p206 = scmp.le.s32.totalorder 1, %s16
      %p207 = scmp.lt.s32.totalorder %s16, 3
      %p208 = pnand %p206, %p207
      %p209 = pneg %p208
      // Predicated region
      $region9: #{gated_conv.1} parent=5 // pred_check
        _
      $region10: #{gated_conv.1} parent=5 // pred_check_branch
        %211 = sbr.rel (%p208) target = $region12
      $region11: #{gated_conv.1} parent=5 // pred_region
        %s212 = ssub.s32 %s16, 1
        // Predicated region
        $region13: #{gated_conv.1} parent=11 // pred_check
          %p213 = pneg %p149
        $region14: #{gated_conv.1} parent=11 // pred_check_branch
          %215 = sbr.rel (%p213) target = $region16
        $region15: #{gated_conv.1} parent=11 // pred_region
          %s217 = ssub.s32 256, 256
          %218 = vsyncadd [#allocation6], %s217
          %s219 = sshll.u32 %s3, 4
          %s220 = int_to_ptr.vmem [resolvable:$true] %s219
          %225 = dma.vmem_to_smem %s220, 256, [#allocation4], [#allocation6], 128, 128, 8
        $region16: #{gated_conv.1} parent=11 // pred_fallthru
          _
        // Predicated region
        $region17: #{gated_conv.1} parent=11 // pred_check
          %p226 = pneg %p170
        $region18: #{gated_conv.1} parent=11 // pred_check_branch
          %228 = sbr.rel (%p226) target = $region20
        $region19: #{gated_conv.1} parent=11 // pred_region
          %s230 = ssub.s32 16, 16
          %231 = vsyncadd [#allocation8], %s230
          %s233 = sshll.u32 %s4, 4
          %s234 = int_to_ptr.vmem [resolvable:$true] %s233
          %236 = dma.vmem_to_smem %s234, 16, [#allocation7], [#allocation8]
        $region20: #{gated_conv.1} parent=11 // pred_fallthru
          _
      $region12: #{gated_conv.1} parent=5 // pred_fallthru
        _
      %p237 = scmp.lt.s32.totalorder %s16, 2
      // Predicated region
      $region21: #{gated_conv.1} parent=5 // pred_check
        %p238 = pneg %p237
      $region22: #{gated_conv.1} parent=5 // pred_check_branch
        %240 = sbr.rel (%p238) target = $region24
      $region23: #{gated_conv.1} parent=5 // pred_region
        // Predicated region
        $region25: #{gated_conv.1} parent=23 // pred_check
          %p241 = pneg %p50
        $region26: #{gated_conv.1} parent=23 // pred_check_branch
          %243 = sbr.rel (%p241) target = $region28
        $region27: #{gated_conv.1} parent=23 // pred_region
          %s244 = smul.u32 2, %s24
          %p245 = scmp.lt.s32.totalorder %s23, 1
          %s246 = scalar_select %p245, %s23, 1
          %p247 = scmp.lt.s32.totalorder %s244, 1
          %s248 = scalar_select %p247, %s244, 1
          %s249 = smul.addr %s246, 8
          %s250 = sadd.s32 %s248, %s249
          %s251 = smul.addr %s250, 8
          %s252 = scalar_lea.vmem %s0, %s251
          %s253 = smul.u32 2, %s24
        $region28: #{gated_conv.1} parent=23 // pred_fallthru
          _
        // Predicated region
        $region29: #{gated_conv.1} parent=23 // pred_check
          %p254 = pneg %p86
        $region30: #{gated_conv.1} parent=23 // pred_check_branch
          %256 = sbr.rel (%p254) target = $region32
        $region31: #{gated_conv.1} parent=23 // pred_region
          %s257 = sand.u32 %s76, 1
          %s258 = sand.u32 %s76, 1
          %s259 = smul.addr %s258, 32
          %s260 = scalar_lea.vmem [#allocation2], %s259
          %s261 = smul.u32 %s24, 2
          %s262 = ssub.s32 %s261, 1
          %p263 = scmp.gt.s32.totalorder %s262, 0
          %s264 = scalar_select %p263, %s262, 0
          %s265 = smul.addr %s23, 8
          %s266 = sadd.s32 %s264, %s265
          %s267 = smul.addr %s266, 8
          %s268 = scalar_lea.vmem %s1, %s267
          // Predicated region
          $region33: #{gated_conv.1} parent=31 // pred_check
            _
          $region34: #{gated_conv.1} parent=31 // pred_check_branch
            %270 = sbr.rel (0) target = $region36
          $region35: #{gated_conv.1} parent=31 // pred_region
            // Predicated region
            $region37: #{gated_conv.1} parent=35 // pred_check
              _
            $region38: #{gated_conv.1} parent=35 // pred_check_branch
              %272 = sbr.rel (0) target = $region40
            $region39: #{gated_conv.1} parent=35 // pred_region
              // Predicated region
              $region52: #{gated_conv.1} parent=39 // pred_check
                _
              $region53: #{gated_conv.1} parent=39 // pred_check_branch
                %293 = sbr.rel (0) target = $region55
              $region54: #{gated_conv.1} parent=39 // pred_region
                loop: start=0, step=1, limit=1
                $region56: #{gated_conv.1} parent=54 // loop_pre_header
                  _
                $region57: #{gated_conv.1} parent=54 // loop_header
                  %s295 = sphi 0, %s299
                  %p296 = scmp.ge.s32.totalorder %s295, 1
                  %s300 = sphi %s268, %s268
                  %s301 = sphi %s260, %s260
                $region58: #{gated_conv.1} parent=54 // loop_header_branch
                  %298 = sbr.rel (%p296) target = $region62
                $region59: #{gated_conv.1} parent=54 // loop_body
                  %v302 = vld [vmem:[%s300] sm:$0xff]
                  %303 = vst [vmem:[%s301] sm:$0xff] %v302
                  %v304 = vld [vmem:[%s300 + $0x10] sm:$0xff]
                  %305 = vst [vmem:[%s301 + $0x8] sm:$0xff] %v304
                  %v306 = vld [vmem:[%s300 + $0x20] sm:$0xff]
                  %307 = vst [vmem:[%s301 + $0x10] sm:$0xff] %v306
                  %v308 = vld [vmem:[%s300 + $0x30] sm:$0xff]
                  %309 = vst [vmem:[%s301 + $0x18] sm:$0xff] %v308
                $region60: #{gated_conv.1} parent=54 // loop_footer
                  %s299 = sadd.s32 1, %s295
                $region61: #{gated_conv.1} parent=54 // loop_footer_branch
                  %294 = sbr.rel target = $region57
                $region62: #{gated_conv.1} parent=54 // loop_exit
                  _
              $region55: #{gated_conv.1} parent=39 // pred_fallthru
                _
              // Predicated region
              $region63: #{gated_conv.1} parent=39 // pred_check
                _
              $region64: #{gated_conv.1} parent=39 // pred_check_branch
                %311 = sbr.rel target = $region66
              $region65: #{gated_conv.1} parent=39 // pred_region
                _
              $region66: #{gated_conv.1} parent=39 // pred_fallthru
                _
            $region40: #{gated_conv.1} parent=35 // pred_fallthru
              _
            // Predicated region
            $region41: #{gated_conv.1} parent=35 // pred_check
              _
            $region42: #{gated_conv.1} parent=35 // pred_check_branch
              %274 = sbr.rel target = $region44
            $region43: #{gated_conv.1} parent=35 // pred_region
              loop: start=0, step=1, limit=1
              $region45: #{gated_conv.1} parent=43 // loop_pre_header
                _
              $region46: #{gated_conv.1} parent=43 // loop_header
                %s277 = sphi 0, %s281
                %p278 = scmp.ge.s32.totalorder %s277, 1
                %s282 = sphi %s268, %s268
                %s283 = sphi %s260, %s260
              $region47: #{gated_conv.1} parent=43 // loop_header_branch
                %280 = sbr.rel (%p278) target = $region51
              $region48: #{gated_conv.1} parent=43 // loop_body
                %v284 = vld [vmem:[%s282] sm:$0xff]
                %285 = vst [vmem:[%s283] sm:$0xff] %v284
                %v286 = vld [vmem:[%s282 + $0x10] sm:$0xff]
                %287 = vst [vmem:[%s283 + $0x8] sm:$0xff] %v286
                %v288 = vld [vmem:[%s282 + $0x20] sm:$0xff]
                %289 = vst [vmem:[%s283 + $0x10] sm:$0xff] %v288
                %v290 = vld [vmem:[%s282 + $0x30] sm:$0xff]
                %291 = vst [vmem:[%s283 + $0x18] sm:$0xff] %v290
              $region49: #{gated_conv.1} parent=43 // loop_footer
                %s281 = sadd.s32 1, %s277
              $region50: #{gated_conv.1} parent=43 // loop_footer_branch
                %276 = sbr.rel target = $region46
              $region51: #{gated_conv.1} parent=43 // loop_exit
                _
            $region44: #{gated_conv.1} parent=35 // pred_fallthru
              _
          $region36: #{gated_conv.1} parent=31 // pred_fallthru
            _
          %312 = vnop
        $region32: #{gated_conv.1} parent=23 // pred_fallthru
          _
        // Predicated region
        $region67: #{gated_conv.1} parent=23 // pred_check
          %p313 = pneg %p122
        $region68: #{gated_conv.1} parent=23 // pred_check_branch
          %315 = sbr.rel (%p313) target = $region70
        $region69: #{gated_conv.1} parent=23 // pred_region
          %s316 = sand.u32 %s112, 1
          %s317 = sand.u32 %s112, 1
          %s318 = smul.addr %s317, 32
          %s319 = scalar_lea.vmem [#allocation3], %s318
          %s320 = sadd.s32 %s24, 1
          %s321 = smul.u32 %s320, 2
          %p322 = scmp.lt.s32.totalorder %s321, 1
          %s323 = scalar_select %p322, %s321, 1
          %s324 = smul.addr %s23, 8
          %s325 = sadd.s32 %s323, %s324
          %s326 = smul.addr %s325, 8
          %s327 = scalar_lea.vmem %s2, %s326
          // Predicated region
          $region71: #{gated_conv.1} parent=69 // pred_check
            _
          $region72: #{gated_conv.1} parent=69 // pred_check_branch
            %329 = sbr.rel (0) target = $region74
          $region73: #{gated_conv.1} parent=69 // pred_region
            // Predicated region
            $region75: #{gated_conv.1} parent=73 // pred_check
              _
            $region76: #{gated_conv.1} parent=73 // pred_check_branch
              %331 = sbr.rel (0) target = $region78
            $region77: #{gated_conv.1} parent=73 // pred_region
              // Predicated region
              $region90: #{gated_conv.1} parent=77 // pred_check
                _
              $region91: #{gated_conv.1} parent=77 // pred_check_branch
                %352 = sbr.rel (0) target = $region93
              $region92: #{gated_conv.1} parent=77 // pred_region
                loop: start=0, step=1, limit=1
                $region94: #{gated_conv.1} parent=92 // loop_pre_header
                  _
                $region95: #{gated_conv.1} parent=92 // loop_header
                  %s354 = sphi 0, %s358
                  %p355 = scmp.ge.s32.totalorder %s354, 1
                  %s359 = sphi %s327, %s327
                  %s360 = sphi %s319, %s319
                $region96: #{gated_conv.1} parent=92 // loop_header_branch
                  %357 = sbr.rel (%p355) target = $region100
                $region97: #{gated_conv.1} parent=92 // loop_body
                  %v361 = vld [vmem:[%s359] sm:$0xff]
                  %362 = vst [vmem:[%s360] sm:$0xff] %v361
                  %v363 = vld [vmem:[%s359 + $0x10] sm:$0xff]
                  %364 = vst [vmem:[%s360 + $0x8] sm:$0xff] %v363
                  %v365 = vld [vmem:[%s359 + $0x20] sm:$0xff]
                  %366 = vst [vmem:[%s360 + $0x10] sm:$0xff] %v365
                  %v367 = vld [vmem:[%s359 + $0x30] sm:$0xff]
                  %368 = vst [vmem:[%s360 + $0x18] sm:$0xff] %v367
                $region98: #{gated_conv.1} parent=92 // loop_footer
                  %s358 = sadd.s32 1, %s354
                $region99: #{gated_conv.1} parent=92 // loop_footer_branch
                  %353 = sbr.rel target = $region95
                $region100: #{gated_conv.1} parent=92 // loop_exit
                  _
              $region93: #{gated_conv.1} parent=77 // pred_fallthru
                _
              // Predicated region
              $region101: #{gated_conv.1} parent=77 // pred_check
                _
              $region102: #{gated_conv.1} parent=77 // pred_check_branch
                %370 = sbr.rel target = $region104
              $region103: #{gated_conv.1} parent=77 // pred_region
                _
              $region104: #{gated_conv.1} parent=77 // pred_fallthru
                _
            $region78: #{gated_conv.1} parent=73 // pred_fallthru
              _
            // Predicated region
            $region79: #{gated_conv.1} parent=73 // pred_check
              _
            $region80: #{gated_conv.1} parent=73 // pred_check_branch
              %333 = sbr.rel target = $region82
            $region81: #{gated_conv.1} parent=73 // pred_region
              loop: start=0, step=1, limit=1
              $region83: #{gated_conv.1} parent=81 // loop_pre_header
                _
              $region84: #{gated_conv.1} parent=81 // loop_header
                %s336 = sphi 0, %s340
                %p337 = scmp.ge.s32.totalorder %s336, 1
                %s341 = sphi %s327, %s327
                %s342 = sphi %s319, %s319
              $region85: #{gated_conv.1} parent=81 // loop_header_branch
                %339 = sbr.rel (%p337) target = $region89
              $region86: #{gated_conv.1} parent=81 // loop_body
                %v343 = vld [vmem:[%s341] sm:$0xff]
                %344 = vst [vmem:[%s342] sm:$0xff] %v343
                %v345 = vld [vmem:[%s341 + $0x10] sm:$0xff]
                %346 = vst [vmem:[%s342 + $0x8] sm:$0xff] %v345
                %v347 = vld [vmem:[%s341 + $0x20] sm:$0xff]
                %348 = vst [vmem:[%s342 + $0x10] sm:$0xff] %v347
                %v349 = vld [vmem:[%s341 + $0x30] sm:$0xff]
                %350 = vst [vmem:[%s342 + $0x18] sm:$0xff] %v349
              $region87: #{gated_conv.1} parent=81 // loop_footer
                %s340 = sadd.s32 1, %s336
              $region88: #{gated_conv.1} parent=81 // loop_footer_branch
                %335 = sbr.rel target = $region84
              $region89: #{gated_conv.1} parent=81 // loop_exit
                _
            $region82: #{gated_conv.1} parent=73 // pred_fallthru
              _
          $region74: #{gated_conv.1} parent=69 // pred_fallthru
            _
          %371 = vnop
        $region70: #{gated_conv.1} parent=23 // pred_fallthru
          _
      $region24: #{gated_conv.1} parent=5 // pred_fallthru
        _
      %p372 = scmp.le.s32.totalorder 1, %s16
      %p373 = scmp.lt.s32.totalorder %s16, 3
      %p374 = pnand %p372, %p373
      %p375 = pneg %p374
      // Predicated region
      $region105: #{gated_conv.1} parent=5 // pred_check
        _
      $region106: #{gated_conv.1} parent=5 // pred_check_branch
        %377 = sbr.rel (%p374) target = $region108
      $region107: #{gated_conv.1} parent=5 // pred_region
        %s378 = ssub.s32 %s16, 1
        %s379 = sand.u32 %s79, 1
        %s380 = sand.u32 %s79, 1
        %s381 = smul.addr %s380, 32
        %s382 = scalar_lea.vmem [#allocation2], %s381
        // Predicated region
        $region109: #{gated_conv.1} parent=107 // pred_check
          %p383 = pneg %p92
        $region110: #{gated_conv.1} parent=107 // pred_check_branch
          %385 = sbr.rel (%p383) target = $region112
        $region111: #{gated_conv.1} parent=107 // pred_region
          _
        $region112: #{gated_conv.1} parent=107 // pred_fallthru
          _
        %s386 = sand.u32 %s115, 1
        %s387 = sand.u32 %s115, 1
        %s388 = smul.addr %s387, 32
        %s389 = scalar_lea.vmem [#allocation3], %s388
        // Predicated region
        $region113: #{gated_conv.1} parent=107 // pred_check
          %p390 = pneg %p128
        $region114: #{gated_conv.1} parent=107 // pred_check_branch
          %392 = sbr.rel (%p390) target = $region116
        $region115: #{gated_conv.1} parent=107 // pred_region
          _
        $region116: #{gated_conv.1} parent=107 // pred_fallthru
          _
        // Predicated region
        $region117: #{gated_conv.1} parent=107 // pred_check
          %p393 = pneg %p149
        $region118: #{gated_conv.1} parent=107 // pred_check_branch
          %395 = sbr.rel (%p393) target = $region120
        $region119: #{gated_conv.1} parent=107 // pred_region
          %396 = dma.done [#allocation6], 256
        $region120: #{gated_conv.1} parent=107 // pred_fallthru
          _
        // Predicated region
        $region121: #{gated_conv.1} parent=107 // pred_check
          %p397 = pneg %p170
        $region122: #{gated_conv.1} parent=107 // pred_check_branch
          %399 = sbr.rel (%p397) target = $region124
        $region123: #{gated_conv.1} parent=107 // pred_region
          %400 = dma.done [#allocation8], 16
        $region124: #{gated_conv.1} parent=107 // pred_fallthru
          _
        %401 = sfence
        %s402 = smul.u32 2, %s26
        %p403 = scmp.lt.s32.totalorder %s25, 1
        %s404 = scalar_select %p403, %s25, 1
        %p405 = scmp.lt.s32.totalorder %s402, 1
        %s406 = scalar_select %p405, %s402, 1
        %s407 = smul.addr %s404, 8
        %s408 = sadd.s32 %s406, %s407
        %s409 = smul.addr %s408, 8
        %s410 = scalar_lea.vmem %s0, %s409
        %p411 = pneg %p56
        %p412 = pneg %p53
        %s413 = sand.u32 %s79, 1
        %s414 = sand.u32 %s79, 1
        %s415 = smul.addr %s414, 32
        %s416 = scalar_lea.vmem [#allocation2], %s415
        %p417 = pneg %p92
        %p418 = pneg %p89
        %s419 = sand.u32 %s115, 1
        %s420 = sand.u32 %s115, 1
        %s421 = smul.addr %s420, 32
        %s422 = scalar_lea.vmem [#allocation3], %s421
        %p423 = pneg %p128
        %p424 = pneg %p125
        %p425 = pneg %p149
        %p426 = pneg %p146
        %p427 = pneg %p170
        %p428 = pneg %p167
        %p429 = pneg %p198
        %p430 = pneg %p195
        %s431 = sand.u32 %s185, 1
        %s432 = scalar_lea.sflag [#allocation5], %s431
        %s433 = sand.u32 %s185, 1
        %s434 = smul.addr %s433, 128
        %s435 = scalar_lea.vmem [#allocation9], %s434
        %s436 = smul.u32 2, %s26
        %p437 = scmp.lt.s32.totalorder %s25, 1
        %s438 = scalar_select %p437, %s25, 1
        %p439 = scmp.lt.s32.totalorder %s436, 1
        %s440 = scalar_select %p439, %s436, 1
        %s441 = smul.addr %s438, 8
        %s442 = sadd.s32 %s440, %s441
        %s443 = smul.addr %s442, 8
        %s444 = scalar_lea.vmem %s0, %s443
        %s445 = smul.u32 2, %s26
        %s446 = smul.u32 %s26, 2
        %s447 = ssub.s32 %s446, 1
        %p448 = scmp.gt.s32.totalorder %s447, 0
        %s449 = scalar_select %p448, %s447, 0
        %s450 = sadd.s32 %s26, 1
        %s451 = smul.u32 %s450, 2
        %p452 = scmp.lt.s32.totalorder %s451, 1
        %s453 = scalar_select %p452, %s451, 1
        %s454 = smul.u32 2, %s26
        %p455 = scmp.gt.s32.totalorder %s26, 0
        %s456 = scalar_select %p455, 1, 0
        %s457 = scvt.s32.f32 %s456
        %p458 = scmp.lt.s32.totalorder %s26, 0
        %s459 = scalar_select %p458, 1, 0
        %s460 = scvt.s32.f32 %s459
        %v461 = vlaneseq
        %v462 = vshrl.u32 %v461, 7
        %v463 = vadd.s32 %v462, 8
        %v464 = vlaneseq
        %v465 = vand.u32 %v464, 127
        %vm466 = vcmp.eq.s32.totalorder %v462, 0
        %vm467 = vcmp.eq.s32.totalorder %v463, 0
        %vm468 = vcmp.eq.s32.totalorder %v462, 15
        %vm469 = vcmp.eq.s32.totalorder %v463, 15
        %vm470 = vcmp.ge.s32.totalorder %v465, 1
        %vm471 = vcmp.le.s32.totalorder %v465, 14
        %s472 = sld [smem:[#allocation7]]
        %v473 = vstv %s472
        %s474 = sld [smem:[#allocation7 + $0x1]]
        %v475 = vstv %s474
        %s476 = sld [smem:[#allocation7 + $0x2]]
        %v477 = vstv %s476
        %s478 = sld [smem:[#allocation7 + $0x3]]
        %v479 = vstv %s478
        %s480 = sld [smem:[#allocation7 + $0x4]]
        %v481 = vstv %s480
        %s482 = sld [smem:[#allocation7 + $0x5]]
        %v483 = vstv %s482
        %s484 = sld [smem:[#allocation7 + $0x6]]
        %v485 = vstv %s484
        %s486 = sld [smem:[#allocation7 + $0x7]]
        %v487 = vstv %s486
        %s488 = sld [smem:[#allocation7 + $0x8]]
        %v489 = vstv %s488
        %v490 = vld [vmem:[%s444] sm:$0xff]
        %v491 = vld [vmem:[%s444 + $0x8] sm:$0xff]
        %v492 = vld [vmem:[%s382 + $0x7] sm:$0x1]
        %v493 = vstv %s457
        %v494 = vmul.f32 %v492, %v493
        %v495 = vld [vmem:[%s389] sm:$0x1]
        %v496 = vstv %s460
        %v497 = vmul.f32 %v495, %v496
        %v498 = vrot.slane %v490, 7
        %v499 = vrot.slane %v491, 7
        %vm500 = vcmp.lt.s32.totalorder %v462, 1
        %v501 = vsel %vm500, %v498, %v499
        %v502 = vsel %vm500, %v499, %v498
        %v503 = vlaneseq
        %v504 = vshrl.u32 %v503, 7
        %v505 = vsub.s32 0, %v504
        %v506 = vrot.slane %v494, %v505
        %v507 = vsel %vm466, %v506, %v502
        %v508 = vsel %vm467, %v506, %v501
        %v509 = vrot.slane %v490, 1
        %v510 = vrot.slane %v491, 1
        %vm511 = vcmp.lt.s32.totalorder %v462, 7
        %v512 = vsel %vm511, %v509, %v510
        %v513 = vsel %vm511, %v510, %v509
        %v514 = vlaneseq
        %v515 = vshrl.u32 %v514, 7
        %v516 = vsub.s32 0, %v515
        %v517 = vrot.slane %v497, %v516
        %v518 = vsel %vm468, %v517, %v512
        %v519 = vsel %vm469, %v517, %v513
        %vm520 = vcmask 1047680
        %521 = vrot.lane.b32.xlu0 %v507, 16
        %v522 = vpop.permute.xlu0 %521
        %v523 = vsel %vm520, %v522, %v507
        %524 = vrot.lane.b32.xlu0 %v508, 16
        %v525 = vpop.permute.xlu0 %524
        %v526 = vsel %vm520, %v525, %v508
        %527 = vrot.lane.b32.xlu0 %v523, 16
        %v528 = vpop.permute.xlu0 %527
        %529 = vrot.lane.b32.xlu0 %v526, 16
        %v530 = vpop.permute.xlu0 %529
        %v531 = vsel %vm520, %v528, %v507
        %v532 = vsel %vm520, %v530, %v508
        %535 = vrot.lane.b32.xlu0 %v531, 113
        %v536 = vpop.permute.xlu0 %535
        %537 = vrot.lane.b32.xlu0 %v532, 113
        %v538 = vpop.permute.xlu0 %537
        %v541 = vsel %vm470, %v536, 0.0
        %v542 = vsel %vm470, %v538, 0.0
        %s543 = sld [smem:[#allocation4]]
        %v544 = vstv %s543
        %v545 = vmul.f32 %v541, %v544
        %v546 = vmul.f32 %v542, %v544
        %v547 = vadd.f32 %v473, %v545
        %v548 = vadd.f32 %v473, %v546
        %s549 = sld [smem:[#allocation4 + $0x80]]
        %v550 = vstv %s549
        %v551 = vmul.f32 %v541, %v550
        %v552 = vmul.f32 %v542, %v550
        %v553 = vadd.f32 %v475, %v551
        %v554 = vadd.f32 %v475, %v552
        %s555 = sld [smem:[#allocation4 + $0x100]]
        %v556 = vstv %s555
        %v557 = vmul.f32 %v541, %v556
        %v558 = vmul.f32 %v542, %v556
        %v559 = vadd.f32 %v477, %v557
        %v560 = vadd.f32 %v477, %v558
        %s561 = sld [smem:[#allocation4 + $0x180]]
        %v562 = vstv %s561
        %v563 = vmul.f32 %v541, %v562
        %v564 = vmul.f32 %v542, %v562
        %v565 = vadd.f32 %v479, %v563
        %v566 = vadd.f32 %v479, %v564
        %s567 = sld [smem:[#allocation4 + $0x200]]
        %v568 = vstv %s567
        %v569 = vmul.f32 %v541, %v568
        %v570 = vmul.f32 %v542, %v568
        %v571 = vadd.f32 %v481, %v569
        %v572 = vadd.f32 %v481, %v570
        %s573 = sld [smem:[#allocation4 + $0x280]]
        %v574 = vstv %s573
        %v575 = vmul.f32 %v541, %v574
        %v576 = vmul.f32 %v542, %v574
        %v577 = vadd.f32 %v483, %v575
        %v578 = vadd.f32 %v483, %v576
        %s579 = sld [smem:[#allocation4 + $0x300]]
        %v580 = vstv %s579
        %v581 = vmul.f32 %v541, %v580
        %v582 = vmul.f32 %v542, %v580
        %v583 = vadd.f32 %v485, %v581
        %v584 = vadd.f32 %v485, %v582
        %s585 = sld [smem:[#allocation4 + $0x380]]
        %v586 = vstv %s585
        %v587 = vmul.f32 %v541, %v586
        %v588 = vmul.f32 %v542, %v586
        %v589 = vadd.f32 %v487, %v587
        %v590 = vadd.f32 %v487, %v588
        %s591 = sld [smem:[#allocation4 + $0x400]]
        %v592 = vstv %s591
        %v593 = vmul.f32 %v541, %v592
        %v594 = vmul.f32 %v542, %v592
        %v595 = vadd.f32 %v489, %v593
        %v596 = vadd.f32 %v489, %v594
        %s597 = sld [smem:[#allocation4 + $0x1]]
        %v598 = vstv %s597
        %v599 = vmul.f32 %v507, %v598
        %v600 = vmul.f32 %v508, %v598
        %v601 = vadd.f32 %v547, %v599
        %v602 = vadd.f32 %v548, %v600
        %s603 = sld [smem:[#allocation4 + $0x81]]
        %v604 = vstv %s603
        %v605 = vmul.f32 %v507, %v604
        %v606 = vmul.f32 %v508, %v604
        %v607 = vadd.f32 %v553, %v605
        %v608 = vadd.f32 %v554, %v606
        %s609 = sld [smem:[#allocation4 + $0x101]]
        %v610 = vstv %s609
        %v611 = vmul.f32 %v507, %v610
        %v612 = vmul.f32 %v508, %v610
        %v613 = vadd.f32 %v559, %v611
        %v614 = vadd.f32 %v560, %v612
        %s615 = sld [smem:[#allocation4 + $0x181]]
        %v616 = vstv %s615
        %v617 = vmul.f32 %v507, %v616
        %v618 = vmul.f32 %v508, %v616
        %v619 = vadd.f32 %v565, %v617
        %v620 = vadd.f32 %v566, %v618
        %s621 = sld [smem:[#allocation4 + $0x201]]
        %v622 = vstv %s621
        %v623 = vmul.f32 %v507, %v622
        %v624 = vmul.f32 %v508, %v622
        %v625 = vadd.f32 %v571, %v623
        %v626 = vadd.f32 %v572, %v624
        %s627 = sld [smem:[#allocation4 + $0x281]]
        %v628 = vstv %s627
        %v629 = vmul.f32 %v507, %v628
        %v630 = vmul.f32 %v508, %v628
        %v631 = vadd.f32 %v577, %v629
        %v632 = vadd.f32 %v578, %v630
        %s633 = sld [smem:[#allocation4 + $0x301]]
        %v634 = vstv %s633
        %v635 = vmul.f32 %v507, %v634
        %v636 = vmul.f32 %v508, %v634
        %v637 = vadd.f32 %v583, %v635
        %v638 = vadd.f32 %v584, %v636
        %s639 = sld [smem:[#allocation4 + $0x381]]
        %v640 = vstv %s639
        %v641 = vmul.f32 %v507, %v640
        %v642 = vmul.f32 %v508, %v640
        %v643 = vadd.f32 %v589, %v641
        %v644 = vadd.f32 %v590, %v642
        %s645 = sld [smem:[#allocation4 + $0x401]]
        %v646 = vstv %s645
        %v647 = vmul.f32 %v507, %v646
        %v648 = vmul.f32 %v508, %v646
        %v649 = vadd.f32 %v595, %v647
        %v650 = vadd.f32 %v596, %v648
        %651 = vrot.lane.b32.xlu0 %v531, 127
        %v652 = vpop.permute.xlu0 %651
        %653 = vrot.lane.b32.xlu0 %v532, 127
        %v654 = vpop.permute.xlu0 %653
        %v657 = vsel %vm471, %v652, 0.0
        %v658 = vsel %vm471, %v654, 0.0
        %s659 = sld [smem:[#allocation4 + $0x2]]
        %v660 = vstv %s659
        %v661 = vmul.f32 %v657, %v660
        %v662 = vmul.f32 %v658, %v660
        %v663 = vadd.f32 %v601, %v661
        %v664 = vadd.f32 %v602, %v662
        %s665 = sld [smem:[#allocation4 + $0x82]]
        %v666 = vstv %s665
        %v667 = vmul.f32 %v657, %v666
        %v668 = vmul.f32 %v658, %v666
        %v669 = vadd.f32 %v607, %v667
        %v670 = vadd.f32 %v608, %v668
        %s671 = sld [smem:[#allocation4 + $0x102]]
        %v672 = vstv %s671
        %v673 = vmul.f32 %v657, %v672
        %v674 = vmul.f32 %v658, %v672
        %v675 = vadd.f32 %v613, %v673
        %v676 = vadd.f32 %v614, %v674
        %s677 = sld [smem:[#allocation4 + $0x182]]
        %v678 = vstv %s677
        %v679 = vmul.f32 %v657, %v678
        %v680 = vmul.f32 %v658, %v678
        %v681 = vadd.f32 %v619, %v679
        %v682 = vadd.f32 %v620, %v680
        %s683 = sld [smem:[#allocation4 + $0x202]]
        %v684 = vstv %s683
        %v685 = vmul.f32 %v657, %v684
        %v686 = vmul.f32 %v658, %v684
        %v687 = vadd.f32 %v625, %v685
        %v688 = vadd.f32 %v626, %v686
        %s689 = sld [smem:[#allocation4 + $0x282]]
        %v690 = vstv %s689
        %v691 = vmul.f32 %v657, %v690
        %v692 = vmul.f32 %v658, %v690
        %v693 = vadd.f32 %v631, %v691
        %v694 = vadd.f32 %v632, %v692
        %s695 = sld [smem:[#allocation4 + $0x302]]
        %v696 = vstv %s695
        %v697 = vmul.f32 %v657, %v696
        %v698 = vmul.f32 %v658, %v696
        %v699 = vadd.f32 %v637, %v697
        %v700 = vadd.f32 %v638, %v698
        %s701 = sld [smem:[#allocation4 + $0x382]]
        %v702 = vstv %s701
        %v703 = vmul.f32 %v657, %v702
        %v704 = vmul.f32 %v658, %v702
        %v705 = vadd.f32 %v643, %v703
        %v706 = vadd.f32 %v644, %v704
        %s707 = sld [smem:[#allocation4 + $0x402]]
        %v708 = vstv %s707
        %v709 = vmul.f32 %v657, %v708
        %v710 = vmul.f32 %v658, %v708
        %v711 = vadd.f32 %v649, %v709
        %v712 = vadd.f32 %v650, %v710
        %713 = vrot.lane.b32.xlu0 %v490, 16
        %v714 = vpop.permute.xlu0 %713
        %v715 = vsel %vm520, %v714, %v490
        %716 = vrot.lane.b32.xlu0 %v491, 16
        %v717 = vpop.permute.xlu0 %716
        %v718 = vsel %vm520, %v717, %v491
        %719 = vrot.lane.b32.xlu0 %v715, 16
        %v720 = vpop.permute.xlu0 %719
        %721 = vrot.lane.b32.xlu0 %v718, 16
        %v722 = vpop.permute.xlu0 %721
        %v723 = vsel %vm520, %v720, %v490
        %v724 = vsel %vm520, %v722, %v491
        %727 = vrot.lane.b32.xlu0 %v723, 113
        %v728 = vpop.permute.xlu0 %727
        %729 = vrot.lane.b32.xlu0 %v724, 113
        %v730 = vpop.permute.xlu0 %729
        %v733 = vsel %vm470, %v728, 0.0
        %v734 = vsel %vm470, %v730, 0.0
        %s735 = sld [smem:[#allocation4 + $0x3]]
        %v736 = vstv %s735
        %v737 = vmul.f32 %v733, %v736
        %v738 = vmul.f32 %v734, %v736
        %v739 = vadd.f32 %v663, %v737
        %v740 = vadd.f32 %v664, %v738
        %s741 = sld [smem:[#allocation4 + $0x83]]
        %v742 = vstv %s741
        %v743 = vmul.f32 %v733, %v742
        %v744 = vmul.f32 %v734, %v742
        %v745 = vadd.f32 %v669, %v743
        %v746 = vadd.f32 %v670, %v744
        %s747 = sld [smem:[#allocation4 + $0x103]]
        %v748 = vstv %s747
        %v749 = vmul.f32 %v733, %v748
        %v750 = vmul.f32 %v734, %v748
        %v751 = vadd.f32 %v675, %v749
        %v752 = vadd.f32 %v676, %v750
        %s753 = sld [smem:[#allocation4 + $0x183]]
        %v754 = vstv %s753
        %v755 = vmul.f32 %v733, %v754
        %v756 = vmul.f32 %v734, %v754
        %v757 = vadd.f32 %v681, %v755
        %v758 = vadd.f32 %v682, %v756
        %s759 = sld [smem:[#allocation4 + $0x203]]
        %v760 = vstv %s759
        %v761 = vmul.f32 %v733, %v760
        %v762 = vmul.f32 %v734, %v760
        %v763 = vadd.f32 %v687, %v761
        %v764 = vadd.f32 %v688, %v762
        %s765 = sld [smem:[#allocation4 + $0x283]]
        %v766 = vstv %s765
        %v767 = vmul.f32 %v733, %v766
        %v768 = vmul.f32 %v734, %v766
        %v769 = vadd.f32 %v693, %v767
        %v770 = vadd.f32 %v694, %v768
        %s771 = sld [smem:[#allocation4 + $0x303]]
        %v772 = vstv %s771
        %v773 = vmul.f32 %v733, %v772
        %v774 = vmul.f32 %v734, %v772
        %v775 = vadd.f32 %v699, %v773
        %v776 = vadd.f32 %v700, %v774
        %s777 = sld [smem:[#allocation4 + $0x383]]
        %v778 = vstv %s777
        %v779 = vmul.f32 %v733, %v778
        %v780 = vmul.f32 %v734, %v778
        %v781 = vadd.f32 %v705, %v779
        %v782 = vadd.f32 %v706, %v780
        %s783 = sld [smem:[#allocation4 + $0x403]]
        %v784 = vstv %s783
        %v785 = vmul.f32 %v733, %v784
        %v786 = vmul.f32 %v734, %v784
        %v787 = vadd.f32 %v711, %v785
        %v788 = vadd.f32 %v712, %v786
        %s789 = sld [smem:[#allocation4 + $0x4]]
        %v790 = vstv %s789
        %v791 = vmul.f32 %v490, %v790
        %v792 = vmul.f32 %v491, %v790
        %v793 = vadd.f32 %v739, %v791
        %v794 = vadd.f32 %v740, %v792
        %s795 = sld [smem:[#allocation4 + $0x84]]
        %v796 = vstv %s795
        %v797 = vmul.f32 %v490, %v796
        %v798 = vmul.f32 %v491, %v796
        %v799 = vadd.f32 %v745, %v797
        %v800 = vadd.f32 %v746, %v798
        %s801 = sld [smem:[#allocation4 + $0x104]]
        %v802 = vstv %s801
        %v803 = vmul.f32 %v490, %v802
        %v804 = vmul.f32 %v491, %v802
        %v805 = vadd.f32 %v751, %v803
        %v806 = vadd.f32 %v752, %v804
        %s807 = sld [smem:[#allocation4 + $0x184]]
        %v808 = vstv %s807
        %v809 = vmul.f32 %v490, %v808
        %v810 = vmul.f32 %v491, %v808
        %v811 = vadd.f32 %v757, %v809
        %v812 = vadd.f32 %v758, %v810
        %s813 = sld [smem:[#allocation4 + $0x204]]
        %v814 = vstv %s813
        %v815 = vmul.f32 %v490, %v814
        %v816 = vmul.f32 %v491, %v814
        %v817 = vadd.f32 %v763, %v815
        %v818 = vadd.f32 %v764, %v816
        %s819 = sld [smem:[#allocation4 + $0x284]]
        %v820 = vstv %s819
        %v821 = vmul.f32 %v490, %v820
        %v822 = vmul.f32 %v491, %v820
        %v823 = vadd.f32 %v769, %v821
        %v824 = vadd.f32 %v770, %v822
        %s825 = sld [smem:[#allocation4 + $0x304]]
        %v826 = vstv %s825
        %v827 = vmul.f32 %v490, %v826
        %v828 = vmul.f32 %v491, %v826
        %v829 = vadd.f32 %v775, %v827
        %v830 = vadd.f32 %v776, %v828
        %s831 = sld [smem:[#allocation4 + $0x384]]
        %v832 = vstv %s831
        %v833 = vmul.f32 %v490, %v832
        %v834 = vmul.f32 %v491, %v832
        %v835 = vadd.f32 %v781, %v833
        %v836 = vadd.f32 %v782, %v834
        %s837 = sld [smem:[#allocation4 + $0x404]]
        %v838 = vstv %s837
        %v839 = vmul.f32 %v490, %v838
        %v840 = vmul.f32 %v491, %v838
        %v841 = vadd.f32 %v787, %v839
        %v842 = vadd.f32 %v788, %v840
        %843 = vrot.lane.b32.xlu0 %v723, 127
        %v844 = vpop.permute.xlu0 %843
        %845 = vrot.lane.b32.xlu0 %v724, 127
        %v846 = vpop.permute.xlu0 %845
        %v849 = vsel %vm471, %v844, 0.0
        %v850 = vsel %vm471, %v846, 0.0
        %s851 = sld [smem:[#allocation4 + $0x5]]
        %v852 = vstv %s851
        %v853 = vmul.f32 %v849, %v852
        %v854 = vmul.f32 %v850, %v852
        %v855 = vadd.f32 %v793, %v853
        %v856 = vadd.f32 %v794, %v854
        %s857 = sld [smem:[#allocation4 + $0x85]]
        %v858 = vstv %s857
        %v859 = vmul.f32 %v849, %v858
        %v860 = vmul.f32 %v850, %v858
        %v861 = vadd.f32 %v799, %v859
        %v862 = vadd.f32 %v800, %v860
        %s863 = sld [smem:[#allocation4 + $0x105]]
        %v864 = vstv %s863
        %v865 = vmul.f32 %v849, %v864
        %v866 = vmul.f32 %v850, %v864
        %v867 = vadd.f32 %v805, %v865
        %v868 = vadd.f32 %v806, %v866
        %s869 = sld [smem:[#allocation4 + $0x185]]
        %v870 = vstv %s869
        %v871 = vmul.f32 %v849, %v870
        %v872 = vmul.f32 %v850, %v870
        %v873 = vadd.f32 %v811, %v871
        %v874 = vadd.f32 %v812, %v872
        %s875 = sld [smem:[#allocation4 + $0x205]]
        %v876 = vstv %s875
        %v877 = vmul.f32 %v849, %v876
        %v878 = vmul.f32 %v850, %v876
        %v879 = vadd.f32 %v817, %v877
        %v880 = vadd.f32 %v818, %v878
        %s881 = sld [smem:[#allocation4 + $0x285]]
        %v882 = vstv %s881
        %v883 = vmul.f32 %v849, %v882
        %v884 = vmul.f32 %v850, %v882
        %v885 = vadd.f32 %v823, %v883
        %v886 = vadd.f32 %v824, %v884
        %s887 = sld [smem:[#allocation4 + $0x305]]
        %v888 = vstv %s887
        %v889 = vmul.f32 %v849, %v888
        %v890 = vmul.f32 %v850, %v888
        %v891 = vadd.f32 %v829, %v889
        %v892 = vadd.f32 %v830, %v890
        %s893 = sld [smem:[#allocation4 + $0x385]]
        %v894 = vstv %s893
        %v895 = vmul.f32 %v849, %v894
        %v896 = vmul.f32 %v850, %v894
        %v897 = vadd.f32 %v835, %v895
        %v898 = vadd.f32 %v836, %v896
        %s899 = sld [smem:[#allocation4 + $0x405]]
        %v900 = vstv %s899
        %v901 = vmul.f32 %v849, %v900
        %v902 = vmul.f32 %v850, %v900
        %v903 = vadd.f32 %v841, %v901
        %v904 = vadd.f32 %v842, %v902
        %905 = vrot.lane.b32.xlu0 %v518, 16
        %v906 = vpop.permute.xlu0 %905
        %v907 = vsel %vm520, %v906, %v518
        %908 = vrot.lane.b32.xlu0 %v519, 16
        %v909 = vpop.permute.xlu0 %908
        %v910 = vsel %vm520, %v909, %v519
        %911 = vrot.lane.b32.xlu0 %v907, 16
        %v912 = vpop.permute.xlu0 %911
        %913 = vrot.lane.b32.xlu0 %v910, 16
        %v914 = vpop.permute.xlu0 %913
        %v915 = vsel %vm520, %v912, %v518
        %v916 = vsel %vm520, %v914, %v519
        %919 = vrot.lane.b32.xlu0 %v915, 113
        %v920 = vpop.permute.xlu0 %919
        %921 = vrot.lane.b32.xlu0 %v916, 113
        %v922 = vpop.permute.xlu0 %921
        %v925 = vsel %vm470, %v920, 0.0
        %v926 = vsel %vm470, %v922, 0.0
        %s927 = sld [smem:[#allocation4 + $0x6]]
        %v928 = vstv %s927
        %v929 = vmul.f32 %v925, %v928
        %v930 = vmul.f32 %v926, %v928
        %v931 = vadd.f32 %v855, %v929
        %v932 = vadd.f32 %v856, %v930
        %s933 = sld [smem:[#allocation4 + $0x86]]
        %v934 = vstv %s933
        %v935 = vmul.f32 %v925, %v934
        %v936 = vmul.f32 %v926, %v934
        %v937 = vadd.f32 %v861, %v935
        %v938 = vadd.f32 %v862, %v936
        %s939 = sld [smem:[#allocation4 + $0x106]]
        %v940 = vstv %s939
        %v941 = vmul.f32 %v925, %v940
        %v942 = vmul.f32 %v926, %v940
        %v943 = vadd.f32 %v867, %v941
        %v944 = vadd.f32 %v868, %v942
        %s945 = sld [smem:[#allocation4 + $0x186]]
        %v946 = vstv %s945
        %v947 = vmul.f32 %v925, %v946
        %v948 = vmul.f32 %v926, %v946
        %v949 = vadd.f32 %v873, %v947
        %v950 = vadd.f32 %v874, %v948
        %s951 = sld [smem:[#allocation4 + $0x206]]
        %v952 = vstv %s951
        %v953 = vmul.f32 %v925, %v952
        %v954 = vmul.f32 %v926, %v952
        %v955 = vadd.f32 %v879, %v953
        %v956 = vadd.f32 %v880, %v954
        %s957 = sld [smem:[#allocation4 + $0x286]]
        %v958 = vstv %s957
        %v959 = vmul.f32 %v925, %v958
        %v960 = vmul.f32 %v926, %v958
        %v961 = vadd.f32 %v885, %v959
        %v962 = vadd.f32 %v886, %v960
        %s963 = sld [smem:[#allocation4 + $0x306]]
        %v964 = vstv %s963
        %v965 = vmul.f32 %v925, %v964
        %v966 = vmul.f32 %v926, %v964
        %v967 = vadd.f32 %v891, %v965
        %v968 = vadd.f32 %v892, %v966
        %s969 = sld [smem:[#allocation4 + $0x386]]
        %v970 = vstv %s969
        %v971 = vmul.f32 %v925, %v970
        %v972 = vmul.f32 %v926, %v970
        %v973 = vadd.f32 %v897, %v971
        %v974 = vadd.f32 %v898, %v972
        %s975 = sld [smem:[#allocation4 + $0x406]]
        %v976 = vstv %s975
        %v977 = vmul.f32 %v925, %v976
        %v978 = vmul.f32 %v926, %v976
        %v979 = vadd.f32 %v903, %v977
        %v980 = vadd.f32 %v904, %v978
        %s981 = sld [smem:[#allocation4 + $0x7]]
        %v982 = vstv %s981
        %v983 = vmul.f32 %v518, %v982
        %v984 = vmul.f32 %v519, %v982
        %v985 = vadd.f32 %v931, %v983
        %v986 = vadd.f32 %v932, %v984
        %s987 = sld [smem:[#allocation4 + $0x87]]
        %v988 = vstv %s987
        %v989 = vmul.f32 %v518, %v988
        %v990 = vmul.f32 %v519, %v988
        %v991 = vadd.f32 %v937, %v989
        %v992 = vadd.f32 %v938, %v990
        %s993 = sld [smem:[#allocation4 + $0x107]]
        %v994 = vstv %s993
        %v995 = vmul.f32 %v518, %v994
        %v996 = vmul.f32 %v519, %v994
        %v997 = vadd.f32 %v943, %v995
        %v998 = vadd.f32 %v944, %v996
        %s999 = sld [smem:[#allocation4 + $0x187]]
        %v1000 = vstv %s999
        %v1001 = vmul.f32 %v518, %v1000
        %v1002 = vmul.f32 %v519, %v1000
        %v1003 = vadd.f32 %v949, %v1001
        %v1004 = vadd.f32 %v950, %v1002
        %s1005 = sld [smem:[#allocation4 + $0x207]]
        %v1006 = vstv %s1005
        %v1007 = vmul.f32 %v518, %v1006
        %v1008 = vmul.f32 %v519, %v1006
        %v1009 = vadd.f32 %v955, %v1007
        %v1010 = vadd.f32 %v956, %v1008
        %s1011 = sld [smem:[#allocation4 + $0x287]]
        %v1012 = vstv %s1011
        %v1013 = vmul.f32 %v518, %v1012
        %v1014 = vmul.f32 %v519, %v1012
        %v1015 = vadd.f32 %v961, %v1013
        %v1016 = vadd.f32 %v962, %v1014
        %s1017 = sld [smem:[#allocation4 + $0x307]]
        %v1018 = vstv %s1017
        %v1019 = vmul.f32 %v518, %v1018
        %v1020 = vmul.f32 %v519, %v1018
        %v1021 = vadd.f32 %v967, %v1019
        %v1022 = vadd.f32 %v968, %v1020
        %s1023 = sld [smem:[#allocation4 + $0x387]]
        %v1024 = vstv %s1023
        %v1025 = vmul.f32 %v518, %v1024
        %v1026 = vmul.f32 %v519, %v1024
        %v1027 = vadd.f32 %v973, %v1025
        %v1028 = vadd.f32 %v974, %v1026
        %s1029 = sld [smem:[#allocation4 + $0x407]]
        %v1030 = vstv %s1029
        %v1031 = vmul.f32 %v518, %v1030
        %v1032 = vmul.f32 %v519, %v1030
        %v1033 = vadd.f32 %v979, %v1031
        %v1034 = vadd.f32 %v980, %v1032
        %1035 = vrot.lane.b32.xlu0 %v915, 127
        %v1036 = vpop.permute.xlu0 %1035
        %1037 = vrot.lane.b32.xlu0 %v916, 127
        %v1038 = vpop.permute.xlu0 %1037
        %v1041 = vsel %vm471, %v1036, 0.0
        %v1042 = vsel %vm471, %v1038, 0.0
        %s1043 = sld [smem:[#allocation4 + $0x8]]
        %v1044 = vstv %s1043
        %v1045 = vmul.f32 %v1041, %v1044
        %v1046 = vmul.f32 %v1042, %v1044
        %v1047 = vadd.f32 %v985, %v1045
        %v1048 = vadd.f32 %v986, %v1046
        %s1049 = sld [smem:[#allocation4 + $0x88]]
        %v1050 = vstv %s1049
        %v1051 = vmul.f32 %v1041, %v1050
        %v1052 = vmul.f32 %v1042, %v1050
        %v1053 = vadd.f32 %v991, %v1051
        %v1054 = vadd.f32 %v992, %v1052
        %s1055 = sld [smem:[#allocation4 + $0x108]]
        %v1056 = vstv %s1055
        %v1057 = vmul.f32 %v1041, %v1056
        %v1058 = vmul.f32 %v1042, %v1056
        %v1059 = vadd.f32 %v997, %v1057
        %v1060 = vadd.f32 %v998, %v1058
        %s1061 = sld [smem:[#allocation4 + $0x188]]
        %v1062 = vstv %s1061
        %v1063 = vmul.f32 %v1041, %v1062
        %v1064 = vmul.f32 %v1042, %v1062
        %v1065 = vadd.f32 %v1003, %v1063
        %v1066 = vadd.f32 %v1004, %v1064
        %s1067 = sld [smem:[#allocation4 + $0x208]]
        %v1068 = vstv %s1067
        %v1069 = vmul.f32 %v1041, %v1068
        %v1070 = vmul.f32 %v1042, %v1068
        %v1071 = vadd.f32 %v1009, %v1069
        %v1072 = vadd.f32 %v1010, %v1070
        %s1073 = sld [smem:[#allocation4 + $0x288]]
        %v1074 = vstv %s1073
        %v1075 = vmul.f32 %v1041, %v1074
        %v1076 = vmul.f32 %v1042, %v1074
        %v1077 = vadd.f32 %v1015, %v1075
        %v1078 = vadd.f32 %v1016, %v1076
        %s1079 = sld [smem:[#allocation4 + $0x308]]
        %v1080 = vstv %s1079
        %v1081 = vmul.f32 %v1041, %v1080
        %v1082 = vmul.f32 %v1042, %v1080
        %v1083 = vadd.f32 %v1021, %v1081
        %v1084 = vadd.f32 %v1022, %v1082
        %s1085 = sld [smem:[#allocation4 + $0x388]]
        %v1086 = vstv %s1085
        %v1087 = vmul.f32 %v1041, %v1086
        %v1088 = vmul.f32 %v1042, %v1086
        %v1089 = vadd.f32 %v1027, %v1087
        %v1090 = vadd.f32 %v1028, %v1088
        %s1091 = sld [smem:[#allocation4 + $0x408]]
        %v1092 = vstv %s1091
        %v1093 = vmul.f32 %v1041, %v1092
        %v1094 = vmul.f32 %v1042, %v1092
        %v1095 = vadd.f32 %v1033, %v1093
        %v1096 = vadd.f32 %v1034, %v1094
        %s1097 = scalar_lea.vmem %s444, 16
        %v1098 = vld [vmem:[%s1097] sm:$0xff]
        %v1099 = vld [vmem:[%s1097 + $0x8] sm:$0xff]
        %s1100 = scalar_lea.vmem %s382, 8 [#allocation2]
        %v1101 = vld [vmem:[%s1100 + $0x7] sm:$0x1]
        %v1102 = vmul.f32 %v1101, %v493
        %s1103 = scalar_lea.vmem %s389, 8 [#allocation3]
        %v1104 = vld [vmem:[%s1103] sm:$0x1]
        %v1105 = vmul.f32 %v1104, %v496
        %v1106 = vrot.slane %v1098, 7
        %v1107 = vrot.slane %v1099, 7
        %v1108 = vsel %vm500, %v1106, %v1107
        %v1109 = vsel %vm500, %v1107, %v1106
        %v1110 = vlaneseq
        %v1111 = vshrl.u32 %v1110, 7
        %v1112 = vsub.s32 0, %v1111
        %v1113 = vrot.slane %v1102, %v1112
        %v1114 = vsel %vm466, %v1113, %v1109
        %v1115 = vsel %vm467, %v1113, %v1108
        %v1116 = vrot.slane %v1098, 1
        %v1117 = vrot.slane %v1099, 1
        %v1118 = vsel %vm511, %v1116, %v1117
        %v1119 = vsel %vm511, %v1117, %v1116
        %v1120 = vlaneseq
        %v1121 = vshrl.u32 %v1120, 7
        %v1122 = vsub.s32 0, %v1121
        %v1123 = vrot.slane %v1105, %v1122
        %v1124 = vsel %vm468, %v1123, %v1118
        %v1125 = vsel %vm469, %v1123, %v1119
        %1126 = vrot.lane.b32.xlu0 %v1114, 16
        %v1127 = vpop.permute.xlu0 %1126
        %v1128 = vsel %vm520, %v1127, %v1114
        %1129 = vrot.lane.b32.xlu0 %v1115, 16
        %v1130 = vpop.permute.xlu0 %1129
        %v1131 = vsel %vm520, %v1130, %v1115
        %1132 = vrot.lane.b32.xlu0 %v1128, 16
        %v1133 = vpop.permute.xlu0 %1132
        %1134 = vrot.lane.b32.xlu0 %v1131, 16
        %v1135 = vpop.permute.xlu0 %1134
        %v1136 = vsel %vm520, %v1133, %v1114
        %v1137 = vsel %vm520, %v1135, %v1115
        %1140 = vrot.lane.b32.xlu0 %v1136, 113
        %v1141 = vpop.permute.xlu0 %1140
        %1142 = vrot.lane.b32.xlu0 %v1137, 113
        %v1143 = vpop.permute.xlu0 %1142
        %v1146 = vsel %vm470, %v1141, 0.0
        %v1147 = vsel %vm470, %v1143, 0.0
        %s1148 = sld [smem:[#allocation4 + $0x9]]
        %v1149 = vstv %s1148
        %v1150 = vmul.f32 %v1146, %v1149
        %v1151 = vmul.f32 %v1147, %v1149
        %v1152 = vadd.f32 %v1047, %v1150
        %v1153 = vadd.f32 %v1048, %v1151
        %s1154 = sld [smem:[#allocation4 + $0x89]]
        %v1155 = vstv %s1154
        %v1156 = vmul.f32 %v1146, %v1155
        %v1157 = vmul.f32 %v1147, %v1155
        %v1158 = vadd.f32 %v1053, %v1156
        %v1159 = vadd.f32 %v1054, %v1157
        %s1160 = sld [smem:[#allocation4 + $0x109]]
        %v1161 = vstv %s1160
        %v1162 = vmul.f32 %v1146, %v1161
        %v1163 = vmul.f32 %v1147, %v1161
        %v1164 = vadd.f32 %v1059, %v1162
        %v1165 = vadd.f32 %v1060, %v1163
        %s1166 = sld [smem:[#allocation4 + $0x189]]
        %v1167 = vstv %s1166
        %v1168 = vmul.f32 %v1146, %v1167
        %v1169 = vmul.f32 %v1147, %v1167
        %v1170 = vadd.f32 %v1065, %v1168
        %v1171 = vadd.f32 %v1066, %v1169
        %s1172 = sld [smem:[#allocation4 + $0x209]]
        %v1173 = vstv %s1172
        %v1174 = vmul.f32 %v1146, %v1173
        %v1175 = vmul.f32 %v1147, %v1173
        %v1176 = vadd.f32 %v1071, %v1174
        %v1177 = vadd.f32 %v1072, %v1175
        %s1178 = sld [smem:[#allocation4 + $0x289]]
        %v1179 = vstv %s1178
        %v1180 = vmul.f32 %v1146, %v1179
        %v1181 = vmul.f32 %v1147, %v1179
        %v1182 = vadd.f32 %v1077, %v1180
        %v1183 = vadd.f32 %v1078, %v1181
        %s1184 = sld [smem:[#allocation4 + $0x309]]
        %v1185 = vstv %s1184
        %v1186 = vmul.f32 %v1146, %v1185
        %v1187 = vmul.f32 %v1147, %v1185
        %v1188 = vadd.f32 %v1083, %v1186
        %v1189 = vadd.f32 %v1084, %v1187
        %s1190 = sld [smem:[#allocation4 + $0x389]]
        %v1191 = vstv %s1190
        %v1192 = vmul.f32 %v1146, %v1191
        %v1193 = vmul.f32 %v1147, %v1191
        %v1194 = vadd.f32 %v1089, %v1192
        %v1195 = vadd.f32 %v1090, %v1193
        %s1196 = sld [smem:[#allocation4 + $0x409]]
        %v1197 = vstv %s1196
        %v1198 = vmul.f32 %v1146, %v1197
        %v1199 = vmul.f32 %v1147, %v1197
        %v1200 = vadd.f32 %v1095, %v1198
        %v1201 = vadd.f32 %v1096, %v1199
        %s1202 = sld [smem:[#allocation4 + $0xa]]
        %v1203 = vstv %s1202
        %v1204 = vmul.f32 %v1114, %v1203
        %v1205 = vmul.f32 %v1115, %v1203
        %v1206 = vadd.f32 %v1152, %v1204
        %v1207 = vadd.f32 %v1153, %v1205
        %s1208 = sld [smem:[#allocation4 + $0x8a]]
        %v1209 = vstv %s1208
        %v1210 = vmul.f32 %v1114, %v1209
        %v1211 = vmul.f32 %v1115, %v1209
        %v1212 = vadd.f32 %v1158, %v1210
        %v1213 = vadd.f32 %v1159, %v1211
        %s1214 = sld [smem:[#allocation4 + $0x10a]]
        %v1215 = vstv %s1214
        %v1216 = vmul.f32 %v1114, %v1215
        %v1217 = vmul.f32 %v1115, %v1215
        %v1218 = vadd.f32 %v1164, %v1216
        %v1219 = vadd.f32 %v1165, %v1217
        %s1220 = sld [smem:[#allocation4 + $0x18a]]
        %v1221 = vstv %s1220
        %v1222 = vmul.f32 %v1114, %v1221
        %v1223 = vmul.f32 %v1115, %v1221
        %v1224 = vadd.f32 %v1170, %v1222
        %v1225 = vadd.f32 %v1171, %v1223
        %s1226 = sld [smem:[#allocation4 + $0x20a]]
        %v1227 = vstv %s1226
        %v1228 = vmul.f32 %v1114, %v1227
        %v1229 = vmul.f32 %v1115, %v1227
        %v1230 = vadd.f32 %v1176, %v1228
        %v1231 = vadd.f32 %v1177, %v1229
        %s1232 = sld [smem:[#allocation4 + $0x28a]]
        %v1233 = vstv %s1232
        %v1234 = vmul.f32 %v1114, %v1233
        %v1235 = vmul.f32 %v1115, %v1233
        %v1236 = vadd.f32 %v1182, %v1234
        %v1237 = vadd.f32 %v1183, %v1235
        %s1238 = sld [smem:[#allocation4 + $0x30a]]
        %v1239 = vstv %s1238
        %v1240 = vmul.f32 %v1114, %v1239
        %v1241 = vmul.f32 %v1115, %v1239
        %v1242 = vadd.f32 %v1188, %v1240
        %v1243 = vadd.f32 %v1189, %v1241
        %s1244 = sld [smem:[#allocation4 + $0x38a]]
        %v1245 = vstv %s1244
        %v1246 = vmul.f32 %v1114, %v1245
        %v1247 = vmul.f32 %v1115, %v1245
        %v1248 = vadd.f32 %v1194, %v1246
        %v1249 = vadd.f32 %v1195, %v1247
        %s1250 = sld [smem:[#allocation4 + $0x40a]]
        %v1251 = vstv %s1250
        %v1252 = vmul.f32 %v1114, %v1251
        %v1253 = vmul.f32 %v1115, %v1251
        %v1254 = vadd.f32 %v1200, %v1252
        %v1255 = vadd.f32 %v1201, %v1253
        %1256 = vrot.lane.b32.xlu0 %v1136, 127
        %v1257 = vpop.permute.xlu0 %1256
        %1258 = vrot.lane.b32.xlu0 %v1137, 127
        %v1259 = vpop.permute.xlu0 %1258
        %v1262 = vsel %vm471, %v1257, 0.0
        %v1263 = vsel %vm471, %v1259, 0.0
        %s1264 = sld [smem:[#allocation4 + $0xb]]
        %v1265 = vstv %s1264
        %v1266 = vmul.f32 %v1262, %v1265
        %v1267 = vmul.f32 %v1263, %v1265
        %v1268 = vadd.f32 %v1206, %v1266
        %v1269 = vadd.f32 %v1207, %v1267
        %s1270 = sld [smem:[#allocation4 + $0x8b]]
        %v1271 = vstv %s1270
        %v1272 = vmul.f32 %v1262, %v1271
        %v1273 = vmul.f32 %v1263, %v1271
        %v1274 = vadd.f32 %v1212, %v1272
        %v1275 = vadd.f32 %v1213, %v1273
        %s1276 = sld [smem:[#allocation4 + $0x10b]]
        %v1277 = vstv %s1276
        %v1278 = vmul.f32 %v1262, %v1277
        %v1279 = vmul.f32 %v1263, %v1277
        %v1280 = vadd.f32 %v1218, %v1278
        %v1281 = vadd.f32 %v1219, %v1279
        %s1282 = sld [smem:[#allocation4 + $0x18b]]
        %v1283 = vstv %s1282
        %v1284 = vmul.f32 %v1262, %v1283
        %v1285 = vmul.f32 %v1263, %v1283
        %v1286 = vadd.f32 %v1224, %v1284
        %v1287 = vadd.f32 %v1225, %v1285
        %s1288 = sld [smem:[#allocation4 + $0x20b]]
        %v1289 = vstv %s1288
        %v1290 = vmul.f32 %v1262, %v1289
        %v1291 = vmul.f32 %v1263, %v1289
        %v1292 = vadd.f32 %v1230, %v1290
        %v1293 = vadd.f32 %v1231, %v1291
        %s1294 = sld [smem:[#allocation4 + $0x28b]]
        %v1295 = vstv %s1294
        %v1296 = vmul.f32 %v1262, %v1295
        %v1297 = vmul.f32 %v1263, %v1295
        %v1298 = vadd.f32 %v1236, %v1296
        %v1299 = vadd.f32 %v1237, %v1297
        %s1300 = sld [smem:[#allocation4 + $0x30b]]
        %v1301 = vstv %s1300
        %v1302 = vmul.f32 %v1262, %v1301
        %v1303 = vmul.f32 %v1263, %v1301
        %v1304 = vadd.f32 %v1242, %v1302
        %v1305 = vadd.f32 %v1243, %v1303
        %s1306 = sld [smem:[#allocation4 + $0x38b]]
        %v1307 = vstv %s1306
        %v1308 = vmul.f32 %v1262, %v1307
        %v1309 = vmul.f32 %v1263, %v1307
        %v1310 = vadd.f32 %v1248, %v1308
        %v1311 = vadd.f32 %v1249, %v1309
        %s1312 = sld [smem:[#allocation4 + $0x40b]]
        %v1313 = vstv %s1312
        %v1314 = vmul.f32 %v1262, %v1313
        %v1315 = vmul.f32 %v1263, %v1313
        %v1316 = vadd.f32 %v1254, %v1314
        %v1317 = vadd.f32 %v1255, %v1315
        %1318 = vrot.lane.b32.xlu0 %v1098, 16
        %v1319 = vpop.permute.xlu0 %1318
        %v1320 = vsel %vm520, %v1319, %v1098
        %1321 = vrot.lane.b32.xlu0 %v1099, 16
        %v1322 = vpop.permute.xlu0 %1321
        %v1323 = vsel %vm520, %v1322, %v1099
        %1324 = vrot.lane.b32.xlu0 %v1320, 16
        %v1325 = vpop.permute.xlu0 %1324
        %1326 = vrot.lane.b32.xlu0 %v1323, 16
        %v1327 = vpop.permute.xlu0 %1326
        %v1328 = vsel %vm520, %v1325, %v1098
        %v1329 = vsel %vm520, %v1327, %v1099
        %1332 = vrot.lane.b32.xlu0 %v1328, 113
        %v1333 = vpop.permute.xlu0 %1332
        %1334 = vrot.lane.b32.xlu0 %v1329, 113
        %v1335 = vpop.permute.xlu0 %1334
        %v1338 = vsel %vm470, %v1333, 0.0
        %v1339 = vsel %vm470, %v1335, 0.0
        %s1340 = sld [smem:[#allocation4 + $0xc]]
        %v1341 = vstv %s1340
        %v1342 = vmul.f32 %v1338, %v1341
        %v1343 = vmul.f32 %v1339, %v1341
        %v1344 = vadd.f32 %v1268, %v1342
        %v1345 = vadd.f32 %v1269, %v1343
        %s1346 = sld [smem:[#allocation4 + $0x8c]]
        %v1347 = vstv %s1346
        %v1348 = vmul.f32 %v1338, %v1347
        %v1349 = vmul.f32 %v1339, %v1347
        %v1350 = vadd.f32 %v1274, %v1348
        %v1351 = vadd.f32 %v1275, %v1349
        %s1352 = sld [smem:[#allocation4 + $0x10c]]
        %v1353 = vstv %s1352
        %v1354 = vmul.f32 %v1338, %v1353
        %v1355 = vmul.f32 %v1339, %v1353
        %v1356 = vadd.f32 %v1280, %v1354
        %v1357 = vadd.f32 %v1281, %v1355
        %s1358 = sld [smem:[#allocation4 + $0x18c]]
        %v1359 = vstv %s1358
        %v1360 = vmul.f32 %v1338, %v1359
        %v1361 = vmul.f32 %v1339, %v1359
        %v1362 = vadd.f32 %v1286, %v1360
        %v1363 = vadd.f32 %v1287, %v1361
        %s1364 = sld [smem:[#allocation4 + $0x20c]]
        %v1365 = vstv %s1364
        %v1366 = vmul.f32 %v1338, %v1365
        %v1367 = vmul.f32 %v1339, %v1365
        %v1368 = vadd.f32 %v1292, %v1366
        %v1369 = vadd.f32 %v1293, %v1367
        %s1370 = sld [smem:[#allocation4 + $0x28c]]
        %v1371 = vstv %s1370
        %v1372 = vmul.f32 %v1338, %v1371
        %v1373 = vmul.f32 %v1339, %v1371
        %v1374 = vadd.f32 %v1298, %v1372
        %v1375 = vadd.f32 %v1299, %v1373
        %s1376 = sld [smem:[#allocation4 + $0x30c]]
        %v1377 = vstv %s1376
        %v1378 = vmul.f32 %v1338, %v1377
        %v1379 = vmul.f32 %v1339, %v1377
        %v1380 = vadd.f32 %v1304, %v1378
        %v1381 = vadd.f32 %v1305, %v1379
        %s1382 = sld [smem:[#allocation4 + $0x38c]]
        %v1383 = vstv %s1382
        %v1384 = vmul.f32 %v1338, %v1383
        %v1385 = vmul.f32 %v1339, %v1383
        %v1386 = vadd.f32 %v1310, %v1384
        %v1387 = vadd.f32 %v1311, %v1385
        %s1388 = sld [smem:[#allocation4 + $0x40c]]
        %v1389 = vstv %s1388
        %v1390 = vmul.f32 %v1338, %v1389
        %v1391 = vmul.f32 %v1339, %v1389
        %v1392 = vadd.f32 %v1316, %v1390
        %v1393 = vadd.f32 %v1317, %v1391
        %s1394 = sld [smem:[#allocation4 + $0xd]]
        %v1395 = vstv %s1394
        %v1396 = vmul.f32 %v1098, %v1395
        %v1397 = vmul.f32 %v1099, %v1395
        %v1398 = vadd.f32 %v1344, %v1396
        %v1399 = vadd.f32 %v1345, %v1397
        %s1400 = sld [smem:[#allocation4 + $0x8d]]
        %v1401 = vstv %s1400
        %v1402 = vmul.f32 %v1098, %v1401
        %v1403 = vmul.f32 %v1099, %v1401
        %v1404 = vadd.f32 %v1350, %v1402
        %v1405 = vadd.f32 %v1351, %v1403
        %s1406 = sld [smem:[#allocation4 + $0x10d]]
        %v1407 = vstv %s1406
        %v1408 = vmul.f32 %v1098, %v1407
        %v1409 = vmul.f32 %v1099, %v1407
        %v1410 = vadd.f32 %v1356, %v1408
        %v1411 = vadd.f32 %v1357, %v1409
        %s1412 = sld [smem:[#allocation4 + $0x18d]]
        %v1413 = vstv %s1412
        %v1414 = vmul.f32 %v1098, %v1413
        %v1415 = vmul.f32 %v1099, %v1413
        %v1416 = vadd.f32 %v1362, %v1414
        %v1417 = vadd.f32 %v1363, %v1415
        %s1418 = sld [smem:[#allocation4 + $0x20d]]
        %v1419 = vstv %s1418
        %v1420 = vmul.f32 %v1098, %v1419
        %v1421 = vmul.f32 %v1099, %v1419
        %v1422 = vadd.f32 %v1368, %v1420
        %v1423 = vadd.f32 %v1369, %v1421
        %s1424 = sld [smem:[#allocation4 + $0x28d]]
        %v1425 = vstv %s1424
        %v1426 = vmul.f32 %v1098, %v1425
        %v1427 = vmul.f32 %v1099, %v1425
        %v1428 = vadd.f32 %v1374, %v1426
        %v1429 = vadd.f32 %v1375, %v1427
        %s1430 = sld [smem:[#allocation4 + $0x30d]]
        %v1431 = vstv %s1430
        %v1432 = vmul.f32 %v1098, %v1431
        %v1433 = vmul.f32 %v1099, %v1431
        %v1434 = vadd.f32 %v1380, %v1432
        %v1435 = vadd.f32 %v1381, %v1433
        %s1436 = sld [smem:[#allocation4 + $0x38d]]
        %v1437 = vstv %s1436
        %v1438 = vmul.f32 %v1098, %v1437
        %v1439 = vmul.f32 %v1099, %v1437
        %v1440 = vadd.f32 %v1386, %v1438
        %v1441 = vadd.f32 %v1387, %v1439
        %s1442 = sld [smem:[#allocation4 + $0x40d]]
        %v1443 = vstv %s1442
        %v1444 = vmul.f32 %v1098, %v1443
        %v1445 = vmul.f32 %v1099, %v1443
        %v1446 = vadd.f32 %v1392, %v1444
        %v1447 = vadd.f32 %v1393, %v1445
        %1448 = vrot.lane.b32.xlu0 %v1328, 127
        %v1449 = vpop.permute.xlu0 %1448
        %1450 = vrot.lane.b32.xlu0 %v1329, 127
        %v1451 = vpop.permute.xlu0 %1450
        %v1454 = vsel %vm471, %v1449, 0.0
        %v1455 = vsel %vm471, %v1451, 0.0
        %s1456 = sld [smem:[#allocation4 + $0xe]]
        %v1457 = vstv %s1456
        %v1458 = vmul.f32 %v1454, %v1457
        %v1459 = vmul.f32 %v1455, %v1457
        %v1460 = vadd.f32 %v1398, %v1458
        %v1461 = vadd.f32 %v1399, %v1459
        %s1462 = sld [smem:[#allocation4 + $0x8e]]
        %v1463 = vstv %s1462
        %v1464 = vmul.f32 %v1454, %v1463
        %v1465 = vmul.f32 %v1455, %v1463
        %v1466 = vadd.f32 %v1404, %v1464
        %v1467 = vadd.f32 %v1405, %v1465
        %s1468 = sld [smem:[#allocation4 + $0x10e]]
        %v1469 = vstv %s1468
        %v1470 = vmul.f32 %v1454, %v1469
        %v1471 = vmul.f32 %v1455, %v1469
        %v1472 = vadd.f32 %v1410, %v1470
        %v1473 = vadd.f32 %v1411, %v1471
        %s1474 = sld [smem:[#allocation4 + $0x18e]]
        %v1475 = vstv %s1474
        %v1476 = vmul.f32 %v1454, %v1475
        %v1477 = vmul.f32 %v1455, %v1475
        %v1478 = vadd.f32 %v1416, %v1476
        %v1479 = vadd.f32 %v1417, %v1477
        %s1480 = sld [smem:[#allocation4 + $0x20e]]
        %v1481 = vstv %s1480
        %v1482 = vmul.f32 %v1454, %v1481
        %v1483 = vmul.f32 %v1455, %v1481
        %v1484 = vadd.f32 %v1422, %v1482
        %v1485 = vadd.f32 %v1423, %v1483
        %s1486 = sld [smem:[#allocation4 + $0x28e]]
        %v1487 = vstv %s1486
        %v1488 = vmul.f32 %v1454, %v1487
        %v1489 = vmul.f32 %v1455, %v1487
        %v1490 = vadd.f32 %v1428, %v1488
        %v1491 = vadd.f32 %v1429, %v1489
        %s1492 = sld [smem:[#allocation4 + $0x30e]]
        %v1493 = vstv %s1492
        %v1494 = vmul.f32 %v1454, %v1493
        %v1495 = vmul.f32 %v1455, %v1493
        %v1496 = vadd.f32 %v1434, %v1494
        %v1497 = vadd.f32 %v1435, %v1495
        %s1498 = sld [smem:[#allocation4 + $0x38e]]
        %v1499 = vstv %s1498
        %v1500 = vmul.f32 %v1454, %v1499
        %v1501 = vmul.f32 %v1455, %v1499
        %v1502 = vadd.f32 %v1440, %v1500
        %v1503 = vadd.f32 %v1441, %v1501
        %s1504 = sld [smem:[#allocation4 + $0x40e]]
        %v1505 = vstv %s1504
        %v1506 = vmul.f32 %v1454, %v1505
        %v1507 = vmul.f32 %v1455, %v1505
        %v1508 = vadd.f32 %v1446, %v1506
        %v1509 = vadd.f32 %v1447, %v1507
        %1510 = vrot.lane.b32.xlu0 %v1124, 16
        %v1511 = vpop.permute.xlu0 %1510
        %v1512 = vsel %vm520, %v1511, %v1124
        %1513 = vrot.lane.b32.xlu0 %v1125, 16
        %v1514 = vpop.permute.xlu0 %1513
        %v1515 = vsel %vm520, %v1514, %v1125
        %1516 = vrot.lane.b32.xlu0 %v1512, 16
        %v1517 = vpop.permute.xlu0 %1516
        %1518 = vrot.lane.b32.xlu0 %v1515, 16
        %v1519 = vpop.permute.xlu0 %1518
        %v1520 = vsel %vm520, %v1517, %v1124
        %v1521 = vsel %vm520, %v1519, %v1125
        %1524 = vrot.lane.b32.xlu0 %v1520, 113
        %v1525 = vpop.permute.xlu0 %1524
        %1526 = vrot.lane.b32.xlu0 %v1521, 113
        %v1527 = vpop.permute.xlu0 %1526
        %v1530 = vsel %vm470, %v1525, 0.0
        %v1531 = vsel %vm470, %v1527, 0.0
        %s1532 = sld [smem:[#allocation4 + $0xf]]
        %v1533 = vstv %s1532
        %v1534 = vmul.f32 %v1530, %v1533
        %v1535 = vmul.f32 %v1531, %v1533
        %v1536 = vadd.f32 %v1460, %v1534
        %v1537 = vadd.f32 %v1461, %v1535
        %s1538 = sld [smem:[#allocation4 + $0x8f]]
        %v1539 = vstv %s1538
        %v1540 = vmul.f32 %v1530, %v1539
        %v1541 = vmul.f32 %v1531, %v1539
        %v1542 = vadd.f32 %v1466, %v1540
        %v1543 = vadd.f32 %v1467, %v1541
        %s1544 = sld [smem:[#allocation4 + $0x10f]]
        %v1545 = vstv %s1544
        %v1546 = vmul.f32 %v1530, %v1545
        %v1547 = vmul.f32 %v1531, %v1545
        %v1548 = vadd.f32 %v1472, %v1546
        %v1549 = vadd.f32 %v1473, %v1547
        %s1550 = sld [smem:[#allocation4 + $0x18f]]
        %v1551 = vstv %s1550
        %v1552 = vmul.f32 %v1530, %v1551
        %v1553 = vmul.f32 %v1531, %v1551
        %v1554 = vadd.f32 %v1478, %v1552
        %v1555 = vadd.f32 %v1479, %v1553
        %s1556 = sld [smem:[#allocation4 + $0x20f]]
        %v1557 = vstv %s1556
        %v1558 = vmul.f32 %v1530, %v1557
        %v1559 = vmul.f32 %v1531, %v1557
        %v1560 = vadd.f32 %v1484, %v1558
        %v1561 = vadd.f32 %v1485, %v1559
        %s1562 = sld [smem:[#allocation4 + $0x28f]]
        %v1563 = vstv %s1562
        %v1564 = vmul.f32 %v1530, %v1563
        %v1565 = vmul.f32 %v1531, %v1563
        %v1566 = vadd.f32 %v1490, %v1564
        %v1567 = vadd.f32 %v1491, %v1565
        %s1568 = sld [smem:[#allocation4 + $0x30f]]
        %v1569 = vstv %s1568
        %v1570 = vmul.f32 %v1530, %v1569
        %v1571 = vmul.f32 %v1531, %v1569
        %v1572 = vadd.f32 %v1496, %v1570
        %v1573 = vadd.f32 %v1497, %v1571
        %s1574 = sld [smem:[#allocation4 + $0x38f]]
        %v1575 = vstv %s1574
        %v1576 = vmul.f32 %v1530, %v1575
        %v1577 = vmul.f32 %v1531, %v1575
        %v1578 = vadd.f32 %v1502, %v1576
        %v1579 = vadd.f32 %v1503, %v1577
        %s1580 = sld [smem:[#allocation4 + $0x40f]]
        %v1581 = vstv %s1580
        %v1582 = vmul.f32 %v1530, %v1581
        %v1583 = vmul.f32 %v1531, %v1581
        %v1584 = vadd.f32 %v1508, %v1582
        %v1585 = vadd.f32 %v1509, %v1583
        %s1586 = sld [smem:[#allocation4 + $0x10]]
        %v1587 = vstv %s1586
        %v1588 = vmul.f32 %v1124, %v1587
        %v1589 = vmul.f32 %v1125, %v1587
        %v1590 = vadd.f32 %v1536, %v1588
        %v1591 = vadd.f32 %v1537, %v1589
        %s1592 = sld [smem:[#allocation4 + $0x90]]
        %v1593 = vstv %s1592
        %v1594 = vmul.f32 %v1124, %v1593
        %v1595 = vmul.f32 %v1125, %v1593
        %v1596 = vadd.f32 %v1542, %v1594
        %v1597 = vadd.f32 %v1543, %v1595
        %s1598 = sld [smem:[#allocation4 + $0x110]]
        %v1599 = vstv %s1598
        %v1600 = vmul.f32 %v1124, %v1599
        %v1601 = vmul.f32 %v1125, %v1599
        %v1602 = vadd.f32 %v1548, %v1600
        %v1603 = vadd.f32 %v1549, %v1601
        %s1604 = sld [smem:[#allocation4 + $0x190]]
        %v1605 = vstv %s1604
        %v1606 = vmul.f32 %v1124, %v1605
        %v1607 = vmul.f32 %v1125, %v1605
        %v1608 = vadd.f32 %v1554, %v1606
        %v1609 = vadd.f32 %v1555, %v1607
        %s1610 = sld [smem:[#allocation4 + $0x210]]
        %v1611 = vstv %s1610
        %v1612 = vmul.f32 %v1124, %v1611
        %v1613 = vmul.f32 %v1125, %v1611
        %v1614 = vadd.f32 %v1560, %v1612
        %v1615 = vadd.f32 %v1561, %v1613
        %s1616 = sld [smem:[#allocation4 + $0x290]]
        %v1617 = vstv %s1616
        %v1618 = vmul.f32 %v1124, %v1617
        %v1619 = vmul.f32 %v1125, %v1617
        %v1620 = vadd.f32 %v1566, %v1618
        %v1621 = vadd.f32 %v1567, %v1619
        %s1622 = sld [smem:[#allocation4 + $0x310]]
        %v1623 = vstv %s1622
        %v1624 = vmul.f32 %v1124, %v1623
        %v1625 = vmul.f32 %v1125, %v1623
        %v1626 = vadd.f32 %v1572, %v1624
        %v1627 = vadd.f32 %v1573, %v1625
        %s1628 = sld [smem:[#allocation4 + $0x390]]
        %v1629 = vstv %s1628
        %v1630 = vmul.f32 %v1124, %v1629
        %v1631 = vmul.f32 %v1125, %v1629
        %v1632 = vadd.f32 %v1578, %v1630
        %v1633 = vadd.f32 %v1579, %v1631
        %s1634 = sld [smem:[#allocation4 + $0x410]]
        %v1635 = vstv %s1634
        %v1636 = vmul.f32 %v1124, %v1635
        %v1637 = vmul.f32 %v1125, %v1635
        %v1638 = vadd.f32 %v1584, %v1636
        %v1639 = vadd.f32 %v1585, %v1637
        %1640 = vrot.lane.b32.xlu0 %v1520, 127
        %v1641 = vpop.permute.xlu0 %1640
        %1642 = vrot.lane.b32.xlu0 %v1521, 127
        %v1643 = vpop.permute.xlu0 %1642
        %v1646 = vsel %vm471, %v1641, 0.0
        %v1647 = vsel %vm471, %v1643, 0.0
        %s1648 = sld [smem:[#allocation4 + $0x11]]
        %v1649 = vstv %s1648
        %v1650 = vmul.f32 %v1646, %v1649
        %v1651 = vmul.f32 %v1647, %v1649
        %v1652 = vadd.f32 %v1590, %v1650
        %v1653 = vadd.f32 %v1591, %v1651
        %s1654 = sld [smem:[#allocation4 + $0x91]]
        %v1655 = vstv %s1654
        %v1656 = vmul.f32 %v1646, %v1655
        %v1657 = vmul.f32 %v1647, %v1655
        %v1658 = vadd.f32 %v1596, %v1656
        %v1659 = vadd.f32 %v1597, %v1657
        %s1660 = sld [smem:[#allocation4 + $0x111]]
        %v1661 = vstv %s1660
        %v1662 = vmul.f32 %v1646, %v1661
        %v1663 = vmul.f32 %v1647, %v1661
        %v1664 = vadd.f32 %v1602, %v1662
        %v1665 = vadd.f32 %v1603, %v1663
        %s1666 = sld [smem:[#allocation4 + $0x191]]
        %v1667 = vstv %s1666
        %v1668 = vmul.f32 %v1646, %v1667
        %v1669 = vmul.f32 %v1647, %v1667
        %v1670 = vadd.f32 %v1608, %v1668
        %v1671 = vadd.f32 %v1609, %v1669
        %s1672 = sld [smem:[#allocation4 + $0x211]]
        %v1673 = vstv %s1672
        %v1674 = vmul.f32 %v1646, %v1673
        %v1675 = vmul.f32 %v1647, %v1673
        %v1676 = vadd.f32 %v1614, %v1674
        %v1677 = vadd.f32 %v1615, %v1675
        %s1678 = sld [smem:[#allocation4 + $0x291]]
        %v1679 = vstv %s1678
        %v1680 = vmul.f32 %v1646, %v1679
        %v1681 = vmul.f32 %v1647, %v1679
        %v1682 = vadd.f32 %v1620, %v1680
        %v1683 = vadd.f32 %v1621, %v1681
        %s1684 = sld [smem:[#allocation4 + $0x311]]
        %v1685 = vstv %s1684
        %v1686 = vmul.f32 %v1646, %v1685
        %v1687 = vmul.f32 %v1647, %v1685
        %v1688 = vadd.f32 %v1626, %v1686
        %v1689 = vadd.f32 %v1627, %v1687
        %s1690 = sld [smem:[#allocation4 + $0x391]]
        %v1691 = vstv %s1690
        %v1692 = vmul.f32 %v1646, %v1691
        %v1693 = vmul.f32 %v1647, %v1691
        %v1694 = vadd.f32 %v1632, %v1692
        %v1695 = vadd.f32 %v1633, %v1693
        %s1696 = sld [smem:[#allocation4 + $0x411]]
        %v1697 = vstv %s1696
        %v1698 = vmul.f32 %v1646, %v1697
        %v1699 = vmul.f32 %v1647, %v1697
        %v1700 = vadd.f32 %v1638, %v1698
        %v1701 = vadd.f32 %v1639, %v1699
        %s1702 = scalar_lea.vmem %s444, 32
        %v1703 = vld [vmem:[%s1702] sm:$0xff]
        %v1704 = vld [vmem:[%s1702 + $0x8] sm:$0xff]
        %s1705 = scalar_lea.vmem %s382, 16 [#allocation2]
        %v1706 = vld [vmem:[%s1705 + $0x7] sm:$0x1]
        %v1707 = vmul.f32 %v1706, %v493
        %s1708 = scalar_lea.vmem %s389, 16 [#allocation3]
        %v1709 = vld [vmem:[%s1708] sm:$0x1]
        %v1710 = vmul.f32 %v1709, %v496
        %v1711 = vrot.slane %v1703, 7
        %v1712 = vrot.slane %v1704, 7
        %v1713 = vsel %vm500, %v1711, %v1712
        %v1714 = vsel %vm500, %v1712, %v1711
        %v1715 = vlaneseq
        %v1716 = vshrl.u32 %v1715, 7
        %v1717 = vsub.s32 0, %v1716
        %v1718 = vrot.slane %v1707, %v1717
        %v1719 = vsel %vm466, %v1718, %v1714
        %v1720 = vsel %vm467, %v1718, %v1713
        %v1721 = vrot.slane %v1703, 1
        %v1722 = vrot.slane %v1704, 1
        %v1723 = vsel %vm511, %v1721, %v1722
        %v1724 = vsel %vm511, %v1722, %v1721
        %v1725 = vlaneseq
        %v1726 = vshrl.u32 %v1725, 7
        %v1727 = vsub.s32 0, %v1726
        %v1728 = vrot.slane %v1710, %v1727
        %v1729 = vsel %vm468, %v1728, %v1723
        %v1730 = vsel %vm469, %v1728, %v1724
        %1731 = vrot.lane.b32.xlu0 %v1719, 16
        %v1732 = vpop.permute.xlu0 %1731
        %v1733 = vsel %vm520, %v1732, %v1719
        %1734 = vrot.lane.b32.xlu0 %v1720, 16
        %v1735 = vpop.permute.xlu0 %1734
        %v1736 = vsel %vm520, %v1735, %v1720
        %1737 = vrot.lane.b32.xlu0 %v1733, 16
        %v1738 = vpop.permute.xlu0 %1737
        %1739 = vrot.lane.b32.xlu0 %v1736, 16
        %v1740 = vpop.permute.xlu0 %1739
        %v1741 = vsel %vm520, %v1738, %v1719
        %v1742 = vsel %vm520, %v1740, %v1720
        %1745 = vrot.lane.b32.xlu0 %v1741, 113
        %v1746 = vpop.permute.xlu0 %1745
        %1747 = vrot.lane.b32.xlu0 %v1742, 113
        %v1748 = vpop.permute.xlu0 %1747
        %v1751 = vsel %vm470, %v1746, 0.0
        %v1752 = vsel %vm470, %v1748, 0.0
        %s1753 = sld [smem:[#allocation4 + $0x12]]
        %v1754 = vstv %s1753
        %v1755 = vmul.f32 %v1751, %v1754
        %v1756 = vmul.f32 %v1752, %v1754
        %v1757 = vadd.f32 %v1652, %v1755
        %v1758 = vadd.f32 %v1653, %v1756
        %s1759 = sld [smem:[#allocation4 + $0x92]]
        %v1760 = vstv %s1759
        %v1761 = vmul.f32 %v1751, %v1760
        %v1762 = vmul.f32 %v1752, %v1760
        %v1763 = vadd.f32 %v1658, %v1761
        %v1764 = vadd.f32 %v1659, %v1762
        %s1765 = sld [smem:[#allocation4 + $0x112]]
        %v1766 = vstv %s1765
        %v1767 = vmul.f32 %v1751, %v1766
        %v1768 = vmul.f32 %v1752, %v1766
        %v1769 = vadd.f32 %v1664, %v1767
        %v1770 = vadd.f32 %v1665, %v1768
        %s1771 = sld [smem:[#allocation4 + $0x192]]
        %v1772 = vstv %s1771
        %v1773 = vmul.f32 %v1751, %v1772
        %v1774 = vmul.f32 %v1752, %v1772
        %v1775 = vadd.f32 %v1670, %v1773
        %v1776 = vadd.f32 %v1671, %v1774
        %s1777 = sld [smem:[#allocation4 + $0x212]]
        %v1778 = vstv %s1777
        %v1779 = vmul.f32 %v1751, %v1778
        %v1780 = vmul.f32 %v1752, %v1778
        %v1781 = vadd.f32 %v1676, %v1779
        %v1782 = vadd.f32 %v1677, %v1780
        %s1783 = sld [smem:[#allocation4 + $0x292]]
        %v1784 = vstv %s1783
        %v1785 = vmul.f32 %v1751, %v1784
        %v1786 = vmul.f32 %v1752, %v1784
        %v1787 = vadd.f32 %v1682, %v1785
        %v1788 = vadd.f32 %v1683, %v1786
        %s1789 = sld [smem:[#allocation4 + $0x312]]
        %v1790 = vstv %s1789
        %v1791 = vmul.f32 %v1751, %v1790
        %v1792 = vmul.f32 %v1752, %v1790
        %v1793 = vadd.f32 %v1688, %v1791
        %v1794 = vadd.f32 %v1689, %v1792
        %s1795 = sld [smem:[#allocation4 + $0x392]]
        %v1796 = vstv %s1795
        %v1797 = vmul.f32 %v1751, %v1796
        %v1798 = vmul.f32 %v1752, %v1796
        %v1799 = vadd.f32 %v1694, %v1797
        %v1800 = vadd.f32 %v1695, %v1798
        %s1801 = sld [smem:[#allocation4 + $0x412]]
        %v1802 = vstv %s1801
        %v1803 = vmul.f32 %v1751, %v1802
        %v1804 = vmul.f32 %v1752, %v1802
        %v1805 = vadd.f32 %v1700, %v1803
        %v1806 = vadd.f32 %v1701, %v1804
        %s1807 = sld [smem:[#allocation4 + $0x13]]
        %v1808 = vstv %s1807
        %v1809 = vmul.f32 %v1719, %v1808
        %v1810 = vmul.f32 %v1720, %v1808
        %v1811 = vadd.f32 %v1757, %v1809
        %v1812 = vadd.f32 %v1758, %v1810
        %s1813 = sld [smem:[#allocation4 + $0x93]]
        %v1814 = vstv %s1813
        %v1815 = vmul.f32 %v1719, %v1814
        %v1816 = vmul.f32 %v1720, %v1814
        %v1817 = vadd.f32 %v1763, %v1815
        %v1818 = vadd.f32 %v1764, %v1816
        %s1819 = sld [smem:[#allocation4 + $0x113]]
        %v1820 = vstv %s1819
        %v1821 = vmul.f32 %v1719, %v1820
        %v1822 = vmul.f32 %v1720, %v1820
        %v1823 = vadd.f32 %v1769, %v1821
        %v1824 = vadd.f32 %v1770, %v1822
        %s1825 = sld [smem:[#allocation4 + $0x193]]
        %v1826 = vstv %s1825
        %v1827 = vmul.f32 %v1719, %v1826
        %v1828 = vmul.f32 %v1720, %v1826
        %v1829 = vadd.f32 %v1775, %v1827
        %v1830 = vadd.f32 %v1776, %v1828
        %s1831 = sld [smem:[#allocation4 + $0x213]]
        %v1832 = vstv %s1831
        %v1833 = vmul.f32 %v1719, %v1832
        %v1834 = vmul.f32 %v1720, %v1832
        %v1835 = vadd.f32 %v1781, %v1833
        %v1836 = vadd.f32 %v1782, %v1834
        %s1837 = sld [smem:[#allocation4 + $0x293]]
        %v1838 = vstv %s1837
        %v1839 = vmul.f32 %v1719, %v1838
        %v1840 = vmul.f32 %v1720, %v1838
        %v1841 = vadd.f32 %v1787, %v1839
        %v1842 = vadd.f32 %v1788, %v1840
        %s1843 = sld [smem:[#allocation4 + $0x313]]
        %v1844 = vstv %s1843
        %v1845 = vmul.f32 %v1719, %v1844
        %v1846 = vmul.f32 %v1720, %v1844
        %v1847 = vadd.f32 %v1793, %v1845
        %v1848 = vadd.f32 %v1794, %v1846
        %s1849 = sld [smem:[#allocation4 + $0x393]]
        %v1850 = vstv %s1849
        %v1851 = vmul.f32 %v1719, %v1850
        %v1852 = vmul.f32 %v1720, %v1850
        %v1853 = vadd.f32 %v1799, %v1851
        %v1854 = vadd.f32 %v1800, %v1852
        %s1855 = sld [smem:[#allocation4 + $0x413]]
        %v1856 = vstv %s1855
        %v1857 = vmul.f32 %v1719, %v1856
        %v1858 = vmul.f32 %v1720, %v1856
        %v1859 = vadd.f32 %v1805, %v1857
        %v1860 = vadd.f32 %v1806, %v1858
        %1861 = vrot.lane.b32.xlu0 %v1741, 127
        %v1862 = vpop.permute.xlu0 %1861
        %1863 = vrot.lane.b32.xlu0 %v1742, 127
        %v1864 = vpop.permute.xlu0 %1863
        %v1867 = vsel %vm471, %v1862, 0.0
        %v1868 = vsel %vm471, %v1864, 0.0
        %s1869 = sld [smem:[#allocation4 + $0x14]]
        %v1870 = vstv %s1869
        %v1871 = vmul.f32 %v1867, %v1870
        %v1872 = vmul.f32 %v1868, %v1870
        %v1873 = vadd.f32 %v1811, %v1871
        %v1874 = vadd.f32 %v1812, %v1872
        %s1875 = sld [smem:[#allocation4 + $0x94]]
        %v1876 = vstv %s1875
        %v1877 = vmul.f32 %v1867, %v1876
        %v1878 = vmul.f32 %v1868, %v1876
        %v1879 = vadd.f32 %v1817, %v1877
        %v1880 = vadd.f32 %v1818, %v1878
        %s1881 = sld [smem:[#allocation4 + $0x114]]
        %v1882 = vstv %s1881
        %v1883 = vmul.f32 %v1867, %v1882
        %v1884 = vmul.f32 %v1868, %v1882
        %v1885 = vadd.f32 %v1823, %v1883
        %v1886 = vadd.f32 %v1824, %v1884
        %s1887 = sld [smem:[#allocation4 + $0x194]]
        %v1888 = vstv %s1887
        %v1889 = vmul.f32 %v1867, %v1888
        %v1890 = vmul.f32 %v1868, %v1888
        %v1891 = vadd.f32 %v1829, %v1889
        %v1892 = vadd.f32 %v1830, %v1890
        %s1893 = sld [smem:[#allocation4 + $0x214]]
        %v1894 = vstv %s1893
        %v1895 = vmul.f32 %v1867, %v1894
        %v1896 = vmul.f32 %v1868, %v1894
        %v1897 = vadd.f32 %v1835, %v1895
        %v1898 = vadd.f32 %v1836, %v1896
        %s1899 = sld [smem:[#allocation4 + $0x294]]
        %v1900 = vstv %s1899
        %v1901 = vmul.f32 %v1867, %v1900
        %v1902 = vmul.f32 %v1868, %v1900
        %v1903 = vadd.f32 %v1841, %v1901
        %v1904 = vadd.f32 %v1842, %v1902
        %s1905 = sld [smem:[#allocation4 + $0x314]]
        %v1906 = vstv %s1905
        %v1907 = vmul.f32 %v1867, %v1906
        %v1908 = vmul.f32 %v1868, %v1906
        %v1909 = vadd.f32 %v1847, %v1907
        %v1910 = vadd.f32 %v1848, %v1908
        %s1911 = sld [smem:[#allocation4 + $0x394]]
        %v1912 = vstv %s1911
        %v1913 = vmul.f32 %v1867, %v1912
        %v1914 = vmul.f32 %v1868, %v1912
        %v1915 = vadd.f32 %v1853, %v1913
        %v1916 = vadd.f32 %v1854, %v1914
        %s1917 = sld [smem:[#allocation4 + $0x414]]
        %v1918 = vstv %s1917
        %v1919 = vmul.f32 %v1867, %v1918
        %v1920 = vmul.f32 %v1868, %v1918
        %v1921 = vadd.f32 %v1859, %v1919
        %v1922 = vadd.f32 %v1860, %v1920
        %1923 = vrot.lane.b32.xlu0 %v1703, 16
        %v1924 = vpop.permute.xlu0 %1923
        %v1925 = vsel %vm520, %v1924, %v1703
        %1926 = vrot.lane.b32.xlu0 %v1704, 16
        %v1927 = vpop.permute.xlu0 %1926
        %v1928 = vsel %vm520, %v1927, %v1704
        %1929 = vrot.lane.b32.xlu0 %v1925, 16
        %v1930 = vpop.permute.xlu0 %1929
        %1931 = vrot.lane.b32.xlu0 %v1928, 16
        %v1932 = vpop.permute.xlu0 %1931
        %v1933 = vsel %vm520, %v1930, %v1703
        %v1934 = vsel %vm520, %v1932, %v1704
        %1937 = vrot.lane.b32.xlu0 %v1933, 113
        %v1938 = vpop.permute.xlu0 %1937
        %1939 = vrot.lane.b32.xlu0 %v1934, 113
        %v1940 = vpop.permute.xlu0 %1939
        %v1943 = vsel %vm470, %v1938, 0.0
        %v1944 = vsel %vm470, %v1940, 0.0
        %s1945 = sld [smem:[#allocation4 + $0x15]]
        %v1946 = vstv %s1945
        %v1947 = vmul.f32 %v1943, %v1946
        %v1948 = vmul.f32 %v1944, %v1946
        %v1949 = vadd.f32 %v1873, %v1947
        %v1950 = vadd.f32 %v1874, %v1948
        %s1951 = sld [smem:[#allocation4 + $0x95]]
        %v1952 = vstv %s1951
        %v1953 = vmul.f32 %v1943, %v1952
        %v1954 = vmul.f32 %v1944, %v1952
        %v1955 = vadd.f32 %v1879, %v1953
        %v1956 = vadd.f32 %v1880, %v1954
        %s1957 = sld [smem:[#allocation4 + $0x115]]
        %v1958 = vstv %s1957
        %v1959 = vmul.f32 %v1943, %v1958
        %v1960 = vmul.f32 %v1944, %v1958
        %v1961 = vadd.f32 %v1885, %v1959
        %v1962 = vadd.f32 %v1886, %v1960
        %s1963 = sld [smem:[#allocation4 + $0x195]]
        %v1964 = vstv %s1963
        %v1965 = vmul.f32 %v1943, %v1964
        %v1966 = vmul.f32 %v1944, %v1964
        %v1967 = vadd.f32 %v1891, %v1965
        %v1968 = vadd.f32 %v1892, %v1966
        %s1969 = sld [smem:[#allocation4 + $0x215]]
        %v1970 = vstv %s1969
        %v1971 = vmul.f32 %v1943, %v1970
        %v1972 = vmul.f32 %v1944, %v1970
        %v1973 = vadd.f32 %v1897, %v1971
        %v1974 = vadd.f32 %v1898, %v1972
        %s1975 = sld [smem:[#allocation4 + $0x295]]
        %v1976 = vstv %s1975
        %v1977 = vmul.f32 %v1943, %v1976
        %v1978 = vmul.f32 %v1944, %v1976
        %v1979 = vadd.f32 %v1903, %v1977
        %v1980 = vadd.f32 %v1904, %v1978
        %s1981 = sld [smem:[#allocation4 + $0x315]]
        %v1982 = vstv %s1981
        %v1983 = vmul.f32 %v1943, %v1982
        %v1984 = vmul.f32 %v1944, %v1982
        %v1985 = vadd.f32 %v1909, %v1983
        %v1986 = vadd.f32 %v1910, %v1984
        %s1987 = sld [smem:[#allocation4 + $0x395]]
        %v1988 = vstv %s1987
        %v1989 = vmul.f32 %v1943, %v1988
        %v1990 = vmul.f32 %v1944, %v1988
        %v1991 = vadd.f32 %v1915, %v1989
        %v1992 = vadd.f32 %v1916, %v1990
        %s1993 = sld [smem:[#allocation4 + $0x415]]
        %v1994 = vstv %s1993
        %v1995 = vmul.f32 %v1943, %v1994
        %v1996 = vmul.f32 %v1944, %v1994
        %v1997 = vadd.f32 %v1921, %v1995
        %v1998 = vadd.f32 %v1922, %v1996
        %s1999 = sld [smem:[#allocation4 + $0x16]]
        %v2000 = vstv %s1999
        %v2001 = vmul.f32 %v1703, %v2000
        %v2002 = vmul.f32 %v1704, %v2000
        %v2003 = vadd.f32 %v1949, %v2001
        %v2004 = vadd.f32 %v1950, %v2002
        %s2005 = sld [smem:[#allocation4 + $0x96]]
        %v2006 = vstv %s2005
        %v2007 = vmul.f32 %v1703, %v2006
        %v2008 = vmul.f32 %v1704, %v2006
        %v2009 = vadd.f32 %v1955, %v2007
        %v2010 = vadd.f32 %v1956, %v2008
        %s2011 = sld [smem:[#allocation4 + $0x116]]
        %v2012 = vstv %s2011
        %v2013 = vmul.f32 %v1703, %v2012
        %v2014 = vmul.f32 %v1704, %v2012
        %v2015 = vadd.f32 %v1961, %v2013
        %v2016 = vadd.f32 %v1962, %v2014
        %s2017 = sld [smem:[#allocation4 + $0x196]]
        %v2018 = vstv %s2017
        %v2019 = vmul.f32 %v1703, %v2018
        %v2020 = vmul.f32 %v1704, %v2018
        %v2021 = vadd.f32 %v1967, %v2019
        %v2022 = vadd.f32 %v1968, %v2020
        %s2023 = sld [smem:[#allocation4 + $0x216]]
        %v2024 = vstv %s2023
        %v2025 = vmul.f32 %v1703, %v2024
        %v2026 = vmul.f32 %v1704, %v2024
        %v2027 = vadd.f32 %v1973, %v2025
        %v2028 = vadd.f32 %v1974, %v2026
        %s2029 = sld [smem:[#allocation4 + $0x296]]
        %v2030 = vstv %s2029
        %v2031 = vmul.f32 %v1703, %v2030
        %v2032 = vmul.f32 %v1704, %v2030
        %v2033 = vadd.f32 %v1979, %v2031
        %v2034 = vadd.f32 %v1980, %v2032
        %s2035 = sld [smem:[#allocation4 + $0x316]]
        %v2036 = vstv %s2035
        %v2037 = vmul.f32 %v1703, %v2036
        %v2038 = vmul.f32 %v1704, %v2036
        %v2039 = vadd.f32 %v1985, %v2037
        %v2040 = vadd.f32 %v1986, %v2038
        %s2041 = sld [smem:[#allocation4 + $0x396]]
        %v2042 = vstv %s2041
        %v2043 = vmul.f32 %v1703, %v2042
        %v2044 = vmul.f32 %v1704, %v2042
        %v2045 = vadd.f32 %v1991, %v2043
        %v2046 = vadd.f32 %v1992, %v2044
        %s2047 = sld [smem:[#allocation4 + $0x416]]
        %v2048 = vstv %s2047
        %v2049 = vmul.f32 %v1703, %v2048
        %v2050 = vmul.f32 %v1704, %v2048
        %v2051 = vadd.f32 %v1997, %v2049
        %v2052 = vadd.f32 %v1998, %v2050
        %2053 = vrot.lane.b32.xlu0 %v1933, 127
        %v2054 = vpop.permute.xlu0 %2053
        %2055 = vrot.lane.b32.xlu0 %v1934, 127
        %v2056 = vpop.permute.xlu0 %2055
        %v2059 = vsel %vm471, %v2054, 0.0
        %v2060 = vsel %vm471, %v2056, 0.0
        %s2061 = sld [smem:[#allocation4 + $0x17]]
        %v2062 = vstv %s2061
        %v2063 = vmul.f32 %v2059, %v2062
        %v2064 = vmul.f32 %v2060, %v2062
        %v2065 = vadd.f32 %v2003, %v2063
        %v2066 = vadd.f32 %v2004, %v2064
        %s2067 = sld [smem:[#allocation4 + $0x97]]
        %v2068 = vstv %s2067
        %v2069 = vmul.f32 %v2059, %v2068
        %v2070 = vmul.f32 %v2060, %v2068
        %v2071 = vadd.f32 %v2009, %v2069
        %v2072 = vadd.f32 %v2010, %v2070
        %s2073 = sld [smem:[#allocation4 + $0x117]]
        %v2074 = vstv %s2073
        %v2075 = vmul.f32 %v2059, %v2074
        %v2076 = vmul.f32 %v2060, %v2074
        %v2077 = vadd.f32 %v2015, %v2075
        %v2078 = vadd.f32 %v2016, %v2076
        %s2079 = sld [smem:[#allocation4 + $0x197]]
        %v2080 = vstv %s2079
        %v2081 = vmul.f32 %v2059, %v2080
        %v2082 = vmul.f32 %v2060, %v2080
        %v2083 = vadd.f32 %v2021, %v2081
        %v2084 = vadd.f32 %v2022, %v2082
        %s2085 = sld [smem:[#allocation4 + $0x217]]
        %v2086 = vstv %s2085
        %v2087 = vmul.f32 %v2059, %v2086
        %v2088 = vmul.f32 %v2060, %v2086
        %v2089 = vadd.f32 %v2027, %v2087
        %v2090 = vadd.f32 %v2028, %v2088
        %s2091 = sld [smem:[#allocation4 + $0x297]]
        %v2092 = vstv %s2091
        %v2093 = vmul.f32 %v2059, %v2092
        %v2094 = vmul.f32 %v2060, %v2092
        %v2095 = vadd.f32 %v2033, %v2093
        %v2096 = vadd.f32 %v2034, %v2094
        %s2097 = sld [smem:[#allocation4 + $0x317]]
        %v2098 = vstv %s2097
        %v2099 = vmul.f32 %v2059, %v2098
        %v2100 = vmul.f32 %v2060, %v2098
        %v2101 = vadd.f32 %v2039, %v2099
        %v2102 = vadd.f32 %v2040, %v2100
        %s2103 = sld [smem:[#allocation4 + $0x397]]
        %v2104 = vstv %s2103
        %v2105 = vmul.f32 %v2059, %v2104
        %v2106 = vmul.f32 %v2060, %v2104
        %v2107 = vadd.f32 %v2045, %v2105
        %v2108 = vadd.f32 %v2046, %v2106
        %s2109 = sld [smem:[#allocation4 + $0x417]]
        %v2110 = vstv %s2109
        %v2111 = vmul.f32 %v2059, %v2110
        %v2112 = vmul.f32 %v2060, %v2110
        %v2113 = vadd.f32 %v2051, %v2111
        %v2114 = vadd.f32 %v2052, %v2112
        %2115 = vrot.lane.b32.xlu0 %v1729, 16
        %v2116 = vpop.permute.xlu0 %2115
        %v2117 = vsel %vm520, %v2116, %v1729
        %2118 = vrot.lane.b32.xlu0 %v1730, 16
        %v2119 = vpop.permute.xlu0 %2118
        %v2120 = vsel %vm520, %v2119, %v1730
        %2121 = vrot.lane.b32.xlu0 %v2117, 16
        %v2122 = vpop.permute.xlu0 %2121
        %2123 = vrot.lane.b32.xlu0 %v2120, 16
        %v2124 = vpop.permute.xlu0 %2123
        %v2125 = vsel %vm520, %v2122, %v1729
        %v2126 = vsel %vm520, %v2124, %v1730
        %2129 = vrot.lane.b32.xlu0 %v2125, 113
        %v2130 = vpop.permute.xlu0 %2129
        %2131 = vrot.lane.b32.xlu0 %v2126, 113
        %v2132 = vpop.permute.xlu0 %2131
        %v2135 = vsel %vm470, %v2130, 0.0
        %v2136 = vsel %vm470, %v2132, 0.0
        %s2137 = sld [smem:[#allocation4 + $0x18]]
        %v2138 = vstv %s2137
        %v2139 = vmul.f32 %v2135, %v2138
        %v2140 = vmul.f32 %v2136, %v2138
        %v2141 = vadd.f32 %v2065, %v2139
        %v2142 = vadd.f32 %v2066, %v2140
        %s2143 = sld [smem:[#allocation4 + $0x98]]
        %v2144 = vstv %s2143
        %v2145 = vmul.f32 %v2135, %v2144
        %v2146 = vmul.f32 %v2136, %v2144
        %v2147 = vadd.f32 %v2071, %v2145
        %v2148 = vadd.f32 %v2072, %v2146
        %s2149 = sld [smem:[#allocation4 + $0x118]]
        %v2150 = vstv %s2149
        %v2151 = vmul.f32 %v2135, %v2150
        %v2152 = vmul.f32 %v2136, %v2150
        %v2153 = vadd.f32 %v2077, %v2151
        %v2154 = vadd.f32 %v2078, %v2152
        %s2155 = sld [smem:[#allocation4 + $0x198]]
        %v2156 = vstv %s2155
        %v2157 = vmul.f32 %v2135, %v2156
        %v2158 = vmul.f32 %v2136, %v2156
        %v2159 = vadd.f32 %v2083, %v2157
        %v2160 = vadd.f32 %v2084, %v2158
        %s2161 = sld [smem:[#allocation4 + $0x218]]
        %v2162 = vstv %s2161
        %v2163 = vmul.f32 %v2135, %v2162
        %v2164 = vmul.f32 %v2136, %v2162
        %v2165 = vadd.f32 %v2089, %v2163
        %v2166 = vadd.f32 %v2090, %v2164
        %s2167 = sld [smem:[#allocation4 + $0x298]]
        %v2168 = vstv %s2167
        %v2169 = vmul.f32 %v2135, %v2168
        %v2170 = vmul.f32 %v2136, %v2168
        %v2171 = vadd.f32 %v2095, %v2169
        %v2172 = vadd.f32 %v2096, %v2170
        %s2173 = sld [smem:[#allocation4 + $0x318]]
        %v2174 = vstv %s2173
        %v2175 = vmul.f32 %v2135, %v2174
        %v2176 = vmul.f32 %v2136, %v2174
        %v2177 = vadd.f32 %v2101, %v2175
        %v2178 = vadd.f32 %v2102, %v2176
        %s2179 = sld [smem:[#allocation4 + $0x398]]
        %v2180 = vstv %s2179
        %v2181 = vmul.f32 %v2135, %v2180
        %v2182 = vmul.f32 %v2136, %v2180
        %v2183 = vadd.f32 %v2107, %v2181
        %v2184 = vadd.f32 %v2108, %v2182
        %s2185 = sld [smem:[#allocation4 + $0x418]]
        %v2186 = vstv %s2185
        %v2187 = vmul.f32 %v2135, %v2186
        %v2188 = vmul.f32 %v2136, %v2186
        %v2189 = vadd.f32 %v2113, %v2187
        %v2190 = vadd.f32 %v2114, %v2188
        %s2191 = sld [smem:[#allocation4 + $0x19]]
        %v2192 = vstv %s2191
        %v2193 = vmul.f32 %v1729, %v2192
        %v2194 = vmul.f32 %v1730, %v2192
        %v2195 = vadd.f32 %v2141, %v2193
        %v2196 = vadd.f32 %v2142, %v2194
        %s2197 = sld [smem:[#allocation4 + $0x99]]
        %v2198 = vstv %s2197
        %v2199 = vmul.f32 %v1729, %v2198
        %v2200 = vmul.f32 %v1730, %v2198
        %v2201 = vadd.f32 %v2147, %v2199
        %v2202 = vadd.f32 %v2148, %v2200
        %s2203 = sld [smem:[#allocation4 + $0x119]]
        %v2204 = vstv %s2203
        %v2205 = vmul.f32 %v1729, %v2204
        %v2206 = vmul.f32 %v1730, %v2204
        %v2207 = vadd.f32 %v2153, %v2205
        %v2208 = vadd.f32 %v2154, %v2206
        %s2209 = sld [smem:[#allocation4 + $0x199]]
        %v2210 = vstv %s2209
        %v2211 = vmul.f32 %v1729, %v2210
        %v2212 = vmul.f32 %v1730, %v2210
        %v2213 = vadd.f32 %v2159, %v2211
        %v2214 = vadd.f32 %v2160, %v2212
        %s2215 = sld [smem:[#allocation4 + $0x219]]
        %v2216 = vstv %s2215
        %v2217 = vmul.f32 %v1729, %v2216
        %v2218 = vmul.f32 %v1730, %v2216
        %v2219 = vadd.f32 %v2165, %v2217
        %v2220 = vadd.f32 %v2166, %v2218
        %s2221 = sld [smem:[#allocation4 + $0x299]]
        %v2222 = vstv %s2221
        %v2223 = vmul.f32 %v1729, %v2222
        %v2224 = vmul.f32 %v1730, %v2222
        %v2225 = vadd.f32 %v2171, %v2223
        %v2226 = vadd.f32 %v2172, %v2224
        %s2227 = sld [smem:[#allocation4 + $0x319]]
        %v2228 = vstv %s2227
        %v2229 = vmul.f32 %v1729, %v2228
        %v2230 = vmul.f32 %v1730, %v2228
        %v2231 = vadd.f32 %v2177, %v2229
        %v2232 = vadd.f32 %v2178, %v2230
        %s2233 = sld [smem:[#allocation4 + $0x399]]
        %v2234 = vstv %s2233
        %v2235 = vmul.f32 %v1729, %v2234
        %v2236 = vmul.f32 %v1730, %v2234
        %v2237 = vadd.f32 %v2183, %v2235
        %v2238 = vadd.f32 %v2184, %v2236
        %s2239 = sld [smem:[#allocation4 + $0x419]]
        %v2240 = vstv %s2239
        %v2241 = vmul.f32 %v1729, %v2240
        %v2242 = vmul.f32 %v1730, %v2240
        %v2243 = vadd.f32 %v2189, %v2241
        %v2244 = vadd.f32 %v2190, %v2242
        %2245 = vrot.lane.b32.xlu0 %v2125, 127
        %v2246 = vpop.permute.xlu0 %2245
        %2247 = vrot.lane.b32.xlu0 %v2126, 127
        %v2248 = vpop.permute.xlu0 %2247
        %v2251 = vsel %vm471, %v2246, 0.0
        %v2252 = vsel %vm471, %v2248, 0.0
        %s2253 = sld [smem:[#allocation4 + $0x1a]]
        %v2254 = vstv %s2253
        %v2255 = vmul.f32 %v2251, %v2254
        %v2256 = vmul.f32 %v2252, %v2254
        %v2257 = vadd.f32 %v2195, %v2255
        %v2258 = vadd.f32 %v2196, %v2256
        %s2259 = sld [smem:[#allocation4 + $0x9a]]
        %v2260 = vstv %s2259
        %v2261 = vmul.f32 %v2251, %v2260
        %v2262 = vmul.f32 %v2252, %v2260
        %v2263 = vadd.f32 %v2201, %v2261
        %v2264 = vadd.f32 %v2202, %v2262
        %s2265 = sld [smem:[#allocation4 + $0x11a]]
        %v2266 = vstv %s2265
        %v2267 = vmul.f32 %v2251, %v2266
        %v2268 = vmul.f32 %v2252, %v2266
        %v2269 = vadd.f32 %v2207, %v2267
        %v2270 = vadd.f32 %v2208, %v2268
        %s2271 = sld [smem:[#allocation4 + $0x19a]]
        %v2272 = vstv %s2271
        %v2273 = vmul.f32 %v2251, %v2272
        %v2274 = vmul.f32 %v2252, %v2272
        %v2275 = vadd.f32 %v2213, %v2273
        %v2276 = vadd.f32 %v2214, %v2274
        %s2277 = sld [smem:[#allocation4 + $0x21a]]
        %v2278 = vstv %s2277
        %v2279 = vmul.f32 %v2251, %v2278
        %v2280 = vmul.f32 %v2252, %v2278
        %v2281 = vadd.f32 %v2219, %v2279
        %v2282 = vadd.f32 %v2220, %v2280
        %s2283 = sld [smem:[#allocation4 + $0x29a]]
        %v2284 = vstv %s2283
        %v2285 = vmul.f32 %v2251, %v2284
        %v2286 = vmul.f32 %v2252, %v2284
        %v2287 = vadd.f32 %v2225, %v2285
        %v2288 = vadd.f32 %v2226, %v2286
        %s2289 = sld [smem:[#allocation4 + $0x31a]]
        %v2290 = vstv %s2289
        %v2291 = vmul.f32 %v2251, %v2290
        %v2292 = vmul.f32 %v2252, %v2290
        %v2293 = vadd.f32 %v2231, %v2291
        %v2294 = vadd.f32 %v2232, %v2292
        %s2295 = sld [smem:[#allocation4 + $0x39a]]
        %v2296 = vstv %s2295
        %v2297 = vmul.f32 %v2251, %v2296
        %v2298 = vmul.f32 %v2252, %v2296
        %v2299 = vadd.f32 %v2237, %v2297
        %v2300 = vadd.f32 %v2238, %v2298
        %s2301 = sld [smem:[#allocation4 + $0x41a]]
        %v2302 = vstv %s2301
        %v2303 = vmul.f32 %v2251, %v2302
        %v2304 = vmul.f32 %v2252, %v2302
        %v2305 = vadd.f32 %v2243, %v2303
        %v2306 = vadd.f32 %v2244, %v2304
        %s2307 = scalar_lea.vmem %s444, 48
        %v2308 = vld [vmem:[%s2307] sm:$0xff]
        %v2309 = vld [vmem:[%s2307 + $0x8] sm:$0xff]
        %s2310 = scalar_lea.vmem %s382, 24 [#allocation2]
        %v2311 = vld [vmem:[%s2310 + $0x7] sm:$0x1]
        %v2312 = vmul.f32 %v2311, %v493
        %s2313 = scalar_lea.vmem %s389, 24 [#allocation3]
        %v2314 = vld [vmem:[%s2313] sm:$0x1]
        %v2315 = vmul.f32 %v2314, %v496
        %v2316 = vrot.slane %v2308, 7
        %v2317 = vrot.slane %v2309, 7
        %v2318 = vsel %vm500, %v2316, %v2317
        %v2319 = vsel %vm500, %v2317, %v2316
        %v2320 = vlaneseq
        %v2321 = vshrl.u32 %v2320, 7
        %v2322 = vsub.s32 0, %v2321
        %v2323 = vrot.slane %v2312, %v2322
        %v2324 = vsel %vm466, %v2323, %v2319
        %v2325 = vsel %vm467, %v2323, %v2318
        %v2326 = vrot.slane %v2308, 1
        %v2327 = vrot.slane %v2309, 1
        %v2328 = vsel %vm511, %v2326, %v2327
        %v2329 = vsel %vm511, %v2327, %v2326
        %v2330 = vlaneseq
        %v2331 = vshrl.u32 %v2330, 7
        %v2332 = vsub.s32 0, %v2331
        %v2333 = vrot.slane %v2315, %v2332
        %v2334 = vsel %vm468, %v2333, %v2328
        %v2335 = vsel %vm469, %v2333, %v2329
        %2336 = vrot.lane.b32.xlu0 %v2324, 16
        %v2337 = vpop.permute.xlu0 %2336
        %v2338 = vsel %vm520, %v2337, %v2324
        %2339 = vrot.lane.b32.xlu0 %v2325, 16
        %v2340 = vpop.permute.xlu0 %2339
        %v2341 = vsel %vm520, %v2340, %v2325
        %2342 = vrot.lane.b32.xlu0 %v2338, 16
        %v2343 = vpop.permute.xlu0 %2342
        %2344 = vrot.lane.b32.xlu0 %v2341, 16
        %v2345 = vpop.permute.xlu0 %2344
        %v2346 = vsel %vm520, %v2343, %v2324
        %v2347 = vsel %vm520, %v2345, %v2325
        %2350 = vrot.lane.b32.xlu0 %v2346, 113
        %v2351 = vpop.permute.xlu0 %2350
        %2352 = vrot.lane.b32.xlu0 %v2347, 113
        %v2353 = vpop.permute.xlu0 %2352
        %v2356 = vsel %vm470, %v2351, 0.0
        %v2357 = vsel %vm470, %v2353, 0.0
        %s2358 = sld [smem:[#allocation4 + $0x1b]]
        %v2359 = vstv %s2358
        %v2360 = vmul.f32 %v2356, %v2359
        %v2361 = vmul.f32 %v2357, %v2359
        %v2362 = vadd.f32 %v2257, %v2360
        %v2363 = vadd.f32 %v2258, %v2361
        %s2364 = sld [smem:[#allocation4 + $0x9b]]
        %v2365 = vstv %s2364
        %v2366 = vmul.f32 %v2356, %v2365
        %v2367 = vmul.f32 %v2357, %v2365
        %v2368 = vadd.f32 %v2263, %v2366
        %v2369 = vadd.f32 %v2264, %v2367
        %s2370 = sld [smem:[#allocation4 + $0x11b]]
        %v2371 = vstv %s2370
        %v2372 = vmul.f32 %v2356, %v2371
        %v2373 = vmul.f32 %v2357, %v2371
        %v2374 = vadd.f32 %v2269, %v2372
        %v2375 = vadd.f32 %v2270, %v2373
        %s2376 = sld [smem:[#allocation4 + $0x19b]]
        %v2377 = vstv %s2376
        %v2378 = vmul.f32 %v2356, %v2377
        %v2379 = vmul.f32 %v2357, %v2377
        %v2380 = vadd.f32 %v2275, %v2378
        %v2381 = vadd.f32 %v2276, %v2379
        %s2382 = sld [smem:[#allocation4 + $0x21b]]
        %v2383 = vstv %s2382
        %v2384 = vmul.f32 %v2356, %v2383
        %v2385 = vmul.f32 %v2357, %v2383
        %v2386 = vadd.f32 %v2281, %v2384
        %v2387 = vadd.f32 %v2282, %v2385
        %s2388 = sld [smem:[#allocation4 + $0x29b]]
        %v2389 = vstv %s2388
        %v2390 = vmul.f32 %v2356, %v2389
        %v2391 = vmul.f32 %v2357, %v2389
        %v2392 = vadd.f32 %v2287, %v2390
        %v2393 = vadd.f32 %v2288, %v2391
        %s2394 = sld [smem:[#allocation4 + $0x31b]]
        %v2395 = vstv %s2394
        %v2396 = vmul.f32 %v2356, %v2395
        %v2397 = vmul.f32 %v2357, %v2395
        %v2398 = vadd.f32 %v2293, %v2396
        %v2399 = vadd.f32 %v2294, %v2397
        %s2400 = sld [smem:[#allocation4 + $0x39b]]
        %v2401 = vstv %s2400
        %v2402 = vmul.f32 %v2356, %v2401
        %v2403 = vmul.f32 %v2357, %v2401
        %v2404 = vadd.f32 %v2299, %v2402
        %v2405 = vadd.f32 %v2300, %v2403
        %s2406 = sld [smem:[#allocation4 + $0x41b]]
        %v2407 = vstv %s2406
        %v2408 = vmul.f32 %v2356, %v2407
        %v2409 = vmul.f32 %v2357, %v2407
        %v2410 = vadd.f32 %v2305, %v2408
        %v2411 = vadd.f32 %v2306, %v2409
        %s2412 = sld [smem:[#allocation4 + $0x1c]]
        %v2413 = vstv %s2412
        %v2414 = vmul.f32 %v2324, %v2413
        %v2415 = vmul.f32 %v2325, %v2413
        %v2416 = vadd.f32 %v2362, %v2414
        %v2417 = vadd.f32 %v2363, %v2415
        %s2418 = sld [smem:[#allocation4 + $0x9c]]
        %v2419 = vstv %s2418
        %v2420 = vmul.f32 %v2324, %v2419
        %v2421 = vmul.f32 %v2325, %v2419
        %v2422 = vadd.f32 %v2368, %v2420
        %v2423 = vadd.f32 %v2369, %v2421
        %s2424 = sld [smem:[#allocation4 + $0x11c]]
        %v2425 = vstv %s2424
        %v2426 = vmul.f32 %v2324, %v2425
        %v2427 = vmul.f32 %v2325, %v2425
        %v2428 = vadd.f32 %v2374, %v2426
        %v2429 = vadd.f32 %v2375, %v2427
        %s2430 = sld [smem:[#allocation4 + $0x19c]]
        %v2431 = vstv %s2430
        %v2432 = vmul.f32 %v2324, %v2431
        %v2433 = vmul.f32 %v2325, %v2431
        %v2434 = vadd.f32 %v2380, %v2432
        %v2435 = vadd.f32 %v2381, %v2433
        %s2436 = sld [smem:[#allocation4 + $0x21c]]
        %v2437 = vstv %s2436
        %v2438 = vmul.f32 %v2324, %v2437
        %v2439 = vmul.f32 %v2325, %v2437
        %v2440 = vadd.f32 %v2386, %v2438
        %v2441 = vadd.f32 %v2387, %v2439
        %s2442 = sld [smem:[#allocation4 + $0x29c]]
        %v2443 = vstv %s2442
        %v2444 = vmul.f32 %v2324, %v2443
        %v2445 = vmul.f32 %v2325, %v2443
        %v2446 = vadd.f32 %v2392, %v2444
        %v2447 = vadd.f32 %v2393, %v2445
        %s2448 = sld [smem:[#allocation4 + $0x31c]]
        %v2449 = vstv %s2448
        %v2450 = vmul.f32 %v2324, %v2449
        %v2451 = vmul.f32 %v2325, %v2449
        %v2452 = vadd.f32 %v2398, %v2450
        %v2453 = vadd.f32 %v2399, %v2451
        %s2454 = sld [smem:[#allocation4 + $0x39c]]
        %v2455 = vstv %s2454
        %v2456 = vmul.f32 %v2324, %v2455
        %v2457 = vmul.f32 %v2325, %v2455
        %v2458 = vadd.f32 %v2404, %v2456
        %v2459 = vadd.f32 %v2405, %v2457
        %s2460 = sld [smem:[#allocation4 + $0x41c]]
        %v2461 = vstv %s2460
        %v2462 = vmul.f32 %v2324, %v2461
        %v2463 = vmul.f32 %v2325, %v2461
        %v2464 = vadd.f32 %v2410, %v2462
        %v2465 = vadd.f32 %v2411, %v2463
        %2466 = vrot.lane.b32.xlu0 %v2346, 127
        %v2467 = vpop.permute.xlu0 %2466
        %2468 = vrot.lane.b32.xlu0 %v2347, 127
        %v2469 = vpop.permute.xlu0 %2468
        %v2472 = vsel %vm471, %v2467, 0.0
        %v2473 = vsel %vm471, %v2469, 0.0
        %s2474 = sld [smem:[#allocation4 + $0x1d]]
        %v2475 = vstv %s2474
        %v2476 = vmul.f32 %v2472, %v2475
        %v2477 = vmul.f32 %v2473, %v2475
        %v2478 = vadd.f32 %v2416, %v2476
        %v2479 = vadd.f32 %v2417, %v2477
        %s2480 = sld [smem:[#allocation4 + $0x9d]]
        %v2481 = vstv %s2480
        %v2482 = vmul.f32 %v2472, %v2481
        %v2483 = vmul.f32 %v2473, %v2481
        %v2484 = vadd.f32 %v2422, %v2482
        %v2485 = vadd.f32 %v2423, %v2483
        %s2486 = sld [smem:[#allocation4 + $0x11d]]
        %v2487 = vstv %s2486
        %v2488 = vmul.f32 %v2472, %v2487
        %v2489 = vmul.f32 %v2473, %v2487
        %v2490 = vadd.f32 %v2428, %v2488
        %v2491 = vadd.f32 %v2429, %v2489
        %s2492 = sld [smem:[#allocation4 + $0x19d]]
        %v2493 = vstv %s2492
        %v2494 = vmul.f32 %v2472, %v2493
        %v2495 = vmul.f32 %v2473, %v2493
        %v2496 = vadd.f32 %v2434, %v2494
        %v2497 = vadd.f32 %v2435, %v2495
        %s2498 = sld [smem:[#allocation4 + $0x21d]]
        %v2499 = vstv %s2498
        %v2500 = vmul.f32 %v2472, %v2499
        %v2501 = vmul.f32 %v2473, %v2499
        %v2502 = vadd.f32 %v2440, %v2500
        %v2503 = vadd.f32 %v2441, %v2501
        %s2504 = sld [smem:[#allocation4 + $0x29d]]
        %v2505 = vstv %s2504
        %v2506 = vmul.f32 %v2472, %v2505
        %v2507 = vmul.f32 %v2473, %v2505
        %v2508 = vadd.f32 %v2446, %v2506
        %v2509 = vadd.f32 %v2447, %v2507
        %s2510 = sld [smem:[#allocation4 + $0x31d]]
        %v2511 = vstv %s2510
        %v2512 = vmul.f32 %v2472, %v2511
        %v2513 = vmul.f32 %v2473, %v2511
        %v2514 = vadd.f32 %v2452, %v2512
        %v2515 = vadd.f32 %v2453, %v2513
        %s2516 = sld [smem:[#allocation4 + $0x39d]]
        %v2517 = vstv %s2516
        %v2518 = vmul.f32 %v2472, %v2517
        %v2519 = vmul.f32 %v2473, %v2517
        %v2520 = vadd.f32 %v2458, %v2518
        %v2521 = vadd.f32 %v2459, %v2519
        %s2522 = sld [smem:[#allocation4 + $0x41d]]
        %v2523 = vstv %s2522
        %v2524 = vmul.f32 %v2472, %v2523
        %v2525 = vmul.f32 %v2473, %v2523
        %v2526 = vadd.f32 %v2464, %v2524
        %v2527 = vadd.f32 %v2465, %v2525
        %2528 = vrot.lane.b32.xlu0 %v2308, 16
        %v2529 = vpop.permute.xlu0 %2528
        %v2530 = vsel %vm520, %v2529, %v2308
        %2531 = vrot.lane.b32.xlu0 %v2309, 16
        %v2532 = vpop.permute.xlu0 %2531
        %v2533 = vsel %vm520, %v2532, %v2309
        %2534 = vrot.lane.b32.xlu0 %v2530, 16
        %v2535 = vpop.permute.xlu0 %2534
        %2536 = vrot.lane.b32.xlu0 %v2533, 16
        %v2537 = vpop.permute.xlu0 %2536
        %v2538 = vsel %vm520, %v2535, %v2308
        %v2539 = vsel %vm520, %v2537, %v2309
        %2542 = vrot.lane.b32.xlu0 %v2538, 113
        %v2543 = vpop.permute.xlu0 %2542
        %2544 = vrot.lane.b32.xlu0 %v2539, 113
        %v2545 = vpop.permute.xlu0 %2544
        %v2548 = vsel %vm470, %v2543, 0.0
        %v2549 = vsel %vm470, %v2545, 0.0
        %s2550 = sld [smem:[#allocation4 + $0x1e]]
        %v2551 = vstv %s2550
        %v2552 = vmul.f32 %v2548, %v2551
        %v2553 = vmul.f32 %v2549, %v2551
        %v2554 = vadd.f32 %v2478, %v2552
        %v2555 = vadd.f32 %v2479, %v2553
        %s2556 = sld [smem:[#allocation4 + $0x9e]]
        %v2557 = vstv %s2556
        %v2558 = vmul.f32 %v2548, %v2557
        %v2559 = vmul.f32 %v2549, %v2557
        %v2560 = vadd.f32 %v2484, %v2558
        %v2561 = vadd.f32 %v2485, %v2559
        %s2562 = sld [smem:[#allocation4 + $0x11e]]
        %v2563 = vstv %s2562
        %v2564 = vmul.f32 %v2548, %v2563
        %v2565 = vmul.f32 %v2549, %v2563
        %v2566 = vadd.f32 %v2490, %v2564
        %v2567 = vadd.f32 %v2491, %v2565
        %s2568 = sld [smem:[#allocation4 + $0x19e]]
        %v2569 = vstv %s2568
        %v2570 = vmul.f32 %v2548, %v2569
        %v2571 = vmul.f32 %v2549, %v2569
        %v2572 = vadd.f32 %v2496, %v2570
        %v2573 = vadd.f32 %v2497, %v2571
        %s2574 = sld [smem:[#allocation4 + $0x21e]]
        %v2575 = vstv %s2574
        %v2576 = vmul.f32 %v2548, %v2575
        %v2577 = vmul.f32 %v2549, %v2575
        %v2578 = vadd.f32 %v2502, %v2576
        %v2579 = vadd.f32 %v2503, %v2577
        %s2580 = sld [smem:[#allocation4 + $0x29e]]
        %v2581 = vstv %s2580
        %v2582 = vmul.f32 %v2548, %v2581
        %v2583 = vmul.f32 %v2549, %v2581
        %v2584 = vadd.f32 %v2508, %v2582
        %v2585 = vadd.f32 %v2509, %v2583
        %s2586 = sld [smem:[#allocation4 + $0x31e]]
        %v2587 = vstv %s2586
        %v2588 = vmul.f32 %v2548, %v2587
        %v2589 = vmul.f32 %v2549, %v2587
        %v2590 = vadd.f32 %v2514, %v2588
        %v2591 = vadd.f32 %v2515, %v2589
        %s2592 = sld [smem:[#allocation4 + $0x39e]]
        %v2593 = vstv %s2592
        %v2594 = vmul.f32 %v2548, %v2593
        %v2595 = vmul.f32 %v2549, %v2593
        %v2596 = vadd.f32 %v2520, %v2594
        %v2597 = vadd.f32 %v2521, %v2595
        %s2598 = sld [smem:[#allocation4 + $0x41e]]
        %v2599 = vstv %s2598
        %v2600 = vmul.f32 %v2548, %v2599
        %v2601 = vmul.f32 %v2549, %v2599
        %v2602 = vadd.f32 %v2526, %v2600
        %v2603 = vadd.f32 %v2527, %v2601
        %s2604 = sld [smem:[#allocation4 + $0x1f]]
        %v2605 = vstv %s2604
        %v2606 = vmul.f32 %v2308, %v2605
        %v2607 = vmul.f32 %v2309, %v2605
        %v2608 = vadd.f32 %v2554, %v2606
        %v2609 = vadd.f32 %v2555, %v2607
        %s2610 = sld [smem:[#allocation4 + $0x9f]]
        %v2611 = vstv %s2610
        %v2612 = vmul.f32 %v2308, %v2611
        %v2613 = vmul.f32 %v2309, %v2611
        %v2614 = vadd.f32 %v2560, %v2612
        %v2615 = vadd.f32 %v2561, %v2613
        %s2616 = sld [smem:[#allocation4 + $0x11f]]
        %v2617 = vstv %s2616
        %v2618 = vmul.f32 %v2308, %v2617
        %v2619 = vmul.f32 %v2309, %v2617
        %v2620 = vadd.f32 %v2566, %v2618
        %v2621 = vadd.f32 %v2567, %v2619
        %s2622 = sld [smem:[#allocation4 + $0x19f]]
        %v2623 = vstv %s2622
        %v2624 = vmul.f32 %v2308, %v2623
        %v2625 = vmul.f32 %v2309, %v2623
        %v2626 = vadd.f32 %v2572, %v2624
        %v2627 = vadd.f32 %v2573, %v2625
        %s2628 = sld [smem:[#allocation4 + $0x21f]]
        %v2629 = vstv %s2628
        %v2630 = vmul.f32 %v2308, %v2629
        %v2631 = vmul.f32 %v2309, %v2629
        %v2632 = vadd.f32 %v2578, %v2630
        %v2633 = vadd.f32 %v2579, %v2631
        %s2634 = sld [smem:[#allocation4 + $0x29f]]
        %v2635 = vstv %s2634
        %v2636 = vmul.f32 %v2308, %v2635
        %v2637 = vmul.f32 %v2309, %v2635
        %v2638 = vadd.f32 %v2584, %v2636
        %v2639 = vadd.f32 %v2585, %v2637
        %s2640 = sld [smem:[#allocation4 + $0x31f]]
        %v2641 = vstv %s2640
        %v2642 = vmul.f32 %v2308, %v2641
        %v2643 = vmul.f32 %v2309, %v2641
        %v2644 = vadd.f32 %v2590, %v2642
        %v2645 = vadd.f32 %v2591, %v2643
        %s2646 = sld [smem:[#allocation4 + $0x39f]]
        %v2647 = vstv %s2646
        %v2648 = vmul.f32 %v2308, %v2647
        %v2649 = vmul.f32 %v2309, %v2647
        %v2650 = vadd.f32 %v2596, %v2648
        %v2651 = vadd.f32 %v2597, %v2649
        %s2652 = sld [smem:[#allocation4 + $0x41f]]
        %v2653 = vstv %s2652
        %v2654 = vmul.f32 %v2308, %v2653
        %v2655 = vmul.f32 %v2309, %v2653
        %v2656 = vadd.f32 %v2602, %v2654
        %v2657 = vadd.f32 %v2603, %v2655
        %2658 = vrot.lane.b32.xlu0 %v2538, 127
        %v2659 = vpop.permute.xlu0 %2658
        %2660 = vrot.lane.b32.xlu0 %v2539, 127
        %v2661 = vpop.permute.xlu0 %2660
        %v2664 = vsel %vm471, %v2659, 0.0
        %v2665 = vsel %vm471, %v2661, 0.0
        %s2666 = sld [smem:[#allocation4 + $0x20]]
        %v2667 = vstv %s2666
        %v2668 = vmul.f32 %v2664, %v2667
        %v2669 = vmul.f32 %v2665, %v2667
        %v2670 = vadd.f32 %v2608, %v2668
        %v2671 = vadd.f32 %v2609, %v2669
        %s2672 = sld [smem:[#allocation4 + $0xa0]]
        %v2673 = vstv %s2672
        %v2674 = vmul.f32 %v2664, %v2673
        %v2675 = vmul.f32 %v2665, %v2673
        %v2676 = vadd.f32 %v2614, %v2674
        %v2677 = vadd.f32 %v2615, %v2675
        %s2678 = sld [smem:[#allocation4 + $0x120]]
        %v2679 = vstv %s2678
        %v2680 = vmul.f32 %v2664, %v2679
        %v2681 = vmul.f32 %v2665, %v2679
        %v2682 = vadd.f32 %v2620, %v2680
        %v2683 = vadd.f32 %v2621, %v2681
        %s2684 = sld [smem:[#allocation4 + $0x1a0]]
        %v2685 = vstv %s2684
        %v2686 = vmul.f32 %v2664, %v2685
        %v2687 = vmul.f32 %v2665, %v2685
        %v2688 = vadd.f32 %v2626, %v2686
        %v2689 = vadd.f32 %v2627, %v2687
        %s2690 = sld [smem:[#allocation4 + $0x220]]
        %v2691 = vstv %s2690
        %v2692 = vmul.f32 %v2664, %v2691
        %v2693 = vmul.f32 %v2665, %v2691
        %v2694 = vadd.f32 %v2632, %v2692
        %v2695 = vadd.f32 %v2633, %v2693
        %s2696 = sld [smem:[#allocation4 + $0x2a0]]
        %v2697 = vstv %s2696
        %v2698 = vmul.f32 %v2664, %v2697
        %v2699 = vmul.f32 %v2665, %v2697
        %v2700 = vadd.f32 %v2638, %v2698
        %v2701 = vadd.f32 %v2639, %v2699
        %s2702 = sld [smem:[#allocation4 + $0x320]]
        %v2703 = vstv %s2702
        %v2704 = vmul.f32 %v2664, %v2703
        %v2705 = vmul.f32 %v2665, %v2703
        %v2706 = vadd.f32 %v2644, %v2704
        %v2707 = vadd.f32 %v2645, %v2705
        %s2708 = sld [smem:[#allocation4 + $0x3a0]]
        %v2709 = vstv %s2708
        %v2710 = vmul.f32 %v2664, %v2709
        %v2711 = vmul.f32 %v2665, %v2709
        %v2712 = vadd.f32 %v2650, %v2710
        %v2713 = vadd.f32 %v2651, %v2711
        %s2714 = sld [smem:[#allocation4 + $0x420]]
        %v2715 = vstv %s2714
        %v2716 = vmul.f32 %v2664, %v2715
        %v2717 = vmul.f32 %v2665, %v2715
        %v2718 = vadd.f32 %v2656, %v2716
        %v2719 = vadd.f32 %v2657, %v2717
        %2720 = vrot.lane.b32.xlu0 %v2334, 16
        %v2721 = vpop.permute.xlu0 %2720
        %v2722 = vsel %vm520, %v2721, %v2334
        %2723 = vrot.lane.b32.xlu0 %v2335, 16
        %v2724 = vpop.permute.xlu0 %2723
        %v2725 = vsel %vm520, %v2724, %v2335
        %2726 = vrot.lane.b32.xlu0 %v2722, 16
        %v2727 = vpop.permute.xlu0 %2726
        %2728 = vrot.lane.b32.xlu0 %v2725, 16
        %v2729 = vpop.permute.xlu0 %2728
        %v2730 = vsel %vm520, %v2727, %v2334
        %v2731 = vsel %vm520, %v2729, %v2335
        %2734 = vrot.lane.b32.xlu0 %v2730, 113
        %v2735 = vpop.permute.xlu0 %2734
        %2736 = vrot.lane.b32.xlu0 %v2731, 113
        %v2737 = vpop.permute.xlu0 %2736
        %v2740 = vsel %vm470, %v2735, 0.0
        %v2741 = vsel %vm470, %v2737, 0.0
        %s2742 = sld [smem:[#allocation4 + $0x21]]
        %v2743 = vstv %s2742
        %v2744 = vmul.f32 %v2740, %v2743
        %v2745 = vmul.f32 %v2741, %v2743
        %v2746 = vadd.f32 %v2670, %v2744
        %v2747 = vadd.f32 %v2671, %v2745
        %s2748 = sld [smem:[#allocation4 + $0xa1]]
        %v2749 = vstv %s2748
        %v2750 = vmul.f32 %v2740, %v2749
        %v2751 = vmul.f32 %v2741, %v2749
        %v2752 = vadd.f32 %v2676, %v2750
        %v2753 = vadd.f32 %v2677, %v2751
        %s2754 = sld [smem:[#allocation4 + $0x121]]
        %v2755 = vstv %s2754
        %v2756 = vmul.f32 %v2740, %v2755
        %v2757 = vmul.f32 %v2741, %v2755
        %v2758 = vadd.f32 %v2682, %v2756
        %v2759 = vadd.f32 %v2683, %v2757
        %s2760 = sld [smem:[#allocation4 + $0x1a1]]
        %v2761 = vstv %s2760
        %v2762 = vmul.f32 %v2740, %v2761
        %v2763 = vmul.f32 %v2741, %v2761
        %v2764 = vadd.f32 %v2688, %v2762
        %v2765 = vadd.f32 %v2689, %v2763
        %s2766 = sld [smem:[#allocation4 + $0x221]]
        %v2767 = vstv %s2766
        %v2768 = vmul.f32 %v2740, %v2767
        %v2769 = vmul.f32 %v2741, %v2767
        %v2770 = vadd.f32 %v2694, %v2768
        %v2771 = vadd.f32 %v2695, %v2769
        %s2772 = sld [smem:[#allocation4 + $0x2a1]]
        %v2773 = vstv %s2772
        %v2774 = vmul.f32 %v2740, %v2773
        %v2775 = vmul.f32 %v2741, %v2773
        %v2776 = vadd.f32 %v2700, %v2774
        %v2777 = vadd.f32 %v2701, %v2775
        %s2778 = sld [smem:[#allocation4 + $0x321]]
        %v2779 = vstv %s2778
        %v2780 = vmul.f32 %v2740, %v2779
        %v2781 = vmul.f32 %v2741, %v2779
        %v2782 = vadd.f32 %v2706, %v2780
        %v2783 = vadd.f32 %v2707, %v2781
        %s2784 = sld [smem:[#allocation4 + $0x3a1]]
        %v2785 = vstv %s2784
        %v2786 = vmul.f32 %v2740, %v2785
        %v2787 = vmul.f32 %v2741, %v2785
        %v2788 = vadd.f32 %v2712, %v2786
        %v2789 = vadd.f32 %v2713, %v2787
        %s2790 = sld [smem:[#allocation4 + $0x421]]
        %v2791 = vstv %s2790
        %v2792 = vmul.f32 %v2740, %v2791
        %v2793 = vmul.f32 %v2741, %v2791
        %v2794 = vadd.f32 %v2718, %v2792
        %v2795 = vadd.f32 %v2719, %v2793
        %s2796 = sld [smem:[#allocation4 + $0x22]]
        %v2797 = vstv %s2796
        %v2798 = vmul.f32 %v2334, %v2797
        %v2799 = vmul.f32 %v2335, %v2797
        %v2800 = vadd.f32 %v2746, %v2798
        %v2801 = vadd.f32 %v2747, %v2799
        %s2802 = sld [smem:[#allocation4 + $0xa2]]
        %v2803 = vstv %s2802
        %v2804 = vmul.f32 %v2334, %v2803
        %v2805 = vmul.f32 %v2335, %v2803
        %v2806 = vadd.f32 %v2752, %v2804
        %v2807 = vadd.f32 %v2753, %v2805
        %s2808 = sld [smem:[#allocation4 + $0x122]]
        %v2809 = vstv %s2808
        %v2810 = vmul.f32 %v2334, %v2809
        %v2811 = vmul.f32 %v2335, %v2809
        %v2812 = vadd.f32 %v2758, %v2810
        %v2813 = vadd.f32 %v2759, %v2811
        %s2814 = sld [smem:[#allocation4 + $0x1a2]]
        %v2815 = vstv %s2814
        %v2816 = vmul.f32 %v2334, %v2815
        %v2817 = vmul.f32 %v2335, %v2815
        %v2818 = vadd.f32 %v2764, %v2816
        %v2819 = vadd.f32 %v2765, %v2817
        %s2820 = sld [smem:[#allocation4 + $0x222]]
        %v2821 = vstv %s2820
        %v2822 = vmul.f32 %v2334, %v2821
        %v2823 = vmul.f32 %v2335, %v2821
        %v2824 = vadd.f32 %v2770, %v2822
        %v2825 = vadd.f32 %v2771, %v2823
        %s2826 = sld [smem:[#allocation4 + $0x2a2]]
        %v2827 = vstv %s2826
        %v2828 = vmul.f32 %v2334, %v2827
        %v2829 = vmul.f32 %v2335, %v2827
        %v2830 = vadd.f32 %v2776, %v2828
        %v2831 = vadd.f32 %v2777, %v2829
        %s2832 = sld [smem:[#allocation4 + $0x322]]
        %v2833 = vstv %s2832
        %v2834 = vmul.f32 %v2334, %v2833
        %v2835 = vmul.f32 %v2335, %v2833
        %v2836 = vadd.f32 %v2782, %v2834
        %v2837 = vadd.f32 %v2783, %v2835
        %s2838 = sld [smem:[#allocation4 + $0x3a2]]
        %v2839 = vstv %s2838
        %v2840 = vmul.f32 %v2334, %v2839
        %v2841 = vmul.f32 %v2335, %v2839
        %v2842 = vadd.f32 %v2788, %v2840
        %v2843 = vadd.f32 %v2789, %v2841
        %s2844 = sld [smem:[#allocation4 + $0x422]]
        %v2845 = vstv %s2844
        %v2846 = vmul.f32 %v2334, %v2845
        %v2847 = vmul.f32 %v2335, %v2845
        %v2848 = vadd.f32 %v2794, %v2846
        %v2849 = vadd.f32 %v2795, %v2847
        %2850 = vrot.lane.b32.xlu0 %v2730, 127
        %v2851 = vpop.permute.xlu0 %2850
        %2852 = vrot.lane.b32.xlu0 %v2731, 127
        %v2853 = vpop.permute.xlu0 %2852
        %v2856 = vsel %vm471, %v2851, 0.0
        %v2857 = vsel %vm471, %v2853, 0.0
        %s2858 = sld [smem:[#allocation4 + $0x23]]
        %v2859 = vstv %s2858
        %v2860 = vmul.f32 %v2856, %v2859
        %v2861 = vmul.f32 %v2857, %v2859
        %v2862 = vadd.f32 %v2800, %v2860
        %v2863 = vadd.f32 %v2801, %v2861
        %s2864 = sld [smem:[#allocation4 + $0xa3]]
        %v2865 = vstv %s2864
        %v2866 = vmul.f32 %v2856, %v2865
        %v2867 = vmul.f32 %v2857, %v2865
        %v2868 = vadd.f32 %v2806, %v2866
        %v2869 = vadd.f32 %v2807, %v2867
        %s2870 = sld [smem:[#allocation4 + $0x123]]
        %v2871 = vstv %s2870
        %v2872 = vmul.f32 %v2856, %v2871
        %v2873 = vmul.f32 %v2857, %v2871
        %v2874 = vadd.f32 %v2812, %v2872
        %v2875 = vadd.f32 %v2813, %v2873
        %s2876 = sld [smem:[#allocation4 + $0x1a3]]
        %v2877 = vstv %s2876
        %v2878 = vmul.f32 %v2856, %v2877
        %v2879 = vmul.f32 %v2857, %v2877
        %v2880 = vadd.f32 %v2818, %v2878
        %v2881 = vadd.f32 %v2819, %v2879
        %s2882 = sld [smem:[#allocation4 + $0x223]]
        %v2883 = vstv %s2882
        %v2884 = vmul.f32 %v2856, %v2883
        %v2885 = vmul.f32 %v2857, %v2883
        %v2886 = vadd.f32 %v2824, %v2884
        %v2887 = vadd.f32 %v2825, %v2885
        %s2888 = sld [smem:[#allocation4 + $0x2a3]]
        %v2889 = vstv %s2888
        %v2890 = vmul.f32 %v2856, %v2889
        %v2891 = vmul.f32 %v2857, %v2889
        %v2892 = vadd.f32 %v2830, %v2890
        %v2893 = vadd.f32 %v2831, %v2891
        %s2894 = sld [smem:[#allocation4 + $0x323]]
        %v2895 = vstv %s2894
        %v2896 = vmul.f32 %v2856, %v2895
        %v2897 = vmul.f32 %v2857, %v2895
        %v2898 = vadd.f32 %v2836, %v2896
        %v2899 = vadd.f32 %v2837, %v2897
        %s2900 = sld [smem:[#allocation4 + $0x3a3]]
        %v2901 = vstv %s2900
        %v2902 = vmul.f32 %v2856, %v2901
        %v2903 = vmul.f32 %v2857, %v2901
        %v2904 = vadd.f32 %v2842, %v2902
        %v2905 = vadd.f32 %v2843, %v2903
        %s2906 = sld [smem:[#allocation4 + $0x423]]
        %v2907 = vstv %s2906
        %v2908 = vmul.f32 %v2856, %v2907
        %v2909 = vmul.f32 %v2857, %v2907
        %v2910 = vadd.f32 %v2848, %v2908
        %v2911 = vadd.f32 %v2849, %v2909
        %v2912 = vxor.u32 %v2910, 2147483648
        %v2913 = vxor.u32 %v2911, 2147483648
        %v2914 = vmul.f32 %v2912, 1.442695
        %v2915 = vpow.pop %v2914
        %v2916 = vmul.f32 %v2913, 1.442695
        %v2917 = vpow.pop %v2916
        %v2918 = vadd.f32 %v2915, 1.0
        %v2919 = vadd.f32 %v2917, 1.0
        %v2920 = vrcp.pop %v2918
        %v2921 = vmul.f32 1.0, %v2920
        %v2922 = vrcp.pop %v2919
        %v2923 = vmul.f32 1.0, %v2922
        %v2924 = vmul.f32 %v2862, %v2921
        %v2925 = vmul.f32 %v2863, %v2923
        %vm2926 = vcmask 130048
        %2927 = vst.msk [vmem:[%s435] sm:$0xff] %vm2926, %v2924
        %2928 = vst.msk [vmem:[%s435 + $0x8] sm:$0xff] %vm2926, %v2925
        %v2929 = vmul.f32 %v2868, %v2921
        %v2930 = vmul.f32 %v2869, %v2923
        %s2931 = scalar_lea.vmem %s435, 16 [#allocation9]
        %2932 = vst.msk [vmem:[%s2931] sm:$0xff] %vm2926, %v2929
        %2933 = vst.msk [vmem:[%s2931 + $0x8] sm:$0xff] %vm2926, %v2930
        %v2934 = vmul.f32 %v2874, %v2921
        %v2935 = vmul.f32 %v2875, %v2923
        %s2936 = scalar_lea.vmem %s435, 32 [#allocation9]
        %2937 = vst.msk [vmem:[%s2936] sm:$0xff] %vm2926, %v2934
        %2938 = vst.msk [vmem:[%s2936 + $0x8] sm:$0xff] %vm2926, %v2935
        %v2939 = vmul.f32 %v2880, %v2921
        %v2940 = vmul.f32 %v2881, %v2923
        %s2941 = scalar_lea.vmem %s435, 48 [#allocation9]
        %2942 = vst.msk [vmem:[%s2941] sm:$0xff] %vm2926, %v2939
        %2943 = vst.msk [vmem:[%s2941 + $0x8] sm:$0xff] %vm2926, %v2940
        %v2944 = vmul.f32 %v2886, %v2921
        %v2945 = vmul.f32 %v2887, %v2923
        %s2946 = scalar_lea.vmem %s435, 64 [#allocation9]
        %2947 = vst.msk [vmem:[%s2946] sm:$0xff] %vm2926, %v2944
        %2948 = vst.msk [vmem:[%s2946 + $0x8] sm:$0xff] %vm2926, %v2945
        %v2949 = vmul.f32 %v2892, %v2921
        %v2950 = vmul.f32 %v2893, %v2923
        %s2951 = scalar_lea.vmem %s435, 80 [#allocation9]
        %2952 = vst.msk [vmem:[%s2951] sm:$0xff] %vm2926, %v2949
        %2953 = vst.msk [vmem:[%s2951 + $0x8] sm:$0xff] %vm2926, %v2950
        %v2954 = vmul.f32 %v2898, %v2921
        %v2955 = vmul.f32 %v2899, %v2923
        %s2956 = scalar_lea.vmem %s435, 96 [#allocation9]
        %2957 = vst.msk [vmem:[%s2956] sm:$0xff] %vm2926, %v2954
        %2958 = vst.msk [vmem:[%s2956 + $0x8] sm:$0xff] %vm2926, %v2955
        %v2959 = vmul.f32 %v2904, %v2921
        %v2960 = vmul.f32 %v2905, %v2923
        %s2961 = scalar_lea.vmem %s435, 112 [#allocation9]
        %2962 = vst.msk [vmem:[%s2961] sm:$0xff] %vm2926, %v2959
        %2963 = vst.msk [vmem:[%s2961 + $0x8] sm:$0xff] %vm2926, %v2960
        %s2964 = sand.u32 %s185, 1
        %s2965 = scalar_lea.sflag [#allocation5], %s2964
        %s2966 = sand.u32 %s185, 1
        %s2967 = smul.addr %s2966, 128
        %s2968 = scalar_lea.vmem [#allocation9], %s2967
        // Predicated region
        $region125: #{gated_conv.1} parent=107 // pred_check
          %p2969 = pneg %p195
        $region126: #{gated_conv.1} parent=107 // pred_check_branch
          %2971 = sbr.rel (%p2969) target = $region128
        $region127: #{gated_conv.1} parent=107 // pred_region
          %s2972 = smul.u32 2, %s26
          %s2974 = ssub.s32 2048, 2048
          %2975 = vsyncadd %s2965, %s2974
          %s2976 = smul.addr %s25, 16
          %s2977 = sadd.s32 %s2972, %s2976
          %s2978 = smul.addr %s2977, 128
          %s2979 = scalar_lea.hbm %s5, %s2978
          %s2980 = sshll.u32 %s2968, 4
          %s2981 = int_to_ptr.vmem [resolvable:$true] %s2980
          %2986 = dma.vmem_to_hbm [thread:$0]  %s2981, 2048, %s2979, %s2965, 128, 128, 8
        $region128: #{gated_conv.1} parent=107 // pred_fallthru
          _
      $region108: #{gated_conv.1} parent=5 // pred_fallthru
        _
      %p2987 = scmp.le.s32.totalorder 2, %s16
      // Predicated region
      $region129: #{gated_conv.1} parent=5 // pred_check
        %p2988 = pneg %p2987
      $region130: #{gated_conv.1} parent=5 // pred_check_branch
        %2990 = sbr.rel (%p2988) target = $region132
      $region131: #{gated_conv.1} parent=5 // pred_region
        %s2991 = ssub.s32 %s16, 2
        // Predicated region
        $region133: #{gated_conv.1} parent=131 // pred_check
          %p2992 = pneg %p201
        $region134: #{gated_conv.1} parent=131 // pred_check_branch
          %2994 = sbr.rel (%p2992) target = $region136
        $region135: #{gated_conv.1} parent=131 // pred_region
          %s2995 = sand.u32 %s186, 1
          %s2996 = scalar_lea.sflag [#allocation5], %s2995
          %s2997 = sand.u32 %s186, 1
          %s2998 = smul.addr %s2997, 128
          %s2999 = scalar_lea.vmem [#allocation9], %s2998
          %3000 = dma.done %s2996, 2048
        $region136: #{gated_conv.1} parent=131 // pred_fallthru
          _
      $region132: #{gated_conv.1} parent=5 // pred_fallthru
        _
    $region6: #{gated_conv.1} parent=1 // loop_footer
      %s20 = sadd.s32 1, %s16
    $region7: #{gated_conv.1} parent=1 // loop_footer_branch
      %15 = sbr.rel target = $region3
    $region8: #{gated_conv.1} parent=1 // loop_exit
      _
    %3001 = vsyncpa [#allocation5], 1
    %s3002 = scalar_lea.sflag [#allocation5], 1
    %3003 = vsyncpa %s3002, 1
    %3004 = vsyncpa [#allocation6], 1
    %s3005 = scalar_lea.sflag [#allocation6], 1
    %3006 = vsyncpa %s3005, 1
    %3007 = vsyncpa [#allocation8], 1

</llo_original>
